<compile_context>
chip_gen: v6e
topology: v6e:2x2x1
jax: 0.10.0
libtpu: 0.0.40
codegen_flags: <defaults>
</compile_context>

<pallas_src>
import functools
import math

import jax
import jax.numpy as jnp
import numpy as np
from jax import lax
from jax.experimental import pallas as pl
from jax.experimental.pallas import tpu as pltpu

EPS = 1e-5


def _sl(start, size, step):
    """Static (possibly strided) slice for Ref indexing."""
    return pl.ds(start, size) if step == 1 else pl.ds(start, size, step)


# ----------------------------- Pallas kernels -----------------------------

def _conv_block_kernel(*refs, H, W, Ho, Wo, stride, Cin, Cout, relu,
                       has_residual, has_proj):
    """Fused 3x3 conv + BN affine (+residual add) (+ReLU) for one image, with
    an optional fused 1x1-projection shortcut (+BN) as a second output."""
    it = iter(refs)
    x_ref = next(it)                                    # (1, H, W, Cin)  bf16
    w_ref = next(it)                                    # (9*Cin, Cout)   bf16
    scale_ref = next(it)                                # (1, Cout)       f32
    shift_ref = next(it)                                # (1, Cout)       f32
    res_ref = next(it) if has_residual else None        # (1, Ho*Wo, Cout) bf16
    if has_proj:
        scw_ref = next(it)                              # (Cin, Cout)     bf16
        scs_ref = next(it)                              # (1, Cout)       f32
        sch_ref = next(it)                              # (1, Cout)       f32
    o_ref = next(it)                                    # (1, Ho*Wo, Cout) bf16
    sc_out_ref = next(it) if has_proj else None         # (1, Ho*Wo, Cout) bf16
    xpad = next(it)                                     # VMEM (H+2, W+2, Cin)
    patch = next(it)                                    # VMEM (Ho, Wo, 9*Cin)

    # Zero-padded halo built directly in VMEM (no wrapper-side jnp.pad pass).
    xpad[...] = jnp.zeros(xpad.shape, xpad.dtype)
    xpad[1:H + 1, 1:W + 1, :] = x_ref[0]

    # im2col: gather the 9 (strided) taps into one (Ho, Wo, 9*Cin) block so the
    # whole conv is a single K=9*Cin MXU matmul.
    for dh in range(3):
        for dw in range(3):
            k = dh * 3 + dw
            tap = xpad[_sl(dh, Ho, stride), _sl(dw, Wo, stride), :]
            patch[:, :, k * Cin:(k + 1) * Cin] = tap

    pm = patch[...].reshape(Ho * Wo, 9 * Cin)
    acc = jnp.dot(pm, w_ref[...], preferred_element_type=jnp.float32)
    out = acc * scale_ref[...] + shift_ref[...]

    if has_residual:
        out = out + res_ref[0].astype(jnp.float32)
    if relu:
        out = jnp.maximum(out, 0.0)
    o_ref[0] = out.astype(o_ref.dtype)

    if has_proj:
        # 1x1 projection shortcut (+BN): reuse the strided centre taps of the
        # padded input already sitting in VMEM.
        centres = xpad[_sl(1, Ho, stride), _sl(1, Wo, stride), :]
        sc = jnp.dot(centres.reshape(Ho * Wo, Cin), scw_ref[...],
                     preferred_element_type=jnp.float32)
        sc = sc * scs_ref[...] + sch_ref[...]
        sc_out_ref[0] = sc.astype(sc_out_ref.dtype)


def _head_kernel(x_ref, w_ref, b_ref, o_ref, *, inv_hw):
    """Global average pool over the flattened spatial axis + final linear."""
    x = x_ref[...].astype(jnp.float32)                          # (N, HW, C)
    pooled = jnp.sum(x, axis=1) * inv_hw                        # (N, C)
    logits = jnp.dot(pooled, w_ref[...],
                     preferred_element_type=jnp.float32) + b_ref[...]
    o_ref[...] = logits.astype(o_ref.dtype)


# ----------------------------- wrappers -----------------------------------

def conv3x3_bn(x, w, scale, shift, *, stride=1, relu=True,
               residual=None, proj=None):
    """x: (N, H, W, Cin) NHWC.  w: (3, 3, Cin, Cout) HWIO.
    scale/shift: (1, Cout) f32 folded BN.  residual: (N, Ho*Wo, Cout) or None.
    proj: (sc_w (Cin, Cout), sc_scale, sc_shift) or None -> also returns a
    second (N, Ho*Wo, Cout) output holding the 1x1-conv+BN shortcut.
    Returns flattened (N, Ho*Wo, Cout) bf16 activations."""
    N, H, W, Cin = x.shape
    Cout = w.shape[-1]
    Ho = (H - 1) // stride + 1
    Wo = (W - 1) // stride + 1
    has_res = residual is not None
    has_proj = proj is not None
    assert not (has_res and has_proj)

    xb = x.astype(jnp.bfloat16)
    wflat = w.reshape(9 * Cin, Cout).astype(jnp.bfloat16)

    in_specs = [
        pl.BlockSpec((1, H, W, Cin), lambda n: (n, 0, 0, 0)),
        pl.BlockSpec((9 * Cin, Cout), lambda n: (0, 0)),
        pl.BlockSpec((1, Cout), lambda n: (0, 0)),
        pl.BlockSpec((1, Cout), lambda n: (0, 0)),
    ]
    args = [xb, wflat, scale, shift]
    if has_res:
        in_specs.append(pl.BlockSpec((1, Ho * Wo, Cout), lambda n: (n, 0, 0)))
        args.append(residual.astype(jnp.bfloat16))
    if has_proj:
        sc_w, sc_scale, sc_shift = proj
        in_specs += [
            pl.BlockSpec((Cin, Cout), lambda n: (0, 0)),
            pl.BlockSpec((1, Cout), lambda n: (0, 0)),
            pl.BlockSpec((1, Cout), lambda n: (0, 0)),
        ]
        args += [sc_w.astype(jnp.bfloat16), sc_scale, sc_shift]

    out_shape = [jax.ShapeDtypeStruct((N, Ho * Wo, Cout), jnp.bfloat16)]
    out_specs = [pl.BlockSpec((1, Ho * Wo, Cout), lambda n: (n, 0, 0))]
    if has_proj:
        out_shape.append(jax.ShapeDtypeStruct((N, Ho * Wo, Cout), jnp.bfloat16))
        out_specs.append(pl.BlockSpec((1, Ho * Wo, Cout), lambda n: (n, 0, 0)))

    kernel = functools.partial(
        _conv_block_kernel, H=H, W=W, Ho=Ho, Wo=Wo, stride=stride,
        Cin=Cin, Cout=Cout, relu=relu,
        has_residual=has_res, has_proj=has_proj)

    outs = pl.pallas_call(
        kernel,
        out_shape=tuple(out_shape),
        grid=(N,),
        in_specs=in_specs,
        out_specs=tuple(out_specs),
        scratch_shapes=[
            pltpu.VMEM((H + 2, W + 2, Cin), jnp.bfloat16),   # padded halo
            pltpu.VMEM((Ho, Wo, 9 * Cin), jnp.bfloat16),     # im2col block
        ],
        compiler_params=pltpu.CompilerParams(
            dimension_semantics=("parallel",)),
    )(*args)
    if has_proj:
        return outs[0], outs[1]
    return outs[0]


def avgpool_linear(x_flat, w, b):
    """Global average pool + final linear, fused.  The whole head is a few KB
    at CIFAR scale, so a single grid step (no pipelining) is fine here."""
    N, HW, C = x_flat.shape
    K = w.shape[-1]
    return pl.pallas_call(
        functools.partial(_head_kernel, inv_hw=1.0 / HW),
        out_shape=jax.ShapeDtypeStruct((N, K), jnp.float32),
        grid=(1,),
        in_specs=[
            pl.BlockSpec((N, HW, C), lambda i: (0, 0, 0)),
            pl.BlockSpec((C, K), lambda i: (0, 0)),
            pl.BlockSpec((1, K), lambda i: (0, 0)),
        ],
        out_specs=pl.BlockSpec((N, K), lambda i: (0, 0)),
    )(x_flat, w, b)


# ----------------------------- parameters ---------------------------------

def bn_fold(gamma, beta, mean, var, conv_bias=None):
    """Fold eval-mode BatchNorm (and an optional preceding conv bias) into a
    per-channel scale/shift pair of shape (1, C)."""
    scale = gamma / jnp.sqrt(var + EPS)
    shift = beta - mean * scale
    if conv_bias is not None:
        shift = shift + conv_bias * scale
    return scale[None, :], shift[None, :]


def init_params(key, width=16, num_blocks=(1, 1, 1), num_classes=10):
    keys = iter(jax.random.split(key, 128))

    def kaiming(shape, fan_in):
        # init.kaiming_normal_: std = sqrt(2 / fan_in)
        return jax.random.normal(next(keys), shape, jnp.float32) * math.sqrt(2.0 / fan_in)

    def bn(c):
        return dict(gamma=jnp.ones((c,), jnp.float32),
                    beta=jnp.zeros((c,), jnp.float32),
                    mean=jnp.zeros((c,), jnp.float32),
                    var=jnp.ones((c,), jnp.float32))

    params = {}
    # stem conv: nn.Conv2d(3, width, 3, padding=1) -> default bias=True
    params['conv1_w'] = kaiming((3, 3, 3, width), 3 * 9)
    bound = 1.0 / math.sqrt(3 * 9)
    params['conv1_b'] = jax.random.uniform(next(keys), (width,), jnp.float32,
                                           -bound, bound)
    params['bn1'] = bn(width)

    in_planes = width
    layers = []
    for planes_mult, nb, stride0 in zip((1, 2, 4), num_blocks, (1, 2, 2)):
        planes = width * planes_mult
        blocks = []
        strides = [stride0] + [1] * (nb - 1)
        for s in strides:
            blk = dict(
                stride=s,
                conv1_w=kaiming((3, 3, in_planes, planes), in_planes * 9),
                bn1=bn(planes),
                conv2_w=kaiming((3, 3, planes, planes), planes * 9),
                bn2=bn(planes),
            )
            if s != 1 or in_planes != planes:
                blk['sc_w'] = kaiming((in_planes, planes), in_planes)  # 1x1 conv
                blk['sc_bn'] = bn(planes)
            blocks.append(blk)
            in_planes = planes
        layers.append(blocks)
    params['layers'] = layers

    params['fc_w'] = kaiming((width * 4, num_classes), width * 4)
    bound = 1.0 / math.sqrt(width * 4)
    params['fc_b'] = jax.random.uniform(next(keys), (1, num_classes),
                                        jnp.float32, -bound, bound)
    return params


# ----------------------------- forward pass --------------------------------

def resnet_forward(params, x_nchw):
    # PyTorch NCHW input -> NHWC for the kernels.
    x = jnp.transpose(x_nchw, (0, 2, 3, 1)).astype(jnp.float32)
    N, H, W, _ = x.shape

    scale, shift = bn_fold(**params['bn1'], conv_bias=params['conv1_b'])
    out_flat = conv3x3_bn(x, params['conv1_w'], scale, shift,
                          stride=1, relu=True)
    Hc, Wc = H, W
    out4 = out_flat.reshape(N, Hc, Wc, -1)

    for blocks in params['layers']:
        for blk in blocks:
            st = blk['stride']
            sc1, sh1 = bn_fold(**blk['bn1'])
            if 'sc_w' in blk:
                scs, shs = bn_fold(**blk['sc_bn'])
                h_flat, shortcut = conv3x3_bn(
                    out4, blk['conv1_w'], sc1, sh1, stride=st, relu=True,
                    proj=(blk['sc_w'], scs, shs))
            else:
                h_flat = conv3x3_bn(out4, blk['conv1_w'], sc1, sh1,
                                    stride=st, relu=True)
                shortcut = out_flat                       # identity (already flat)
            Hc = (Hc - 1) // st + 1
            Wc = (Wc - 1) // st + 1
            h4 = h_flat.reshape(N, Hc, Wc, -1)
            sc2, sh2 = bn_fold(**blk['bn2'])
            out_flat = conv3x3_bn(h4, blk['conv2_w'], sc2, sh2, stride=1,
                                  relu=True, residual=shortcut)
            out4 = out_flat.reshape(N, Hc, Wc, -1)

    return avgpool_linear(out_flat, params['fc_w'], params['fc_b'])


# ----------------------------- pure-JAX reference --------------------------

def _conv_ref(x, w, stride, padding):
    # bf16 operands + f32 accumulation, mirroring the Pallas kernels.
    return lax.conv_general_dilated(
        x.astype(jnp.bfloat16), w.astype(jnp.bfloat16),
        window_strides=(stride, stride),
        padding=((padding, padding), (padding, padding)),
        dimension_numbers=('NHWC', 'HWIO', 'NHWC'),
        preferred_element_type=jnp.float32)


def _as_stored(t):
    # Activations are stored in bf16 between kernels; mirror that rounding.
    return t.astype(jnp.bfloat16).astype(jnp.float32)


def resnet_ref(params, x_nchw):
    x = jnp.transpose(x_nchw, (0, 2, 3, 1)).astype(jnp.float32)

    def bnf(bnp, bias=None):
        s, sh = bn_fold(**bnp, conv_bias=bias)
        return s[0], sh[0]

    s0, h0 = bnf(params['bn1'], params['conv1_b'])
    out = _as_stored(jax.nn.relu(
        _conv_ref(x, params['conv1_w'], 1, 1) * s0 + h0))

    for blocks in params['layers']:
        for blk in blocks:
            st = blk['stride']
            s1, b1 = bnf(blk['bn1'])
            h = _as_stored(jax.nn.relu(
                _conv_ref(out, blk['conv1_w'], st, 1) * s1 + b1))
            if 'sc_w' in blk:
                ss, bs = bnf(blk['sc_bn'])
                # 1x1 shortcut conv uses padding=0 (this was the bug before).
                sc = _as_stored(
                    _conv_ref(out, blk['sc_w'][None, None], st, 0) * ss + bs)
            else:
                sc = out
            s2, b2 = bnf(blk['bn2'])
            out = _as_stored(jax.nn.relu(
                _conv_ref(h, blk['conv2_w'], 1, 1) * s2 + b2 + sc))

    pooled = out.mean(axis=(1, 2))
    return jnp.dot(pooled, params['fc_w'],
                   precision=lax.Precision.HIGHEST) + params['fc_b']


# ----------------------------- main ----------------------------------------

if __name__ == "__main__":
    key = jax.random.PRNGKey(0)
    pkey, xkey = jax.random.split(key)

    width, num_blocks, num_classes = 16, (1, 1, 1), 10
    params = init_params(pkey, width=width, num_blocks=num_blocks,
                         num_classes=num_classes)

    # Small CIFAR-like input, NCHW as the PyTorch module expects.
    x = jax.random.normal(xkey, (2, 3, 16, 16), dtype=jnp.float32)

    logits = jax.block_until_ready(resnet_forward(params, x))
    assert logits.shape == (2, num_classes)

    ref = jax.block_until_ready(resnet_ref(params, x))
    np.testing.assert_allclose(np.asarray(logits, dtype=np.float32),
                               np.asarray(ref, dtype=np.float32),
                               rtol=1e-2, atol=1e-2)

    print("KERNEL_OK")
</pallas_src>

<mosaic_0001>
module attributes {stable_mosaic.version = 11 : i64} {
  func.func @_conv_block_kernel(%arg0: i32, %arg1: memref<1x16x16x3xbf16, #tpu.memory_space<vmem>>, %arg2: memref<27x16xbf16, #tpu.memory_space<vmem>>, %arg3: memref<1x16xf32, #tpu.memory_space<vmem>>, %arg4: memref<1x16xf32, #tpu.memory_space<vmem>>, %arg5: memref<1x256x16xbf16, #tpu.memory_space<vmem>>, %arg6: memref<18x18x3xbf16, #tpu.memory_space<vmem>>, %arg7: memref<16x16x27xbf16, #tpu.memory_space<vmem>>) attributes {dimension_semantics = [#tpu.dimension_semantics<parallel>], iteration_bounds = array<i64: 2>, scalar_prefetch = 0 : i64, scratch_operands = 2 : i64, tpu.core_type = #tpu.core_type<tc>, window_params = [{transform_indices = @transform_0, window_bounds = array<i64: 1, 16, 16, 3>}, {pipeline_mode = #tpu.pipeline_mode<synchronous>, transform_indices = @transform_1, window_bounds = array<i64: 27, 16>}, {pipeline_mode = #tpu.pipeline_mode<synchronous>, transform_indices = @transform_2, window_bounds = array<i64: 1, 16>}, {pipeline_mode = #tpu.pipeline_mode<synchronous>, transform_indices = @transform_3, window_bounds = array<i64: 1, 16>}, {transform_indices = @transform_4, window_bounds = array<i64: 1, 256, 16>}]} {
    %cst = arith.constant 0.000000e+00 : bf16
    %0 = vector.broadcast %cst : bf16 to vector<18x18x3xbf16>
    %c0 = arith.constant 0 : index
    %c0_0 = arith.constant 0 : index
    %c0_1 = arith.constant 0 : index
    %1 = vector.load %arg6[%c0, %c0_0, %c0_1] : memref<18x18x3xbf16, #tpu.memory_space<vmem>>, vector<18x18x3xbf16>
    tpu.vector_store %arg6[%c0, %c0_0, %c0_1], %0 {strides = array<i32>} : memref<18x18x3xbf16, #tpu.memory_space<vmem>>, vector<18x18x3xbf16>,
    %c0_2 = arith.constant 0 : index
    %c0_3 = arith.constant 0 : index
    %c0_4 = arith.constant 0 : index
    %c0_5 = arith.constant 0 : index
    %2 = vector.load %arg1[%c0_2, %c0_3, %c0_4, %c0_5] : memref<1x16x16x3xbf16, #tpu.memory_space<vmem>>, vector<1x16x16x3xbf16>
    %3 = vector.shape_cast %2 : vector<1x16x16x3xbf16> to vector<16x16x3xbf16>
    %c1 = arith.constant 1 : index
    %c1_6 = arith.constant 1 : index
    %c0_7 = arith.constant 0 : index
    %4 = vector.load %arg6[%c1, %c1_6, %c0_7] : memref<18x18x3xbf16, #tpu.memory_space<vmem>>, vector<16x16x3xbf16>
    tpu.vector_store %arg6[%c1, %c1_6, %c0_7], %3 {strides = array<i32>} : memref<18x18x3xbf16, #tpu.memory_space<vmem>>, vector<16x16x3xbf16>,
    %c0_8 = arith.constant 0 : index
    %c0_9 = arith.constant 0 : index
    %c0_10 = arith.constant 0 : index
    %5 = vector.load %arg6[%c0_8, %c0_9, %c0_10] : memref<18x18x3xbf16, #tpu.memory_space<vmem>>, vector<16x16x3xbf16>
    %c0_11 = arith.constant 0 : index
    %c0_12 = arith.constant 0 : index
    %c0_13 = arith.constant 0 : index
    %6 = vector.load %arg7[%c0_11, %c0_12, %c0_13] : memref<16x16x27xbf16, #tpu.memory_space<vmem>>, vector<16x16x3xbf16>
    tpu.vector_store %arg7[%c0_11, %c0_12, %c0_13], %5 {strides = array<i32>} : memref<16x16x27xbf16, #tpu.memory_space<vmem>>, vector<16x16x3xbf16>,
    %c0_14 = arith.constant 0 : index
    %c1_15 = arith.constant 1 : index
    %c0_16 = arith.constant 0 : index
    %7 = vector.load %arg6[%c0_14, %c1_15, %c0_16] : memref<18x18x3xbf16, #tpu.memory_space<vmem>>, vector<16x16x3xbf16>
    %c0_17 = arith.constant 0 : index
    %c0_18 = arith.constant 0 : index
    %c3 = arith.constant 3 : index
    %8 = vector.load %arg7[%c0_17, %c0_18, %c3] : memref<16x16x27xbf16, #tpu.memory_space<vmem>>, vector<16x16x3xbf16>
    tpu.vector_store %arg7[%c0_17, %c0_18, %c3], %7 {strides = array<i32>} : memref<16x16x27xbf16, #tpu.memory_space<vmem>>, vector<16x16x3xbf16>,
    %c0_19 = arith.constant 0 : index
    %c2 = arith.constant 2 : index
    %c0_20 = arith.constant 0 : index
    %9 = vector.load %arg6[%c0_19, %c2, %c0_20] : memref<18x18x3xbf16, #tpu.memory_space<vmem>>, vector<16x16x3xbf16>
    %c0_21 = arith.constant 0 : index
    %c0_22 = arith.constant 0 : index
    %c6 = arith.constant 6 : index
    %10 = vector.load %arg7[%c0_21, %c0_22, %c6] : memref<16x16x27xbf16, #tpu.memory_space<vmem>>, vector<16x16x3xbf16>
    tpu.vector_store %arg7[%c0_21, %c0_22, %c6], %9 {strides = array<i32>} : memref<16x16x27xbf16, #tpu.memory_space<vmem>>, vector<16x16x3xbf16>,
    %c1_23 = arith.constant 1 : index
    %c0_24 = arith.constant 0 : index
    %c0_25 = arith.constant 0 : index
    %11 = vector.load %arg6[%c1_23, %c0_24, %c0_25] : memref<18x18x3xbf16, #tpu.memory_space<vmem>>, vector<16x16x3xbf16>
    %c0_26 = arith.constant 0 : index
    %c0_27 = arith.constant 0 : index
    %c9 = arith.constant 9 : index
    %12 = vector.load %arg7[%c0_26, %c0_27, %c9] : memref<16x16x27xbf16, #tpu.memory_space<vmem>>, vector<16x16x3xbf16>
    tpu.vector_store %arg7[%c0_26, %c0_27, %c9], %11 {strides = array<i32>} : memref<16x16x27xbf16, #tpu.memory_space<vmem>>, vector<16x16x3xbf16>,
    %c1_28 = arith.constant 1 : index
    %c1_29 = arith.constant 1 : index
    %c0_30 = arith.constant 0 : index
    %13 = vector.load %arg6[%c1_28, %c1_29, %c0_30] : memref<18x18x3xbf16, #tpu.memory_space<vmem>>, vector<16x16x3xbf16>
    %c0_31 = arith.constant 0 : index
    %c0_32 = arith.constant 0 : index
    %c12 = arith.constant 12 : index
    %14 = vector.load %arg7[%c0_31, %c0_32, %c12] : memref<16x16x27xbf16, #tpu.memory_space<vmem>>, vector<16x16x3xbf16>
    tpu.vector_store %arg7[%c0_31, %c0_32, %c12], %13 {strides = array<i32>} : memref<16x16x27xbf16, #tpu.memory_space<vmem>>, vector<16x16x3xbf16>,
    %c1_33 = arith.constant 1 : index
    %c2_34 = arith.constant 2 : index
    %c0_35 = arith.constant 0 : index
    %15 = vector.load %arg6[%c1_33, %c2_34, %c0_35] : memref<18x18x3xbf16, #tpu.memory_space<vmem>>, vector<16x16x3xbf16>
    %c0_36 = arith.constant 0 : index
    %c0_37 = arith.constant 0 : index
    %c15 = arith.constant 15 : index
    %16 = vector.load %arg7[%c0_36, %c0_37, %c15] : memref<16x16x27xbf16, #tpu.memory_space<vmem>>, vector<16x16x3xbf16>
    tpu.vector_store %arg7[%c0_36, %c0_37, %c15], %15 {strides = array<i32>} : memref<16x16x27xbf16, #tpu.memory_space<vmem>>, vector<16x16x3xbf16>,
    %c2_38 = arith.constant 2 : index
    %c0_39 = arith.constant 0 : index
    %c0_40 = arith.constant 0 : index
    %17 = vector.load %arg6[%c2_38, %c0_39, %c0_40] : memref<18x18x3xbf16, #tpu.memory_space<vmem>>, vector<16x16x3xbf16>
    %c0_41 = arith.constant 0 : index
    %c0_42 = arith.constant 0 : index
    %c18 = arith.constant 18 : index
    %18 = vector.load %arg7[%c0_41, %c0_42, %c18] : memref<16x16x27xbf16, #tpu.memory_space<vmem>>, vector<16x16x3xbf16>
    tpu.vector_store %arg7[%c0_41, %c0_42, %c18], %17 {strides = array<i32>} : memref<16x16x27xbf16, #tpu.memory_space<vmem>>, vector<16x16x3xbf16>,
    %c2_43 = arith.constant 2 : index
    %c1_44 = arith.constant 1 : index
    %c0_45 = arith.constant 0 : index
    %19 = vector.load %arg6[%c2_43, %c1_44, %c0_45] : memref<18x18x3xbf16, #tpu.memory_space<vmem>>, vector<16x16x3xbf16>
    %c0_46 = arith.constant 0 : index
    %c0_47 = arith.constant 0 : index
    %c21 = arith.constant 21 : index
    %20 = vector.load %arg7[%c0_46, %c0_47, %c21] : memref<16x16x27xbf16, #tpu.memory_space<vmem>>, vector<16x16x3xbf16>
    tpu.vector_store %arg7[%c0_46, %c0_47, %c21], %19 {strides = array<i32>} : memref<16x16x27xbf16, #tpu.memory_space<vmem>>, vector<16x16x3xbf16>,
    %c2_48 = arith.constant 2 : index
    %c2_49 = arith.constant 2 : index
    %c0_50 = arith.constant 0 : index
    %21 = vector.load %arg6[%c2_48, %c2_49, %c0_50] : memref<18x18x3xbf16, #tpu.memory_space<vmem>>, vector<16x16x3xbf16>
    %c0_51 = arith.constant 0 : index
    %c0_52 = arith.constant 0 : index
    %c24 = arith.constant 24 : index
    %22 = vector.load %arg7[%c0_51, %c0_52, %c24] : memref<16x16x27xbf16, #tpu.memory_space<vmem>>, vector<16x16x3xbf16>
    tpu.vector_store %arg7[%c0_51, %c0_52, %c24], %21 {strides = array<i32>} : memref<16x16x27xbf16, #tpu.memory_space<vmem>>, vector<16x16x3xbf16>,
    %c0_53 = arith.constant 0 : index
    %c0_54 = arith.constant 0 : index
    %c0_55 = arith.constant 0 : index
    %23 = vector.load %arg7[%c0_53, %c0_54, %c0_55] : memref<16x16x27xbf16, #tpu.memory_space<vmem>>, vector<16x16x27xbf16>
    %24 = vector.shape_cast %23 : vector<16x16x27xbf16> to vector<256x27xbf16>
    %c0_56 = arith.constant 0 : index
    %c0_57 = arith.constant 0 : index
    %25 = vector.load %arg2[%c0_56, %c0_57] : memref<27x16xbf16, #tpu.memory_space<vmem>>, vector<27x16xbf16>
    %cst_58 = arith.constant dense<0.000000e+00> : vector<256x16xf32>
    %26 = tpu.matmul %24, %25, %cst_58 {dimension_numbers = #tpu.dot_dimension_numbers<[1], [0], [0], [1], [0, 0, 1, 1], [], []>} : vector<256x27xbf16>, vector<27x16xbf16>, vector<256x16xf32> -> vector<256x16xf32>
    %c0_59 = arith.constant 0 : index
    %c0_60 = arith.constant 0 : index
    %27 = vector.load %arg3[%c0_59, %c0_60] : memref<1x16xf32, #tpu.memory_space<vmem>>, vector<1x16xf32>
    %28 = vector.broadcast %27 : vector<1x16xf32> to vector<256x16xf32>
    %29 = arith.mulf %26, %28 : vector<256x16xf32>
    %c0_61 = arith.constant 0 : index
    %c0_62 = arith.constant 0 : index
    %30 = vector.load %arg4[%c0_61, %c0_62] : memref<1x16xf32, #tpu.memory_space<vmem>>, vector<1x16xf32>
    %31 = vector.broadcast %30 : vector<1x16xf32> to vector<256x16xf32>
    %32 = arith.addf %29, %31 : vector<256x16xf32>
    %cst_63 = arith.constant 0.000000e+00 : f32
    %33 = vector.broadcast %cst_63 : f32 to vector<256x16xf32>
    %34 = arith.maximumf %32, %33 : vector<256x16xf32>
    %35 = arith.truncf %34 : vector<256x16xf32> to vector<256x16xbf16>
    %c0_64 = arith.constant 0 : index
    %c0_65 = arith.constant 0 : index
    %c0_66 = arith.constant 0 : index
    %36 = vector.load %arg5[%c0_64, %c0_65, %c0_66] : memref<1x256x16xbf16, #tpu.memory_space<vmem>>, vector<1x256x16xbf16>
    %37 = vector.shape_cast %36 : vector<1x256x16xbf16> to vector<256x16xbf16>
    %38 = vector.shape_cast %35 : vector<256x16xbf16> to vector<1x256x16xbf16>
    tpu.vector_store %arg5[%c0_64, %c0_65, %c0_66], %38 {strides = array<i32>} : memref<1x256x16xbf16, #tpu.memory_space<vmem>>, vector<1x256x16xbf16>,
    return
  }
  func.func @transform_0(%arg0: i32) -> (i32, i32, i32, i32) {
    %c0_i32 = arith.constant 0 : i32
    %c0_i32_0 = arith.constant 0 : i32
    %c0_i32_1 = arith.constant 0 : i32
    %c0_i32_2 = arith.constant 0 : i32
    return %arg0, %c0_i32, %c0_i32_0, %c0_i32_1 : i32, i32, i32, i32
  }
  func.func @transform_1(%arg0: i32) -> (i32, i32) {
    %c0_i32 = arith.constant 0 : i32
    %c0_i32_0 = arith.constant 0 : i32
    %c0_i32_1 = arith.constant 0 : i32
    return %c0_i32, %c0_i32_0 : i32, i32
  }
  func.func @transform_2(%arg0: i32) -> (i32, i32) {
    %c0_i32 = arith.constant 0 : i32
    %c0_i32_0 = arith.constant 0 : i32
    %c0_i32_1 = arith.constant 0 : i32
    return %c0_i32, %c0_i32_0 : i32, i32
  }
  func.func @transform_3(%arg0: i32) -> (i32, i32) {
    %c0_i32 = arith.constant 0 : i32
    %c0_i32_0 = arith.constant 0 : i32
    %c0_i32_1 = arith.constant 0 : i32
    return %c0_i32, %c0_i32_0 : i32, i32
  }
  func.func @transform_4(%arg0: i32) -> (i32, i32, i32) {
    %c0_i32 = arith.constant 0 : i32
    %c0_i32_0 = arith.constant 0 : i32
    %c0_i32_1 = arith.constant 0 : i32
    return %arg0, %c0_i32, %c0_i32_0 : i32, i32, i32
  }
}

</mosaic_0001>

<llo_original>
// kernel: tpu_custom_call.1
$region0: #{tpu_custom_call.1}
  #allocation0 [shape = 'u32[]', space=smem, size = 0x4, offset = 0x4, fixed_abs, tag = 'smem constant byte address 0x4 - core index']
  #allocation1 [shape = 'u32[144,128]{1,0:T(1,128)}', space=vmem, size = 0x12000, scoped, tag = 'internal scratch']
  #allocation2 [shape = 'bf16[18,18,3]{2,1,0:T(8,128)(2,1)}', space=vmem, size = 0x1b000, scoped, tag = 'scratch operand']
  #allocation3 [shape = 'bf16[16,16,27]{2,1,0:T(8,128)(2,1)}', space=vmem, size = 0x10000, scoped, tag = 'scratch operand']
  %s0 = inlined_call_operand.vmem [shape: bf16[2,16,16,3], index: 0, kind: input, shape index: {}]
  %s1 = inlined_call_operand.vmem [shape: bf16[27,16], index: 1, kind: input, shape index: {}]
  %s2 = inlined_call_operand.vmem [shape: f32[1,16], index: 2, kind: input, shape index: {}]
  %s3 = inlined_call_operand.vmem [shape: f32[1,16], index: 3, kind: input, shape index: {}]
  %s4 = inlined_call_operand.vmem [shape: bf16[2,256,16], index: 4, kind: output, shape index: {}]
  %s5 = sld [smem:[#allocation0]]
  $region49: #{tpu_custom_call.1} parent=0
    _
  %s7 = ssub.s32 1, %s5
  %s8 = scalar_select 0, %s7, %s5
  loop: start=0, step=1, limit=4
  $region2: #{tpu_custom_call.1} parent=0 // loop_pre_header
    _
  $region3: #{tpu_custom_call.1} parent=0 // loop_header
    %s10 = sphi 0, %s14
    %p11 = scmp.ge.s32.totalorder %s10, 4
    %s20 = sphi 0, %s22
    %s23 = sphi 0, %s20
    %s24 = sphi 0, %s23
    %s40 = sphi 0, %s24
    %s44 = sphi 0, %s44
    %s46 = sphi 0, %s44
    %s47 = sphi 0, %s46
    %s61 = sphi 0, %s47
    %s65 = sphi 0, %s65
    %s67 = sphi 0, %s65
    %s68 = sphi 0, %s67
    %s82 = sphi 0, %s68
    %s86 = sphi 0, %s86
    %s88 = sphi 0, %s86
    %s89 = sphi 0, %s88
    %s103 = sphi 0, %s89
    %s109 = sphi 0, %s111
    %s112 = sphi 0, %s109
    %s113 = sphi 0, %s112
    %s129 = sphi 0, %s113
  $region4: #{tpu_custom_call.1} parent=0 // loop_header_branch
    %13 = sbr.rel (%p11) target = $region8
  $region5: #{tpu_custom_call.1} parent=0 // loop_body
    %s15 = ssub.s32 %s10, 1
    %s16 = ssub.s32 %s10, 2
    %s17 = sadd.s32 %s10, 1
    %s18 = ssub.s32 %s10, %s17
    %p19 = scmp.eq.s32.totalorder %s18, 0
    %s21 = sadd.s32 %s20, 1
    %s22 = scalar_select %p19, %s20, %s21
    %p25 = pneg %p19
    %p26 = scmp.eq.s32.totalorder %s10, 1
    %p27 = por %p25, %p26
    %p28 = scmp.ne.s32.totalorder %s20, %s23
    %p29 = scmp.eq.s32.totalorder %s10, 0
    %p30 = por %p28, %p29
    %p31 = scmp.ne.s32.totalorder %s20, %s23
    %p32 = scmp.eq.s32.totalorder %s15, 1
    %p33 = por %p31, %p32
    %p34 = scmp.ne.s32.totalorder %s23, %s24
    %p35 = scmp.eq.s32.totalorder %s15, 0
    %p36 = por %p34, %p35
    %p37 = scmp.ne.s32.totalorder %s23, %s24
    %p38 = scmp.eq.s32.totalorder %s16, 1
    %p39 = por %p37, %p38
    %p41 = scmp.ne.s32.totalorder %s24, %s40
    %p42 = scmp.eq.s32.totalorder %s16, 0
    %p43 = por %p41, %p42
    %s45 = sadd.s32 %s44, 1
    %p48 = scmp.eq.s32.totalorder %s10, 1
    %p49 = scmp.ne.s32.totalorder %s44, %s46
    %p50 = scmp.eq.s32.totalorder %s10, 0
    %p51 = por %p49, %p50
    %p52 = scmp.ne.s32.totalorder %s44, %s46
    %p53 = scmp.eq.s32.totalorder %s15, 1
    %p54 = por %p52, %p53
    %p55 = scmp.ne.s32.totalorder %s46, %s47
    %p56 = scmp.eq.s32.totalorder %s15, 0
    %p57 = por %p55, %p56
    %p58 = scmp.ne.s32.totalorder %s46, %s47
    %p59 = scmp.eq.s32.totalorder %s16, 1
    %p60 = por %p58, %p59
    %p62 = scmp.ne.s32.totalorder %s47, %s61
    %p63 = scmp.eq.s32.totalorder %s16, 0
    %p64 = por %p62, %p63
    %s66 = sadd.s32 %s65, 1
    %p69 = scmp.eq.s32.totalorder %s10, 1
    %p70 = scmp.ne.s32.totalorder %s65, %s67
    %p71 = scmp.eq.s32.totalorder %s10, 0
    %p72 = por %p70, %p71
    %p73 = scmp.ne.s32.totalorder %s65, %s67
    %p74 = scmp.eq.s32.totalorder %s15, 1
    %p75 = por %p73, %p74
    %p76 = scmp.ne.s32.totalorder %s67, %s68
    %p77 = scmp.eq.s32.totalorder %s15, 0
    %p78 = por %p76, %p77
    %p79 = scmp.ne.s32.totalorder %s67, %s68
    %p80 = scmp.eq.s32.totalorder %s16, 1
    %p81 = por %p79, %p80
    %p83 = scmp.ne.s32.totalorder %s68, %s82
    %p84 = scmp.eq.s32.totalorder %s16, 0
    %p85 = por %p83, %p84
    %s87 = sadd.s32 %s86, 1
    %p90 = scmp.eq.s32.totalorder %s10, 1
    %p91 = scmp.ne.s32.totalorder %s86, %s88
    %p92 = scmp.eq.s32.totalorder %s10, 0
    %p93 = por %p91, %p92
    %p94 = scmp.ne.s32.totalorder %s86, %s88
    %p95 = scmp.eq.s32.totalorder %s15, 1
    %p96 = por %p94, %p95
    %p97 = scmp.ne.s32.totalorder %s88, %s89
    %p98 = scmp.eq.s32.totalorder %s15, 0
    %p99 = por %p97, %p98
    %p100 = scmp.ne.s32.totalorder %s88, %s89
    %p101 = scmp.eq.s32.totalorder %s16, 1
    %p102 = por %p100, %p101
    %p104 = scmp.ne.s32.totalorder %s89, %s103
    %p105 = scmp.eq.s32.totalorder %s16, 0
    %p106 = por %p104, %p105
    %s107 = ssub.s32 %s10, %s17
    %p108 = scmp.eq.s32.totalorder %s107, 0
    %s110 = sadd.s32 %s109, 1
    %s111 = scalar_select %p108, %s109, %s110
    %p114 = pneg %p108
    %p115 = scmp.eq.s32.totalorder %s10, 1
    %p116 = por %p114, %p115
    %p117 = scmp.ne.s32.totalorder %s109, %s112
    %p118 = scmp.eq.s32.totalorder %s10, 0
    %p119 = por %p117, %p118
    %p120 = scmp.ne.s32.totalorder %s109, %s112
    %p121 = scmp.eq.s32.totalorder %s15, 1
    %p122 = por %p120, %p121
    %p123 = scmp.ne.s32.totalorder %s112, %s113
    %p124 = scmp.eq.s32.totalorder %s15, 0
    %p125 = por %p123, %p124
    %p126 = scmp.ne.s32.totalorder %s112, %s113
    %p127 = scmp.eq.s32.totalorder %s16, 1
    %p128 = por %p126, %p127
    %p130 = scmp.ne.s32.totalorder %s113, %s129
    %p131 = scmp.eq.s32.totalorder %s16, 0
    %p132 = por %p130, %p131
    %p133 = scmp.le.s32.totalorder 1, %s10
    %p134 = scmp.lt.s32.totalorder %s10, 3
    %p135 = pnand %p133, %p134
    %p136 = pneg %p135
    // Predicated region
    $region9: #{tpu_custom_call.1} parent=5 // pred_check
      _
    $region10: #{tpu_custom_call.1} parent=5 // pred_check_branch
      %138 = sbr.rel (%p135) target = $region12
    $region11: #{tpu_custom_call.1} parent=5 // pred_region
      %s139 = ssub.s32 %s10, 1
      // Predicated region
      $region13: #{tpu_custom_call.1} parent=11 // pred_check
        %p140 = pneg %p57
      $region14: #{tpu_custom_call.1} parent=11 // pred_check_branch
        %142 = sbr.rel (%p140) target = $region16
      $region15: #{tpu_custom_call.1} parent=11 // pred_region
        _
      $region16: #{tpu_custom_call.1} parent=11 // pred_fallthru
        _
      // Predicated region
      $region17: #{tpu_custom_call.1} parent=11 // pred_check
        %p143 = pneg %p78
      $region18: #{tpu_custom_call.1} parent=11 // pred_check_branch
        %145 = sbr.rel (%p143) target = $region20
      $region19: #{tpu_custom_call.1} parent=11 // pred_region
        _
      $region20: #{tpu_custom_call.1} parent=11 // pred_fallthru
        _
      // Predicated region
      $region21: #{tpu_custom_call.1} parent=11 // pred_check
        %p146 = pneg %p99
      $region22: #{tpu_custom_call.1} parent=11 // pred_check_branch
        %148 = sbr.rel (%p146) target = $region24
      $region23: #{tpu_custom_call.1} parent=11 // pred_region
        _
      $region24: #{tpu_custom_call.1} parent=11 // pred_fallthru
        _
    $region12: #{tpu_custom_call.1} parent=5 // pred_fallthru
      _
    %p149 = scmp.lt.s32.totalorder %s10, 2
    // Predicated region
    $region25: #{tpu_custom_call.1} parent=5 // pred_check
      %p150 = pneg %p149
    $region26: #{tpu_custom_call.1} parent=5 // pred_check_branch
      %152 = sbr.rel (%p150) target = $region28
    $region27: #{tpu_custom_call.1} parent=5 // pred_region
      // Predicated region
      $region29: #{tpu_custom_call.1} parent=27 // pred_check
        %p153 = pneg %p30
      $region30: #{tpu_custom_call.1} parent=27 // pred_check_branch
        %155 = sbr.rel (%p153) target = $region32
      $region31: #{tpu_custom_call.1} parent=27 // pred_region
        %p156 = scmp.lt.s32.totalorder %s10, 1
        %s157 = scalar_select %p156, %s10, 1
        %s158 = smul.addr %s157, 32
        %s159 = smul.addr %s158, 4
        %s160 = scalar_lea.vmem %s0, %s159
      $region32: #{tpu_custom_call.1} parent=27 // pred_fallthru
        _
    $region28: #{tpu_custom_call.1} parent=5 // pred_fallthru
      _
    %p161 = scmp.le.s32.totalorder 1, %s10
    %p162 = scmp.lt.s32.totalorder %s10, 3
    %p163 = pnand %p161, %p162
    %p164 = pneg %p163
    // Predicated region
    $region33: #{tpu_custom_call.1} parent=5 // pred_check
      _
    $region34: #{tpu_custom_call.1} parent=5 // pred_check_branch
      %166 = sbr.rel (%p163) target = $region36
    $region35: #{tpu_custom_call.1} parent=5 // pred_region
      %s167 = ssub.s32 %s10, 1
      %p168 = scmp.lt.s32.totalorder %s15, 1
      %s169 = scalar_select %p168, %s15, 1
      %s170 = smul.addr %s169, 32
      %s171 = smul.addr %s170, 4
      %s172 = scalar_lea.vmem %s0, %s171
      %p173 = pneg %p36
      %p174 = pneg %p33
      %p175 = pneg %p57
      %p176 = pneg %p54
      %p177 = pneg %p78
      %p178 = pneg %p75
      %p179 = pneg %p99
      %p180 = pneg %p96
      %p181 = pneg %p125
      %p182 = pneg %p122
      %p183 = scmp.lt.s32.totalorder %s15, 1
      %s184 = scalar_select %p183, %s15, 1
      %s185 = smul.addr %s184, 32
      %s186 = smul.addr %s185, 4
      %s187 = scalar_lea.vmem %s4, %s186
      %p188 = scmp.lt.s32.totalorder %s15, 1
      %s189 = scalar_select %p188, %s15, 1
      %s190 = smul.addr %s189, 32
      %s191 = smul.addr %s190, 4
      %s192 = scalar_lea.vmem %s0, %s191
      %p193 = scmp.lt.s32.totalorder %s15, 1
      %s194 = scalar_select %p193, %s15, 1
      %s195 = smul.addr %s194, 32
      %s196 = smul.addr %s195, 4
      %s197 = scalar_lea.vmem %s4, %s196
      %vm199 = vcmask 19456
      %200 = vst.msk [vmem:[#allocation2] sm:$0xf] %vm199, 0
      %201 = vst.msk [vmem:[#allocation2 + $0x4] sm:$0xf] %vm199, 0
      %vm202 = vcmask 16384
      %203 = vst.msk [vmem:[#allocation2 + $0x8] sm:$0x1] %vm202, 0
      %204 = vst.msk [vmem:[#allocation2 + $0xc] sm:$0xf] %vm199, 0
      %205 = vst.msk [vmem:[#allocation2 + $0x10] sm:$0xf] %vm199, 0
      %206 = vst.msk [vmem:[#allocation2 + $0x14] sm:$0x1] %vm202, 0
      %207 = vst.msk [vmem:[#allocation2 + $0x18] sm:$0xf] %vm199, 0
      %208 = vst.msk [vmem:[#allocation2 + $0x1c] sm:$0xf] %vm199, 0
      %209 = vst.msk [vmem:[#allocation2 + $0x20] sm:$0x1] %vm202, 0
      %210 = vst.msk [vmem:[#allocation2 + $0x24] sm:$0xf] %vm199, 0
      %211 = vst.msk [vmem:[#allocation2 + $0x28] sm:$0xf] %vm199, 0
      %212 = vst.msk [vmem:[#allocation2 + $0x2c] sm:$0x1] %vm202, 0
      %213 = vst.msk [vmem:[#allocation2 + $0x30] sm:$0xf] %vm199, 0
      %214 = vst.msk [vmem:[#allocation2 + $0x34] sm:$0xf] %vm199, 0
      %215 = vst.msk [vmem:[#allocation2 + $0x38] sm:$0x1] %vm202, 0
      %216 = vst.msk [vmem:[#allocation2 + $0x3c] sm:$0xf] %vm199, 0
      %217 = vst.msk [vmem:[#allocation2 + $0x40] sm:$0xf] %vm199, 0
      %218 = vst.msk [vmem:[#allocation2 + $0x44] sm:$0x1] %vm202, 0
      %219 = vst.msk [vmem:[#allocation2 + $0x48] sm:$0xf] %vm199, 0
      %220 = vst.msk [vmem:[#allocation2 + $0x4c] sm:$0xf] %vm199, 0
      %221 = vst.msk [vmem:[#allocation2 + $0x50] sm:$0x1] %vm202, 0
      %222 = vst.msk [vmem:[#allocation2 + $0x54] sm:$0xf] %vm199, 0
      %223 = vst.msk [vmem:[#allocation2 + $0x58] sm:$0xf] %vm199, 0
      %224 = vst.msk [vmem:[#allocation2 + $0x5c] sm:$0x1] %vm202, 0
      %225 = vst.msk [vmem:[#allocation2 + $0x60] sm:$0xf] %vm199, 0
      %226 = vst.msk [vmem:[#allocation2 + $0x64] sm:$0xf] %vm199, 0
      %227 = vst.msk [vmem:[#allocation2 + $0x68] sm:$0x1] %vm202, 0
      %228 = vst.msk [vmem:[#allocation2 + $0x6c] sm:$0xf] %vm199, 0
      %229 = vst.msk [vmem:[#allocation2 + $0x70] sm:$0xf] %vm199, 0
      %230 = vst.msk [vmem:[#allocation2 + $0x74] sm:$0x1] %vm202, 0
      %231 = vst.msk [vmem:[#allocation2 + $0x78] sm:$0xf] %vm199, 0
      %232 = vst.msk [vmem:[#allocation2 + $0x7c] sm:$0xf] %vm199, 0
      %233 = vst.msk [vmem:[#allocation2 + $0x80] sm:$0x1] %vm202, 0
      %234 = vst.msk [vmem:[#allocation2 + $0x84] sm:$0xf] %vm199, 0
      %235 = vst.msk [vmem:[#allocation2 + $0x88] sm:$0xf] %vm199, 0
      %236 = vst.msk [vmem:[#allocation2 + $0x8c] sm:$0x1] %vm202, 0
      %237 = vst.msk [vmem:[#allocation2 + $0x90] sm:$0xf] %vm199, 0
      %238 = vst.msk [vmem:[#allocation2 + $0x94] sm:$0xf] %vm199, 0
      %239 = vst.msk [vmem:[#allocation2 + $0x98] sm:$0x1] %vm202, 0
      %240 = vst.msk [vmem:[#allocation2 + $0x9c] sm:$0xf] %vm199, 0
      %241 = vst.msk [vmem:[#allocation2 + $0xa0] sm:$0xf] %vm199, 0
      %242 = vst.msk [vmem:[#allocation2 + $0xa4] sm:$0x1] %vm202, 0
      %243 = vst.msk [vmem:[#allocation2 + $0xa8] sm:$0xf] %vm199, 0
      %244 = vst.msk [vmem:[#allocation2 + $0xac] sm:$0xf] %vm199, 0
      %245 = vst.msk [vmem:[#allocation2 + $0xb0] sm:$0x1] %vm202, 0
      %246 = vst.msk [vmem:[#allocation2 + $0xb4] sm:$0xf] %vm199, 0
      %247 = vst.msk [vmem:[#allocation2 + $0xb8] sm:$0xf] %vm199, 0
      %248 = vst.msk [vmem:[#allocation2 + $0xbc] sm:$0x1] %vm202, 0
      %249 = vst.msk [vmem:[#allocation2 + $0xc0] sm:$0xf] %vm199, 0
      %250 = vst.msk [vmem:[#allocation2 + $0xc4] sm:$0xf] %vm199, 0
      %251 = vst.msk [vmem:[#allocation2 + $0xc8] sm:$0x1] %vm202, 0
      %252 = vst.msk [vmem:[#allocation2 + $0xcc] sm:$0xf] %vm199, 0
      %253 = vst.msk [vmem:[#allocation2 + $0xd0] sm:$0xf] %vm199, 0
      %254 = vst.msk [vmem:[#allocation2 + $0xd4] sm:$0x1] %vm202, 0
      %v255 = vld [vmem:[%s192] sm:$0xf]
      %v256 = vld [vmem:[%s192 + $0x4] sm:$0xf]
      %v257 = vld [vmem:[%s192 + $0x8] sm:$0xf]
      %v258 = vld [vmem:[%s192 + $0xc] sm:$0xf]
      %v259 = vld [vmem:[%s192 + $0x10] sm:$0xf]
      %v260 = vld [vmem:[%s192 + $0x14] sm:$0xf]
      %v261 = vld [vmem:[%s192 + $0x18] sm:$0xf]
      %v262 = vld [vmem:[%s192 + $0x1c] sm:$0xf]
      %v263 = vld [vmem:[%s192 + $0x20] sm:$0xf]
      %v264 = vld [vmem:[%s192 + $0x24] sm:$0xf]
      %v265 = vld [vmem:[%s192 + $0x28] sm:$0xf]
      %v266 = vld [vmem:[%s192 + $0x2c] sm:$0xf]
      %v267 = vld [vmem:[%s192 + $0x30] sm:$0xf]
      %v268 = vld [vmem:[%s192 + $0x34] sm:$0xf]
      %v269 = vld [vmem:[%s192 + $0x38] sm:$0xf]
      %v270 = vld [vmem:[%s192 + $0x3c] sm:$0xf]
      %v271 = vld [vmem:[%s192 + $0x40] sm:$0xf]
      %v272 = vld [vmem:[%s192 + $0x44] sm:$0xf]
      %v273 = vld [vmem:[%s192 + $0x48] sm:$0xf]
      %v274 = vld [vmem:[%s192 + $0x4c] sm:$0xf]
      %v275 = vld [vmem:[%s192 + $0x50] sm:$0xf]
      %v276 = vld [vmem:[%s192 + $0x54] sm:$0xf]
      %v277 = vld [vmem:[%s192 + $0x58] sm:$0xf]
      %v278 = vld [vmem:[%s192 + $0x5c] sm:$0xf]
      %v279 = vld [vmem:[%s192 + $0x60] sm:$0xf]
      %v280 = vld [vmem:[%s192 + $0x64] sm:$0xf]
      %v281 = vld [vmem:[%s192 + $0x68] sm:$0xf]
      %v282 = vld [vmem:[%s192 + $0x6c] sm:$0xf]
      %v283 = vld [vmem:[%s192 + $0x70] sm:$0xf]
      %v284 = vld [vmem:[%s192 + $0x74] sm:$0xf]
      %v285 = vld [vmem:[%s192 + $0x78] sm:$0xf]
      %v286 = vld [vmem:[%s192 + $0x7c] sm:$0xf]
      %vm287 = vsmask.f32 256
      %vm288 = vsmask.f32 4368
      %vm289 = vmor %vm287, %vm288
      %v291 = vshrl.u32 %v255, 16
      %v293 = vrot.slane %v291, 7
      %v294 = vshll.u32 %v255, 16
      %v296 = vor.u32 %v293, %v294
      %v297 = vrot.slane %v293, 4
      %v299 = vshrl.u32 %v256, 16
      %v301 = vrot.slane %v299, 7
      %v302 = vshll.u32 %v256, 16
      %v304 = vor.u32 %v301, %v302
      %v305 = vsel %vm289, %v297, %v304
      %v306 = vrot.slane %v301, 4
      %v308 = vshrl.u32 %v257, 16
      %v310 = vrot.slane %v308, 7
      %v311 = vshll.u32 %v257, 16
      %v313 = vor.u32 %v310, %v311
      %v314 = vrot.slane %v310, 4
      %v316 = vshrl.u32 %v258, 16
      %v318 = vrot.slane %v316, 7
      %v319 = vshll.u32 %v258, 16
      %v321 = vor.u32 %v318, %v319
      %v322 = vsel %vm289, %v314, %v321
      %v323 = vrot.slane %v318, 4
      %v325 = vshrl.u32 %v259, 16
      %v327 = vrot.slane %v325, 7
      %v328 = vshll.u32 %v259, 16
      %v330 = vor.u32 %v327, %v328
      %v331 = vrot.slane %v327, 4
      %v333 = vshrl.u32 %v260, 16
      %v335 = vrot.slane %v333, 7
      %v336 = vshll.u32 %v260, 16
      %v338 = vor.u32 %v335, %v336
      %v339 = vsel %vm289, %v331, %v338
      %v340 = vrot.slane %v335, 4
      %v342 = vshrl.u32 %v261, 16
      %v344 = vrot.slane %v342, 7
      %v345 = vshll.u32 %v261, 16
      %v347 = vor.u32 %v344, %v345
      %v348 = vrot.slane %v344, 4
      %v350 = vshrl.u32 %v262, 16
      %v352 = vrot.slane %v350, 7
      %v353 = vshll.u32 %v262, 16
      %v355 = vor.u32 %v352, %v353
      %v356 = vsel %vm289, %v348, %v355
      %v357 = vrot.slane %v352, 4
      %v359 = vshrl.u32 %v263, 16
      %v361 = vrot.slane %v359, 7
      %v362 = vshll.u32 %v263, 16
      %v364 = vor.u32 %v361, %v362
      %v365 = vrot.slane %v361, 4
      %v367 = vshrl.u32 %v264, 16
      %v369 = vrot.slane %v367, 7
      %v370 = vshll.u32 %v264, 16
      %v372 = vor.u32 %v369, %v370
      %v373 = vsel %vm289, %v365, %v372
      %v374 = vrot.slane %v369, 4
      %v376 = vshrl.u32 %v265, 16
      %v378 = vrot.slane %v376, 7
      %v379 = vshll.u32 %v265, 16
      %v381 = vor.u32 %v378, %v379
      %v382 = vrot.slane %v378, 4
      %v384 = vshrl.u32 %v266, 16
      %v386 = vrot.slane %v384, 7
      %v387 = vshll.u32 %v266, 16
      %v389 = vor.u32 %v386, %v387
      %v390 = vsel %vm289, %v382, %v389
      %v391 = vrot.slane %v386, 4
      %v393 = vshrl.u32 %v267, 16
      %v395 = vrot.slane %v393, 7
      %v396 = vshll.u32 %v267, 16
      %v398 = vor.u32 %v395, %v396
      %v399 = vrot.slane %v395, 4
      %v401 = vshrl.u32 %v268, 16
      %v403 = vrot.slane %v401, 7
      %v404 = vshll.u32 %v268, 16
      %v406 = vor.u32 %v403, %v404
      %v407 = vsel %vm289, %v399, %v406
      %v408 = vrot.slane %v403, 4
      %v410 = vshrl.u32 %v269, 16
      %v412 = vrot.slane %v410, 7
      %v413 = vshll.u32 %v269, 16
      %v415 = vor.u32 %v412, %v413
      %v416 = vrot.slane %v412, 4
      %v418 = vshrl.u32 %v270, 16
      %v420 = vrot.slane %v418, 7
      %v421 = vshll.u32 %v270, 16
      %v423 = vor.u32 %v420, %v421
      %v424 = vsel %vm289, %v416, %v423
      %v425 = vrot.slane %v420, 4
      %v427 = vshrl.u32 %v271, 16
      %v429 = vrot.slane %v427, 7
      %v430 = vshll.u32 %v271, 16
      %v432 = vor.u32 %v429, %v430
      %v433 = vrot.slane %v429, 4
      %v435 = vshrl.u32 %v272, 16
      %v437 = vrot.slane %v435, 7
      %v438 = vshll.u32 %v272, 16
      %v440 = vor.u32 %v437, %v438
      %v441 = vsel %vm289, %v433, %v440
      %v442 = vrot.slane %v437, 4
      %v444 = vshrl.u32 %v273, 16
      %v446 = vrot.slane %v444, 7
      %v447 = vshll.u32 %v273, 16
      %v449 = vor.u32 %v446, %v447
      %v450 = vrot.slane %v446, 4
      %v452 = vshrl.u32 %v274, 16
      %v454 = vrot.slane %v452, 7
      %v455 = vshll.u32 %v274, 16
      %v457 = vor.u32 %v454, %v455
      %v458 = vsel %vm289, %v450, %v457
      %v459 = vrot.slane %v454, 4
      %v461 = vshrl.u32 %v275, 16
      %v463 = vrot.slane %v461, 7
      %v464 = vshll.u32 %v275, 16
      %v466 = vor.u32 %v463, %v464
      %v467 = vrot.slane %v463, 4
      %v469 = vshrl.u32 %v276, 16
      %v471 = vrot.slane %v469, 7
      %v472 = vshll.u32 %v276, 16
      %v474 = vor.u32 %v471, %v472
      %v475 = vsel %vm289, %v467, %v474
      %v476 = vrot.slane %v471, 4
      %v478 = vshrl.u32 %v277, 16
      %v480 = vrot.slane %v478, 7
      %v481 = vshll.u32 %v277, 16
      %v483 = vor.u32 %v480, %v481
      %v484 = vrot.slane %v480, 4
      %v486 = vshrl.u32 %v278, 16
      %v488 = vrot.slane %v486, 7
      %v489 = vshll.u32 %v278, 16
      %v491 = vor.u32 %v488, %v489
      %v492 = vsel %vm289, %v484, %v491
      %v493 = vrot.slane %v488, 4
      %v495 = vshrl.u32 %v279, 16
      %v497 = vrot.slane %v495, 7
      %v498 = vshll.u32 %v279, 16
      %v500 = vor.u32 %v497, %v498
      %v501 = vrot.slane %v497, 4
      %v503 = vshrl.u32 %v280, 16
      %v505 = vrot.slane %v503, 7
      %v506 = vshll.u32 %v280, 16
      %v508 = vor.u32 %v505, %v506
      %v509 = vsel %vm289, %v501, %v508
      %v510 = vrot.slane %v505, 4
      %v512 = vshrl.u32 %v281, 16
      %v514 = vrot.slane %v512, 7
      %v515 = vshll.u32 %v281, 16
      %v517 = vor.u32 %v514, %v515
      %v518 = vrot.slane %v514, 4
      %v520 = vshrl.u32 %v282, 16
      %v522 = vrot.slane %v520, 7
      %v523 = vshll.u32 %v282, 16
      %v525 = vor.u32 %v522, %v523
      %v526 = vsel %vm289, %v518, %v525
      %v527 = vrot.slane %v522, 4
      %v529 = vshrl.u32 %v283, 16
      %v531 = vrot.slane %v529, 7
      %v532 = vshll.u32 %v283, 16
      %v534 = vor.u32 %v531, %v532
      %v535 = vrot.slane %v531, 4
      %v537 = vshrl.u32 %v284, 16
      %v539 = vrot.slane %v537, 7
      %v540 = vshll.u32 %v284, 16
      %v542 = vor.u32 %v539, %v540
      %v543 = vsel %vm289, %v535, %v542
      %v544 = vrot.slane %v539, 4
      %v546 = vshrl.u32 %v285, 16
      %v548 = vrot.slane %v546, 7
      %v549 = vshll.u32 %v285, 16
      %v551 = vor.u32 %v548, %v549
      %v552 = vrot.slane %v548, 4
      %v554 = vshrl.u32 %v286, 16
      %v556 = vrot.slane %v554, 7
      %v557 = vshll.u32 %v286, 16
      %v559 = vor.u32 %v556, %v557
      %v560 = vsel %vm289, %v552, %v559
      %v561 = vrot.slane %v556, 4
      %s610 = scalar_lea.vmem [#allocation2], 12
      %vm611 = vcmask 19456
      %vm612 = vsmask.f32 7938
      %vm613 = vmand %vm611, %vm612
      %v614 = vld [vmem:[%s610] sm:$0xf]
      %v615 = vsel %vm613, %v296, %v614
      %616 = vst [vmem:[%s610] sm:$0xf] %v615
      %617 = vst.msk [vmem:[%s610 + $0x4] sm:$0xf] %vm199, %v305
      %vm618 = vcmask 16384
      %vm619 = vmand %vm618, %vm287
      %v620 = vld [vmem:[%s610 + $0x8] sm:$0x1]
      %v621 = vsel %vm619, %v306, %v620
      %622 = vst [vmem:[%s610 + $0x8] sm:$0x1] %v621
      %v623 = vld [vmem:[%s610 + $0xc] sm:$0xf]
      %v624 = vsel %vm613, %v313, %v623
      %625 = vst [vmem:[%s610 + $0xc] sm:$0xf] %v624
      %626 = vst.msk [vmem:[%s610 + $0x10] sm:$0xf] %vm199, %v322
      %v627 = vld [vmem:[%s610 + $0x14] sm:$0x1]
      %v628 = vsel %vm619, %v323, %v627
      %629 = vst [vmem:[%s610 + $0x14] sm:$0x1] %v628
      %v630 = vld [vmem:[%s610 + $0x18] sm:$0xf]
      %v631 = vsel %vm613, %v330, %v630
      %632 = vst [vmem:[%s610 + $0x18] sm:$0xf] %v631
      %633 = vst.msk [vmem:[%s610 + $0x1c] sm:$0xf] %vm199, %v339
      %v634 = vld [vmem:[%s610 + $0x20] sm:$0x1]
      %v635 = vsel %vm619, %v340, %v634
      %636 = vst [vmem:[%s610 + $0x20] sm:$0x1] %v635
      %v637 = vld [vmem:[%s610 + $0x24] sm:$0xf]
      %v638 = vsel %vm613, %v347, %v637
      %639 = vst [vmem:[%s610 + $0x24] sm:$0xf] %v638
      %640 = vst.msk [vmem:[%s610 + $0x28] sm:$0xf] %vm199, %v356
      %v641 = vld [vmem:[%s610 + $0x2c] sm:$0x1]
      %v642 = vsel %vm619, %v357, %v641
      %643 = vst [vmem:[%s610 + $0x2c] sm:$0x1] %v642
      %v644 = vld [vmem:[%s610 + $0x30] sm:$0xf]
      %v645 = vsel %vm613, %v364, %v644
      %646 = vst [vmem:[%s610 + $0x30] sm:$0xf] %v645
      %647 = vst.msk [vmem:[%s610 + $0x34] sm:$0xf] %vm199, %v373
      %v648 = vld [vmem:[%s610 + $0x38] sm:$0x1]
      %v649 = vsel %vm619, %v374, %v648
      %650 = vst [vmem:[%s610 + $0x38] sm:$0x1] %v649
      %v651 = vld [vmem:[%s610 + $0x3c] sm:$0xf]
      %v652 = vsel %vm613, %v381, %v651
      %653 = vst [vmem:[%s610 + $0x3c] sm:$0xf] %v652
      %654 = vst.msk [vmem:[%s610 + $0x40] sm:$0xf] %vm199, %v390
      %v655 = vld [vmem:[%s610 + $0x44] sm:$0x1]
      %v656 = vsel %vm619, %v391, %v655
      %657 = vst [vmem:[%s610 + $0x44] sm:$0x1] %v656
      %v658 = vld [vmem:[%s610 + $0x48] sm:$0xf]
      %v659 = vsel %vm613, %v398, %v658
      %660 = vst [vmem:[%s610 + $0x48] sm:$0xf] %v659
      %661 = vst.msk [vmem:[%s610 + $0x4c] sm:$0xf] %vm199, %v407
      %v662 = vld [vmem:[%s610 + $0x50] sm:$0x1]
      %v663 = vsel %vm619, %v408, %v662
      %664 = vst [vmem:[%s610 + $0x50] sm:$0x1] %v663
      %v665 = vld [vmem:[%s610 + $0x54] sm:$0xf]
      %v666 = vsel %vm613, %v415, %v665
      %667 = vst [vmem:[%s610 + $0x54] sm:$0xf] %v666
      %668 = vst.msk [vmem:[%s610 + $0x58] sm:$0xf] %vm199, %v424
      %v669 = vld [vmem:[%s610 + $0x5c] sm:$0x1]
      %v670 = vsel %vm619, %v425, %v669
      %671 = vst [vmem:[%s610 + $0x5c] sm:$0x1] %v670
      %v672 = vld [vmem:[%s610 + $0x60] sm:$0xf]
      %v673 = vsel %vm613, %v432, %v672
      %674 = vst [vmem:[%s610 + $0x60] sm:$0xf] %v673
      %675 = vst.msk [vmem:[%s610 + $0x64] sm:$0xf] %vm199, %v441
      %v676 = vld [vmem:[%s610 + $0x68] sm:$0x1]
      %v677 = vsel %vm619, %v442, %v676
      %678 = vst [vmem:[%s610 + $0x68] sm:$0x1] %v677
      %v679 = vld [vmem:[%s610 + $0x6c] sm:$0xf]
      %v680 = vsel %vm613, %v449, %v679
      %681 = vst [vmem:[%s610 + $0x6c] sm:$0xf] %v680
      %682 = vst.msk [vmem:[%s610 + $0x70] sm:$0xf] %vm199, %v458
      %v683 = vld [vmem:[%s610 + $0x74] sm:$0x1]
      %v684 = vsel %vm619, %v459, %v683
      %685 = vst [vmem:[%s610 + $0x74] sm:$0x1] %v684
      %v686 = vld [vmem:[%s610 + $0x78] sm:$0xf]
      %v687 = vsel %vm613, %v466, %v686
      %688 = vst [vmem:[%s610 + $0x78] sm:$0xf] %v687
      %689 = vst.msk [vmem:[%s610 + $0x7c] sm:$0xf] %vm199, %v475
      %v690 = vld [vmem:[%s610 + $0x80] sm:$0x1]
      %v691 = vsel %vm619, %v476, %v690
      %692 = vst [vmem:[%s610 + $0x80] sm:$0x1] %v691
      %v693 = vld [vmem:[%s610 + $0x84] sm:$0xf]
      %v694 = vsel %vm613, %v483, %v693
      %695 = vst [vmem:[%s610 + $0x84] sm:$0xf] %v694
      %696 = vst.msk [vmem:[%s610 + $0x88] sm:$0xf] %vm199, %v492
      %v697 = vld [vmem:[%s610 + $0x8c] sm:$0x1]
      %v698 = vsel %vm619, %v493, %v697
      %699 = vst [vmem:[%s610 + $0x8c] sm:$0x1] %v698
      %v700 = vld [vmem:[%s610 + $0x90] sm:$0xf]
      %v701 = vsel %vm613, %v500, %v700
      %702 = vst [vmem:[%s610 + $0x90] sm:$0xf] %v701
      %703 = vst.msk [vmem:[%s610 + $0x94] sm:$0xf] %vm199, %v509
      %v704 = vld [vmem:[%s610 + $0x98] sm:$0x1]
      %v705 = vsel %vm619, %v510, %v704
      %706 = vst [vmem:[%s610 + $0x98] sm:$0x1] %v705
      %v707 = vld [vmem:[%s610 + $0x9c] sm:$0xf]
      %v708 = vsel %vm613, %v517, %v707
      %709 = vst [vmem:[%s610 + $0x9c] sm:$0xf] %v708
      %710 = vst.msk [vmem:[%s610 + $0xa0] sm:$0xf] %vm199, %v526
      %v711 = vld [vmem:[%s610 + $0xa4] sm:$0x1]
      %v712 = vsel %vm619, %v527, %v711
      %713 = vst [vmem:[%s610 + $0xa4] sm:$0x1] %v712
      %v714 = vld [vmem:[%s610 + $0xa8] sm:$0xf]
      %v715 = vsel %vm613, %v534, %v714
      %716 = vst [vmem:[%s610 + $0xa8] sm:$0xf] %v715
      %717 = vst.msk [vmem:[%s610 + $0xac] sm:$0xf] %vm199, %v543
      %v718 = vld [vmem:[%s610 + $0xb0] sm:$0x1]
      %v719 = vsel %vm619, %v544, %v718
      %720 = vst [vmem:[%s610 + $0xb0] sm:$0x1] %v719
      %v721 = vld [vmem:[%s610 + $0xb4] sm:$0xf]
      %v722 = vsel %vm613, %v551, %v721
      %723 = vst [vmem:[%s610 + $0xb4] sm:$0xf] %v722
      %724 = vst.msk [vmem:[%s610 + $0xb8] sm:$0xf] %vm199, %v560
      %v725 = vld [vmem:[%s610 + $0xbc] sm:$0x1]
      %v726 = vsel %vm619, %v561, %v725
      %727 = vst [vmem:[%s610 + $0xbc] sm:$0x1] %v726
      %v728 = vld [vmem:[#allocation2] sm:$0xf]
      %v729 = vld [vmem:[#allocation2 + $0x4] sm:$0xf]
      %v730 = vld [vmem:[#allocation2 + $0xc] sm:$0xf]
      %v731 = vld [vmem:[#allocation2 + $0x10] sm:$0xf]
      %v732 = vld [vmem:[#allocation2 + $0x18] sm:$0xf]
      %v733 = vld [vmem:[#allocation2 + $0x1c] sm:$0xf]
      %v734 = vld [vmem:[#allocation2 + $0x24] sm:$0xf]
      %v735 = vld [vmem:[#allocation2 + $0x28] sm:$0xf]
      %v736 = vld [vmem:[#allocation2 + $0x30] sm:$0xf]
      %v737 = vld [vmem:[#allocation2 + $0x34] sm:$0xf]
      %v738 = vld [vmem:[#allocation2 + $0x3c] sm:$0xf]
      %v739 = vld [vmem:[#allocation2 + $0x40] sm:$0xf]
      %v740 = vld [vmem:[#allocation2 + $0x48] sm:$0xf]
      %v741 = vld [vmem:[#allocation2 + $0x4c] sm:$0xf]
      %v742 = vld [vmem:[#allocation2 + $0x54] sm:$0xf]
      %v743 = vld [vmem:[#allocation2 + $0x58] sm:$0xf]
      %v744 = vld [vmem:[#allocation2 + $0x60] sm:$0xf]
      %v745 = vld [vmem:[#allocation2 + $0x64] sm:$0xf]
      %v746 = vld [vmem:[#allocation2 + $0x6c] sm:$0xf]
      %v747 = vld [vmem:[#allocation2 + $0x70] sm:$0xf]
      %v748 = vld [vmem:[#allocation2 + $0x78] sm:$0xf]
      %v749 = vld [vmem:[#allocation2 + $0x7c] sm:$0xf]
      %v750 = vld [vmem:[#allocation2 + $0x84] sm:$0xf]
      %v751 = vld [vmem:[#allocation2 + $0x88] sm:$0xf]
      %v752 = vld [vmem:[#allocation2 + $0x90] sm:$0xf]
      %v753 = vld [vmem:[#allocation2 + $0x94] sm:$0xf]
      %v754 = vld [vmem:[#allocation2 + $0x9c] sm:$0xf]
      %v755 = vld [vmem:[#allocation2 + $0xa0] sm:$0xf]
      %v756 = vld [vmem:[#allocation2 + $0xa8] sm:$0xf]
      %v757 = vld [vmem:[#allocation2 + $0xac] sm:$0xf]
      %v758 = vld [vmem:[#allocation2 + $0xb4] sm:$0xf]
      %v759 = vld [vmem:[#allocation2 + $0xb8] sm:$0xf]
      %760 = vst.msk [vmem:[#allocation3] sm:$0xf] %vm199, %v728
      %761 = vst.msk [vmem:[#allocation3 + $0x4] sm:$0xf] %vm199, %v729
      %762 = vst.msk [vmem:[#allocation3 + $0x8] sm:$0xf] %vm199, %v730
      %763 = vst.msk [vmem:[#allocation3 + $0xc] sm:$0xf] %vm199, %v731
      %764 = vst.msk [vmem:[#allocation3 + $0x10] sm:$0xf] %vm199, %v732
      %765 = vst.msk [vmem:[#allocation3 + $0x14] sm:$0xf] %vm199, %v733
      %766 = vst.msk [vmem:[#allocation3 + $0x18] sm:$0xf] %vm199, %v734
      %767 = vst.msk [vmem:[#allocation3 + $0x1c] sm:$0xf] %vm199, %v735
      %768 = vst.msk [vmem:[#allocation3 + $0x20] sm:$0xf] %vm199, %v736
      %769 = vst.msk [vmem:[#allocation3 + $0x24] sm:$0xf] %vm199, %v737
      %770 = vst.msk [vmem:[#allocation3 + $0x28] sm:$0xf] %vm199, %v738
      %771 = vst.msk [vmem:[#allocation3 + $0x2c] sm:$0xf] %vm199, %v739
      %772 = vst.msk [vmem:[#allocation3 + $0x30] sm:$0xf] %vm199, %v740
      %773 = vst.msk [vmem:[#allocation3 + $0x34] sm:$0xf] %vm199, %v741
      %774 = vst.msk [vmem:[#allocation3 + $0x38] sm:$0xf] %vm199, %v742
      %775 = vst.msk [vmem:[#allocation3 + $0x3c] sm:$0xf] %vm199, %v743
      %776 = vst.msk [vmem:[#allocation3 + $0x40] sm:$0xf] %vm199, %v744
      %777 = vst.msk [vmem:[#allocation3 + $0x44] sm:$0xf] %vm199, %v745
      %778 = vst.msk [vmem:[#allocation3 + $0x48] sm:$0xf] %vm199, %v746
      %779 = vst.msk [vmem:[#allocation3 + $0x4c] sm:$0xf] %vm199, %v747
      %780 = vst.msk [vmem:[#allocation3 + $0x50] sm:$0xf] %vm199, %v748
      %781 = vst.msk [vmem:[#allocation3 + $0x54] sm:$0xf] %vm199, %v749
      %782 = vst.msk [vmem:[#allocation3 + $0x58] sm:$0xf] %vm199, %v750
      %783 = vst.msk [vmem:[#allocation3 + $0x5c] sm:$0xf] %vm199, %v751
      %784 = vst.msk [vmem:[#allocation3 + $0x60] sm:$0xf] %vm199, %v752
      %785 = vst.msk [vmem:[#allocation3 + $0x64] sm:$0xf] %vm199, %v753
      %786 = vst.msk [vmem:[#allocation3 + $0x68] sm:$0xf] %vm199, %v754
      %787 = vst.msk [vmem:[#allocation3 + $0x6c] sm:$0xf] %vm199, %v755
      %788 = vst.msk [vmem:[#allocation3 + $0x70] sm:$0xf] %vm199, %v756
      %789 = vst.msk [vmem:[#allocation3 + $0x74] sm:$0xf] %vm199, %v757
      %790 = vst.msk [vmem:[#allocation3 + $0x78] sm:$0xf] %vm199, %v758
      %791 = vst.msk [vmem:[#allocation3 + $0x7c] sm:$0xf] %vm199, %v759
      %v792 = vld [vmem:[#allocation2] sm:$0xf]
      %v793 = vld [vmem:[#allocation2 + $0x4] sm:$0xf]
      %v794 = vld [vmem:[#allocation2 + $0x8] sm:$0x1]
      %v795 = vld [vmem:[#allocation2 + $0xc] sm:$0xf]
      %v796 = vld [vmem:[#allocation2 + $0x10] sm:$0xf]
      %v797 = vld [vmem:[#allocation2 + $0x14] sm:$0x1]
      %v798 = vld [vmem:[#allocation2 + $0x18] sm:$0xf]
      %v799 = vld [vmem:[#allocation2 + $0x1c] sm:$0xf]
      %v800 = vld [vmem:[#allocation2 + $0x20] sm:$0x1]
      %v801 = vld [vmem:[#allocation2 + $0x24] sm:$0xf]
      %v802 = vld [vmem:[#allocation2 + $0x28] sm:$0xf]
      %v803 = vld [vmem:[#allocation2 + $0x2c] sm:$0x1]
      %v804 = vld [vmem:[#allocation2 + $0x30] sm:$0xf]
      %v805 = vld [vmem:[#allocation2 + $0x34] sm:$0xf]
      %v806 = vld [vmem:[#allocation2 + $0x38] sm:$0x1]
      %v807 = vld [vmem:[#allocation2 + $0x3c] sm:$0xf]
      %v808 = vld [vmem:[#allocation2 + $0x40] sm:$0xf]
      %v809 = vld [vmem:[#allocation2 + $0x44] sm:$0x1]
      %v810 = vld [vmem:[#allocation2 + $0x48] sm:$0xf]
      %v811 = vld [vmem:[#allocation2 + $0x4c] sm:$0xf]
      %v812 = vld [vmem:[#allocation2 + $0x50] sm:$0x1]
      %v813 = vld [vmem:[#allocation2 + $0x54] sm:$0xf]
      %v814 = vld [vmem:[#allocation2 + $0x58] sm:$0xf]
      %v815 = vld [vmem:[#allocation2 + $0x5c] sm:$0x1]
      %v816 = vld [vmem:[#allocation2 + $0x60] sm:$0xf]
      %v817 = vld [vmem:[#allocation2 + $0x64] sm:$0xf]
      %v818 = vld [vmem:[#allocation2 + $0x68] sm:$0x1]
      %v819 = vld [vmem:[#allocation2 + $0x6c] sm:$0xf]
      %v820 = vld [vmem:[#allocation2 + $0x70] sm:$0xf]
      %v821 = vld [vmem:[#allocation2 + $0x74] sm:$0x1]
      %v822 = vld [vmem:[#allocation2 + $0x78] sm:$0xf]
      %v823 = vld [vmem:[#allocation2 + $0x7c] sm:$0xf]
      %v824 = vld [vmem:[#allocation2 + $0x80] sm:$0x1]
      %v825 = vld [vmem:[#allocation2 + $0x84] sm:$0xf]
      %v826 = vld [vmem:[#allocation2 + $0x88] sm:$0xf]
      %v827 = vld [vmem:[#allocation2 + $0x8c] sm:$0x1]
      %v828 = vld [vmem:[#allocation2 + $0x90] sm:$0xf]
      %v829 = vld [vmem:[#allocation2 + $0x94] sm:$0xf]
      %v830 = vld [vmem:[#allocation2 + $0x98] sm:$0x1]
      %v831 = vld [vmem:[#allocation2 + $0x9c] sm:$0xf]
      %v832 = vld [vmem:[#allocation2 + $0xa0] sm:$0xf]
      %v833 = vld [vmem:[#allocation2 + $0xa4] sm:$0x1]
      %v834 = vld [vmem:[#allocation2 + $0xa8] sm:$0xf]
      %v835 = vld [vmem:[#allocation2 + $0xac] sm:$0xf]
      %v836 = vld [vmem:[#allocation2 + $0xb0] sm:$0x1]
      %v837 = vld [vmem:[#allocation2 + $0xb4] sm:$0xf]
      %v838 = vld [vmem:[#allocation2 + $0xb8] sm:$0xf]
      %v839 = vld [vmem:[#allocation2 + $0xbc] sm:$0x1]
      %vm840 = vsmask.f32 3328
      %vm841 = vsmask.f32 7440
      %vm842 = vmor %vm840, %vm841
      %v844 = vshrl.u32 %v792, 16
      %v846 = vrot.slane %v844, 4
      %v847 = vshll.u32 %v792, 16
      %v849 = vrot.slane %v847, 5
      %v850 = vor.u32 %v846, %v849
      %v851 = vrot.slane %v850, 4
      %v853 = vshll.u32 %v793, 16
      %v855 = vrot.slane %v853, 5
      %v856 = vsel %vm842, %v851, %v855
      %v857 = vshrl.u32 %v793, 16
      %v859 = vrot.slane %v857, 4
      %v860 = vor.u32 %v859, %v855
      %v861 = vrot.slane %v860, 4
      %v863 = vshll.u32 %v794, 16
      %v865 = vrot.slane %v863, 5
      %v866 = vsel %vm842, %v861, %v865
      %v868 = vshrl.u32 %v795, 16
      %v870 = vrot.slane %v868, 4
      %v871 = vshll.u32 %v795, 16
      %v873 = vrot.slane %v871, 5
      %v874 = vor.u32 %v870, %v873
      %v875 = vrot.slane %v874, 4
      %v877 = vshll.u32 %v796, 16
      %v879 = vrot.slane %v877, 5
      %v880 = vsel %vm842, %v875, %v879
      %v881 = vshrl.u32 %v796, 16
      %v883 = vrot.slane %v881, 4
      %v884 = vor.u32 %v883, %v879
      %v885 = vrot.slane %v884, 4
      %v887 = vshll.u32 %v797, 16
      %v889 = vrot.slane %v887, 5
      %v890 = vsel %vm842, %v885, %v889
      %v892 = vshrl.u32 %v798, 16
      %v894 = vrot.slane %v892, 4
      %v895 = vshll.u32 %v798, 16
      %v897 = vrot.slane %v895, 5
      %v898 = vor.u32 %v894, %v897
      %v899 = vrot.slane %v898, 4
      %v901 = vshll.u32 %v799, 16
      %v903 = vrot.slane %v901, 5
      %v904 = vsel %vm842, %v899, %v903
      %v905 = vshrl.u32 %v799, 16
      %v907 = vrot.slane %v905, 4
      %v908 = vor.u32 %v907, %v903
      %v909 = vrot.slane %v908, 4
      %v911 = vshll.u32 %v800, 16
      %v913 = vrot.slane %v911, 5
      %v914 = vsel %vm842, %v909, %v913
      %v916 = vshrl.u32 %v801, 16
      %v918 = vrot.slane %v916, 4
      %v919 = vshll.u32 %v801, 16
      %v921 = vrot.slane %v919, 5
      %v922 = vor.u32 %v918, %v921
      %v923 = vrot.slane %v922, 4
      %v925 = vshll.u32 %v802, 16
      %v927 = vrot.slane %v925, 5
      %v928 = vsel %vm842, %v923, %v927
      %v929 = vshrl.u32 %v802, 16
      %v931 = vrot.slane %v929, 4
      %v932 = vor.u32 %v931, %v927
      %v933 = vrot.slane %v932, 4
      %v935 = vshll.u32 %v803, 16
      %v937 = vrot.slane %v935, 5
      %v938 = vsel %vm842, %v933, %v937
      %v940 = vshrl.u32 %v804, 16
      %v942 = vrot.slane %v940, 4
      %v943 = vshll.u32 %v804, 16
      %v945 = vrot.slane %v943, 5
      %v946 = vor.u32 %v942, %v945
      %v947 = vrot.slane %v946, 4
      %v949 = vshll.u32 %v805, 16
      %v951 = vrot.slane %v949, 5
      %v952 = vsel %vm842, %v947, %v951
      %v953 = vshrl.u32 %v805, 16
      %v955 = vrot.slane %v953, 4
      %v956 = vor.u32 %v955, %v951
      %v957 = vrot.slane %v956, 4
      %v959 = vshll.u32 %v806, 16
      %v961 = vrot.slane %v959, 5
      %v962 = vsel %vm842, %v957, %v961
      %v964 = vshrl.u32 %v807, 16
      %v966 = vrot.slane %v964, 4
      %v967 = vshll.u32 %v807, 16
      %v969 = vrot.slane %v967, 5
      %v970 = vor.u32 %v966, %v969
      %v971 = vrot.slane %v970, 4
      %v973 = vshll.u32 %v808, 16
      %v975 = vrot.slane %v973, 5
      %v976 = vsel %vm842, %v971, %v975
      %v977 = vshrl.u32 %v808, 16
      %v979 = vrot.slane %v977, 4
      %v980 = vor.u32 %v979, %v975
      %v981 = vrot.slane %v980, 4
      %v983 = vshll.u32 %v809, 16
      %v985 = vrot.slane %v983, 5
      %v986 = vsel %vm842, %v981, %v985
      %v988 = vshrl.u32 %v810, 16
      %v990 = vrot.slane %v988, 4
      %v991 = vshll.u32 %v810, 16
      %v993 = vrot.slane %v991, 5
      %v994 = vor.u32 %v990, %v993
      %v995 = vrot.slane %v994, 4
      %v997 = vshll.u32 %v811, 16
      %v999 = vrot.slane %v997, 5
      %v1000 = vsel %vm842, %v995, %v999
      %v1001 = vshrl.u32 %v811, 16
      %v1003 = vrot.slane %v1001, 4
      %v1004 = vor.u32 %v1003, %v999
      %v1005 = vrot.slane %v1004, 4
      %v1007 = vshll.u32 %v812, 16
      %v1009 = vrot.slane %v1007, 5
      %v1010 = vsel %vm842, %v1005, %v1009
      %v1012 = vshrl.u32 %v813, 16
      %v1014 = vrot.slane %v1012, 4
      %v1015 = vshll.u32 %v813, 16
      %v1017 = vrot.slane %v1015, 5
      %v1018 = vor.u32 %v1014, %v1017
      %v1019 = vrot.slane %v1018, 4
      %v1021 = vshll.u32 %v814, 16
      %v1023 = vrot.slane %v1021, 5
      %v1024 = vsel %vm842, %v1019, %v1023
      %v1025 = vshrl.u32 %v814, 16
      %v1027 = vrot.slane %v1025, 4
      %v1028 = vor.u32 %v1027, %v1023
      %v1029 = vrot.slane %v1028, 4
      %v1031 = vshll.u32 %v815, 16
      %v1033 = vrot.slane %v1031, 5
      %v1034 = vsel %vm842, %v1029, %v1033
      %v1036 = vshrl.u32 %v816, 16
      %v1038 = vrot.slane %v1036, 4
      %v1039 = vshll.u32 %v816, 16
      %v1041 = vrot.slane %v1039, 5
      %v1042 = vor.u32 %v1038, %v1041
      %v1043 = vrot.slane %v1042, 4
      %v1045 = vshll.u32 %v817, 16
      %v1047 = vrot.slane %v1045, 5
      %v1048 = vsel %vm842, %v1043, %v1047
      %v1049 = vshrl.u32 %v817, 16
      %v1051 = vrot.slane %v1049, 4
      %v1052 = vor.u32 %v1051, %v1047
      %v1053 = vrot.slane %v1052, 4
      %v1055 = vshll.u32 %v818, 16
      %v1057 = vrot.slane %v1055, 5
      %v1058 = vsel %vm842, %v1053, %v1057
      %v1060 = vshrl.u32 %v819, 16
      %v1062 = vrot.slane %v1060, 4
      %v1063 = vshll.u32 %v819, 16
      %v1065 = vrot.slane %v1063, 5
      %v1066 = vor.u32 %v1062, %v1065
      %v1067 = vrot.slane %v1066, 4
      %v1069 = vshll.u32 %v820, 16
      %v1071 = vrot.slane %v1069, 5
      %v1072 = vsel %vm842, %v1067, %v1071
      %v1073 = vshrl.u32 %v820, 16
      %v1075 = vrot.slane %v1073, 4
      %v1076 = vor.u32 %v1075, %v1071
      %v1077 = vrot.slane %v1076, 4
      %v1079 = vshll.u32 %v821, 16
      %v1081 = vrot.slane %v1079, 5
      %v1082 = vsel %vm842, %v1077, %v1081
      %v1084 = vshrl.u32 %v822, 16
      %v1086 = vrot.slane %v1084, 4
      %v1087 = vshll.u32 %v822, 16
      %v1089 = vrot.slane %v1087, 5
      %v1090 = vor.u32 %v1086, %v1089
      %v1091 = vrot.slane %v1090, 4
      %v1093 = vshll.u32 %v823, 16
      %v1095 = vrot.slane %v1093, 5
      %v1096 = vsel %vm842, %v1091, %v1095
      %v1097 = vshrl.u32 %v823, 16
      %v1099 = vrot.slane %v1097, 4
      %v1100 = vor.u32 %v1099, %v1095
      %v1101 = vrot.slane %v1100, 4
      %v1103 = vshll.u32 %v824, 16
      %v1105 = vrot.slane %v1103, 5
      %v1106 = vsel %vm842, %v1101, %v1105
      %v1108 = vshrl.u32 %v825, 16
      %v1110 = vrot.slane %v1108, 4
      %v1111 = vshll.u32 %v825, 16
      %v1113 = vrot.slane %v1111, 5
      %v1114 = vor.u32 %v1110, %v1113
      %v1115 = vrot.slane %v1114, 4
      %v1117 = vshll.u32 %v826, 16
      %v1119 = vrot.slane %v1117, 5
      %v1120 = vsel %vm842, %v1115, %v1119
      %v1121 = vshrl.u32 %v826, 16
      %v1123 = vrot.slane %v1121, 4
      %v1124 = vor.u32 %v1123, %v1119
      %v1125 = vrot.slane %v1124, 4
      %v1127 = vshll.u32 %v827, 16
      %v1129 = vrot.slane %v1127, 5
      %v1130 = vsel %vm842, %v1125, %v1129
      %v1132 = vshrl.u32 %v828, 16
      %v1134 = vrot.slane %v1132, 4
      %v1135 = vshll.u32 %v828, 16
      %v1137 = vrot.slane %v1135, 5
      %v1138 = vor.u32 %v1134, %v1137
      %v1139 = vrot.slane %v1138, 4
      %v1141 = vshll.u32 %v829, 16
      %v1143 = vrot.slane %v1141, 5
      %v1144 = vsel %vm842, %v1139, %v1143
      %v1145 = vshrl.u32 %v829, 16
      %v1147 = vrot.slane %v1145, 4
      %v1148 = vor.u32 %v1147, %v1143
      %v1149 = vrot.slane %v1148, 4
      %v1151 = vshll.u32 %v830, 16
      %v1153 = vrot.slane %v1151, 5
      %v1154 = vsel %vm842, %v1149, %v1153
      %v1156 = vshrl.u32 %v831, 16
      %v1158 = vrot.slane %v1156, 4
      %v1159 = vshll.u32 %v831, 16
      %v1161 = vrot.slane %v1159, 5
      %v1162 = vor.u32 %v1158, %v1161
      %v1163 = vrot.slane %v1162, 4
      %v1165 = vshll.u32 %v832, 16
      %v1167 = vrot.slane %v1165, 5
      %v1168 = vsel %vm842, %v1163, %v1167
      %v1169 = vshrl.u32 %v832, 16
      %v1171 = vrot.slane %v1169, 4
      %v1172 = vor.u32 %v1171, %v1167
      %v1173 = vrot.slane %v1172, 4
      %v1175 = vshll.u32 %v833, 16
      %v1177 = vrot.slane %v1175, 5
      %v1178 = vsel %vm842, %v1173, %v1177
      %v1180 = vshrl.u32 %v834, 16
      %v1182 = vrot.slane %v1180, 4
      %v1183 = vshll.u32 %v834, 16
      %v1185 = vrot.slane %v1183, 5
      %v1186 = vor.u32 %v1182, %v1185
      %v1187 = vrot.slane %v1186, 4
      %v1189 = vshll.u32 %v835, 16
      %v1191 = vrot.slane %v1189, 5
      %v1192 = vsel %vm842, %v1187, %v1191
      %v1193 = vshrl.u32 %v835, 16
      %v1195 = vrot.slane %v1193, 4
      %v1196 = vor.u32 %v1195, %v1191
      %v1197 = vrot.slane %v1196, 4
      %v1199 = vshll.u32 %v836, 16
      %v1201 = vrot.slane %v1199, 5
      %v1202 = vsel %vm842, %v1197, %v1201
      %v1204 = vshrl.u32 %v837, 16
      %v1206 = vrot.slane %v1204, 4
      %v1207 = vshll.u32 %v837, 16
      %v1209 = vrot.slane %v1207, 5
      %v1210 = vor.u32 %v1206, %v1209
      %v1211 = vrot.slane %v1210, 4
      %v1213 = vshll.u32 %v838, 16
      %v1215 = vrot.slane %v1213, 5
      %v1216 = vsel %vm842, %v1211, %v1215
      %v1217 = vshrl.u32 %v838, 16
      %v1219 = vrot.slane %v1217, 4
      %v1220 = vor.u32 %v1219, %v1215
      %v1221 = vrot.slane %v1220, 4
      %v1223 = vshll.u32 %v839, 16
      %v1225 = vrot.slane %v1223, 5
      %v1226 = vsel %vm842, %v1221, %v1225
      %1227 = vrot.lane.b32.xlu0 %v856, 3
      %v1228 = vpop.permute.xlu0 %1227
      %1229 = vrot.lane.b32.xlu0 %v866, 3
      %v1230 = vpop.permute.xlu0 %1229
      %1231 = vrot.lane.b32.xlu0 %v880, 3
      %v1232 = vpop.permute.xlu0 %1231
      %1233 = vrot.lane.b32.xlu0 %v890, 3
      %v1234 = vpop.permute.xlu0 %1233
      %1235 = vrot.lane.b32.xlu0 %v904, 3
      %v1236 = vpop.permute.xlu0 %1235
      %1237 = vrot.lane.b32.xlu0 %v914, 3
      %v1238 = vpop.permute.xlu0 %1237
      %1239 = vrot.lane.b32.xlu0 %v928, 3
      %v1240 = vpop.permute.xlu0 %1239
      %1241 = vrot.lane.b32.xlu0 %v938, 3
      %v1242 = vpop.permute.xlu0 %1241
      %1243 = vrot.lane.b32.xlu0 %v952, 3
      %v1244 = vpop.permute.xlu0 %1243
      %1245 = vrot.lane.b32.xlu0 %v962, 3
      %v1246 = vpop.permute.xlu0 %1245
      %1247 = vrot.lane.b32.xlu0 %v976, 3
      %v1248 = vpop.permute.xlu0 %1247
      %1249 = vrot.lane.b32.xlu0 %v986, 3
      %v1250 = vpop.permute.xlu0 %1249
      %1251 = vrot.lane.b32.xlu0 %v1000, 3
      %v1252 = vpop.permute.xlu0 %1251
      %1253 = vrot.lane.b32.xlu0 %v1010, 3
      %v1254 = vpop.permute.xlu0 %1253
      %1255 = vrot.lane.b32.xlu0 %v1024, 3
      %v1256 = vpop.permute.xlu0 %1255
      %1257 = vrot.lane.b32.xlu0 %v1034, 3
      %v1258 = vpop.permute.xlu0 %1257
      %1259 = vrot.lane.b32.xlu0 %v1048, 3
      %v1260 = vpop.permute.xlu0 %1259
      %1261 = vrot.lane.b32.xlu0 %v1058, 3
      %v1262 = vpop.permute.xlu0 %1261
      %1263 = vrot.lane.b32.xlu0 %v1072, 3
      %v1264 = vpop.permute.xlu0 %1263
      %1265 = vrot.lane.b32.xlu0 %v1082, 3
      %v1266 = vpop.permute.xlu0 %1265
      %1267 = vrot.lane.b32.xlu0 %v1096, 3
      %v1268 = vpop.permute.xlu0 %1267
      %1269 = vrot.lane.b32.xlu0 %v1106, 3
      %v1270 = vpop.permute.xlu0 %1269
      %1271 = vrot.lane.b32.xlu0 %v1120, 3
      %v1272 = vpop.permute.xlu0 %1271
      %1273 = vrot.lane.b32.xlu0 %v1130, 3
      %v1274 = vpop.permute.xlu0 %1273
      %1275 = vrot.lane.b32.xlu0 %v1144, 3
      %v1276 = vpop.permute.xlu0 %1275
      %1277 = vrot.lane.b32.xlu0 %v1154, 3
      %v1278 = vpop.permute.xlu0 %1277
      %1279 = vrot.lane.b32.xlu0 %v1168, 3
      %v1280 = vpop.permute.xlu0 %1279
      %1281 = vrot.lane.b32.xlu0 %v1178, 3
      %v1282 = vpop.permute.xlu0 %1281
      %1283 = vrot.lane.b32.xlu0 %v1192, 3
      %v1284 = vpop.permute.xlu0 %1283
      %1285 = vrot.lane.b32.xlu0 %v1202, 3
      %v1286 = vpop.permute.xlu0 %1285
      %1287 = vrot.lane.b32.xlu0 %v1216, 3
      %v1288 = vpop.permute.xlu0 %1287
      %1289 = vrot.lane.b32.xlu0 %v1226, 3
      %v1290 = vpop.permute.xlu0 %1289
      %vm1323 = vcmask 44056
      %1324 = vst.msk [vmem:[#allocation3] sm:$0xf] %vm1323, %v1228
      %1325 = vst.msk [vmem:[#allocation3 + $0x4] sm:$0xf] %vm1323, %v1230
      %1326 = vst.msk [vmem:[#allocation3 + $0x8] sm:$0xf] %vm1323, %v1232
      %1327 = vst.msk [vmem:[#allocation3 + $0xc] sm:$0xf] %vm1323, %v1234
      %1328 = vst.msk [vmem:[#allocation3 + $0x10] sm:$0xf] %vm1323, %v1236
      %1329 = vst.msk [vmem:[#allocation3 + $0x14] sm:$0xf] %vm1323, %v1238
      %1330 = vst.msk [vmem:[#allocation3 + $0x18] sm:$0xf] %vm1323, %v1240
      %1331 = vst.msk [vmem:[#allocation3 + $0x1c] sm:$0xf] %vm1323, %v1242
      %1332 = vst.msk [vmem:[#allocation3 + $0x20] sm:$0xf] %vm1323, %v1244
      %1333 = vst.msk [vmem:[#allocation3 + $0x24] sm:$0xf] %vm1323, %v1246
      %1334 = vst.msk [vmem:[#allocation3 + $0x28] sm:$0xf] %vm1323, %v1248
      %1335 = vst.msk [vmem:[#allocation3 + $0x2c] sm:$0xf] %vm1323, %v1250
      %1336 = vst.msk [vmem:[#allocation3 + $0x30] sm:$0xf] %vm1323, %v1252
      %1337 = vst.msk [vmem:[#allocation3 + $0x34] sm:$0xf] %vm1323, %v1254
      %1338 = vst.msk [vmem:[#allocation3 + $0x38] sm:$0xf] %vm1323, %v1256
      %1339 = vst.msk [vmem:[#allocation3 + $0x3c] sm:$0xf] %vm1323, %v1258
      %1340 = vst.msk [vmem:[#allocation3 + $0x40] sm:$0xf] %vm1323, %v1260
      %1341 = vst.msk [vmem:[#allocation3 + $0x44] sm:$0xf] %vm1323, %v1262
      %1342 = vst.msk [vmem:[#allocation3 + $0x48] sm:$0xf] %vm1323, %v1264
      %1343 = vst.msk [vmem:[#allocation3 + $0x4c] sm:$0xf] %vm1323, %v1266
      %1344 = vst.msk [vmem:[#allocation3 + $0x50] sm:$0xf] %vm1323, %v1268
      %1345 = vst.msk [vmem:[#allocation3 + $0x54] sm:$0xf] %vm1323, %v1270
      %1346 = vst.msk [vmem:[#allocation3 + $0x58] sm:$0xf] %vm1323, %v1272
      %1347 = vst.msk [vmem:[#allocation3 + $0x5c] sm:$0xf] %vm1323, %v1274
      %1348 = vst.msk [vmem:[#allocation3 + $0x60] sm:$0xf] %vm1323, %v1276
      %1349 = vst.msk [vmem:[#allocation3 + $0x64] sm:$0xf] %vm1323, %v1278
      %1350 = vst.msk [vmem:[#allocation3 + $0x68] sm:$0xf] %vm1323, %v1280
      %1351 = vst.msk [vmem:[#allocation3 + $0x6c] sm:$0xf] %vm1323, %v1282
      %1352 = vst.msk [vmem:[#allocation3 + $0x70] sm:$0xf] %vm1323, %v1284
      %1353 = vst.msk [vmem:[#allocation3 + $0x74] sm:$0xf] %vm1323, %v1286
      %1354 = vst.msk [vmem:[#allocation3 + $0x78] sm:$0xf] %vm1323, %v1288
      %1355 = vst.msk [vmem:[#allocation3 + $0x7c] sm:$0xf] %vm1323, %v1290
      %v1356 = vld [vmem:[#allocation2] sm:$0xe]
      %v1357 = vld [vmem:[#allocation2 + $0x4] sm:$0xf]
      %v1358 = vld [vmem:[#allocation2 + $0x8] sm:$0x1]
      %v1359 = vld [vmem:[#allocation2 + $0xc] sm:$0xe]
      %v1360 = vld [vmem:[#allocation2 + $0x10] sm:$0xf]
      %v1361 = vld [vmem:[#allocation2 + $0x14] sm:$0x1]
      %v1362 = vld [vmem:[#allocation2 + $0x18] sm:$0xe]
      %v1363 = vld [vmem:[#allocation2 + $0x1c] sm:$0xf]
      %v1364 = vld [vmem:[#allocation2 + $0x20] sm:$0x1]
      %v1365 = vld [vmem:[#allocation2 + $0x24] sm:$0xe]
      %v1366 = vld [vmem:[#allocation2 + $0x28] sm:$0xf]
      %v1367 = vld [vmem:[#allocation2 + $0x2c] sm:$0x1]
      %v1368 = vld [vmem:[#allocation2 + $0x30] sm:$0xe]
      %v1369 = vld [vmem:[#allocation2 + $0x34] sm:$0xf]
      %v1370 = vld [vmem:[#allocation2 + $0x38] sm:$0x1]
      %v1371 = vld [vmem:[#allocation2 + $0x3c] sm:$0xe]
      %v1372 = vld [vmem:[#allocation2 + $0x40] sm:$0xf]
      %v1373 = vld [vmem:[#allocation2 + $0x44] sm:$0x1]
      %v1374 = vld [vmem:[#allocation2 + $0x48] sm:$0xe]
      %v1375 = vld [vmem:[#allocation2 + $0x4c] sm:$0xf]
      %v1376 = vld [vmem:[#allocation2 + $0x50] sm:$0x1]
      %v1377 = vld [vmem:[#allocation2 + $0x54] sm:$0xe]
      %v1378 = vld [vmem:[#allocation2 + $0x58] sm:$0xf]
      %v1379 = vld [vmem:[#allocation2 + $0x5c] sm:$0x1]
      %v1380 = vld [vmem:[#allocation2 + $0x60] sm:$0xe]
      %v1381 = vld [vmem:[#allocation2 + $0x64] sm:$0xf]
      %v1382 = vld [vmem:[#allocation2 + $0x68] sm:$0x1]
      %v1383 = vld [vmem:[#allocation2 + $0x6c] sm:$0xe]
      %v1384 = vld [vmem:[#allocation2 + $0x70] sm:$0xf]
      %v1385 = vld [vmem:[#allocation2 + $0x74] sm:$0x1]
      %v1386 = vld [vmem:[#allocation2 + $0x78] sm:$0xe]
      %v1387 = vld [vmem:[#allocation2 + $0x7c] sm:$0xf]
      %v1388 = vld [vmem:[#allocation2 + $0x80] sm:$0x1]
      %v1389 = vld [vmem:[#allocation2 + $0x84] sm:$0xe]
      %v1390 = vld [vmem:[#allocation2 + $0x88] sm:$0xf]
      %v1391 = vld [vmem:[#allocation2 + $0x8c] sm:$0x1]
      %v1392 = vld [vmem:[#allocation2 + $0x90] sm:$0xe]
      %v1393 = vld [vmem:[#allocation2 + $0x94] sm:$0xf]
      %v1394 = vld [vmem:[#allocation2 + $0x98] sm:$0x1]
      %v1395 = vld [vmem:[#allocation2 + $0x9c] sm:$0xe]
      %v1396 = vld [vmem:[#allocation2 + $0xa0] sm:$0xf]
      %v1397 = vld [vmem:[#allocation2 + $0xa4] sm:$0x1]
      %v1398 = vld [vmem:[#allocation2 + $0xa8] sm:$0xe]
      %v1399 = vld [vmem:[#allocation2 + $0xac] sm:$0xf]
      %v1400 = vld [vmem:[#allocation2 + $0xb0] sm:$0x1]
      %v1401 = vld [vmem:[#allocation2 + $0xb4] sm:$0xe]
      %v1402 = vld [vmem:[#allocation2 + $0xb8] sm:$0xf]
      %v1403 = vld [vmem:[#allocation2 + $0xbc] sm:$0x1]
      %vm1452 = vcmask 1042432
      %vm1453 = vcmask 1046532
      %vm1454 = vmor %vm1452, %vm1453
      %v1455 = vrot.slane %v1356, 5
      %v1456 = vrot.slane %v1455, 4
      %v1457 = vrot.slane %v1357, 5
      %v1458 = vsel %vm1454, %v1456, %v1457
      %v1459 = vrot.slane %v1457, 4
      %v1460 = vrot.slane %v1358, 5
      %v1461 = vsel %vm1454, %v1459, %v1460
      %v1462 = vrot.slane %v1359, 5
      %v1463 = vrot.slane %v1462, 4
      %v1464 = vrot.slane %v1360, 5
      %v1465 = vsel %vm1454, %v1463, %v1464
      %v1466 = vrot.slane %v1464, 4
      %v1467 = vrot.slane %v1361, 5
      %v1468 = vsel %vm1454, %v1466, %v1467
      %v1469 = vrot.slane %v1362, 5
      %v1470 = vrot.slane %v1469, 4
      %v1471 = vrot.slane %v1363, 5
      %v1472 = vsel %vm1454, %v1470, %v1471
      %v1473 = vrot.slane %v1471, 4
      %v1474 = vrot.slane %v1364, 5
      %v1475 = vsel %vm1454, %v1473, %v1474
      %v1476 = vrot.slane %v1365, 5
      %v1477 = vrot.slane %v1476, 4
      %v1478 = vrot.slane %v1366, 5
      %v1479 = vsel %vm1454, %v1477, %v1478
      %v1480 = vrot.slane %v1478, 4
      %v1481 = vrot.slane %v1367, 5
      %v1482 = vsel %vm1454, %v1480, %v1481
      %v1483 = vrot.slane %v1368, 5
      %v1484 = vrot.slane %v1483, 4
      %v1485 = vrot.slane %v1369, 5
      %v1486 = vsel %vm1454, %v1484, %v1485
      %v1487 = vrot.slane %v1485, 4
      %v1488 = vrot.slane %v1370, 5
      %v1489 = vsel %vm1454, %v1487, %v1488
      %v1490 = vrot.slane %v1371, 5
      %v1491 = vrot.slane %v1490, 4
      %v1492 = vrot.slane %v1372, 5
      %v1493 = vsel %vm1454, %v1491, %v1492
      %v1494 = vrot.slane %v1492, 4
      %v1495 = vrot.slane %v1373, 5
      %v1496 = vsel %vm1454, %v1494, %v1495
      %v1497 = vrot.slane %v1374, 5
      %v1498 = vrot.slane %v1497, 4
      %v1499 = vrot.slane %v1375, 5
      %v1500 = vsel %vm1454, %v1498, %v1499
      %v1501 = vrot.slane %v1499, 4
      %v1502 = vrot.slane %v1376, 5
      %v1503 = vsel %vm1454, %v1501, %v1502
      %v1504 = vrot.slane %v1377, 5
      %v1505 = vrot.slane %v1504, 4
      %v1506 = vrot.slane %v1378, 5
      %v1507 = vsel %vm1454, %v1505, %v1506
      %v1508 = vrot.slane %v1506, 4
      %v1509 = vrot.slane %v1379, 5
      %v1510 = vsel %vm1454, %v1508, %v1509
      %v1511 = vrot.slane %v1380, 5
      %v1512 = vrot.slane %v1511, 4
      %v1513 = vrot.slane %v1381, 5
      %v1514 = vsel %vm1454, %v1512, %v1513
      %v1515 = vrot.slane %v1513, 4
      %v1516 = vrot.slane %v1382, 5
      %v1517 = vsel %vm1454, %v1515, %v1516
      %v1518 = vrot.slane %v1383, 5
      %v1519 = vrot.slane %v1518, 4
      %v1520 = vrot.slane %v1384, 5
      %v1521 = vsel %vm1454, %v1519, %v1520
      %v1522 = vrot.slane %v1520, 4
      %v1523 = vrot.slane %v1385, 5
      %v1524 = vsel %vm1454, %v1522, %v1523
      %v1525 = vrot.slane %v1386, 5
      %v1526 = vrot.slane %v1525, 4
      %v1527 = vrot.slane %v1387, 5
      %v1528 = vsel %vm1454, %v1526, %v1527
      %v1529 = vrot.slane %v1527, 4
      %v1530 = vrot.slane %v1388, 5
      %v1531 = vsel %vm1454, %v1529, %v1530
      %v1532 = vrot.slane %v1389, 5
      %v1533 = vrot.slane %v1532, 4
      %v1534 = vrot.slane %v1390, 5
      %v1535 = vsel %vm1454, %v1533, %v1534
      %v1536 = vrot.slane %v1534, 4
      %v1537 = vrot.slane %v1391, 5
      %v1538 = vsel %vm1454, %v1536, %v1537
      %v1539 = vrot.slane %v1392, 5
      %v1540 = vrot.slane %v1539, 4
      %v1541 = vrot.slane %v1393, 5
      %v1542 = vsel %vm1454, %v1540, %v1541
      %v1543 = vrot.slane %v1541, 4
      %v1544 = vrot.slane %v1394, 5
      %v1545 = vsel %vm1454, %v1543, %v1544
      %v1546 = vrot.slane %v1395, 5
      %v1547 = vrot.slane %v1546, 4
      %v1548 = vrot.slane %v1396, 5
      %v1549 = vsel %vm1454, %v1547, %v1548
      %v1550 = vrot.slane %v1548, 4
      %v1551 = vrot.slane %v1397, 5
      %v1552 = vsel %vm1454, %v1550, %v1551
      %v1553 = vrot.slane %v1398, 5
      %v1554 = vrot.slane %v1553, 4
      %v1555 = vrot.slane %v1399, 5
      %v1556 = vsel %vm1454, %v1554, %v1555
      %v1557 = vrot.slane %v1555, 4
      %v1558 = vrot.slane %v1400, 5
      %v1559 = vsel %vm1454, %v1557, %v1558
      %v1560 = vrot.slane %v1401, 5
      %v1561 = vrot.slane %v1560, 4
      %v1562 = vrot.slane %v1402, 5
      %v1563 = vsel %vm1454, %v1561, %v1562
      %v1564 = vrot.slane %v1562, 4
      %v1565 = vrot.slane %v1403, 5
      %v1566 = vsel %vm1454, %v1564, %v1565
      %1567 = vrot.lane.b32.xlu0 %v1458, 6
      %v1568 = vpop.permute.xlu0 %1567
      %1569 = vrot.lane.b32.xlu0 %v1461, 6
      %v1570 = vpop.permute.xlu0 %1569
      %1571 = vrot.lane.b32.xlu0 %v1465, 6
      %v1572 = vpop.permute.xlu0 %1571
      %1573 = vrot.lane.b32.xlu0 %v1468, 6
      %v1574 = vpop.permute.xlu0 %1573
      %1575 = vrot.lane.b32.xlu0 %v1472, 6
      %v1576 = vpop.permute.xlu0 %1575
      %1577 = vrot.lane.b32.xlu0 %v1475, 6
      %v1578 = vpop.permute.xlu0 %1577
      %1579 = vrot.lane.b32.xlu0 %v1479, 6
      %v1580 = vpop.permute.xlu0 %1579
      %1581 = vrot.lane.b32.xlu0 %v1482, 6
      %v1582 = vpop.permute.xlu0 %1581
      %1583 = vrot.lane.b32.xlu0 %v1486, 6
      %v1584 = vpop.permute.xlu0 %1583
      %1585 = vrot.lane.b32.xlu0 %v1489, 6
      %v1586 = vpop.permute.xlu0 %1585
      %1587 = vrot.lane.b32.xlu0 %v1493, 6
      %v1588 = vpop.permute.xlu0 %1587
      %1589 = vrot.lane.b32.xlu0 %v1496, 6
      %v1590 = vpop.permute.xlu0 %1589
      %1591 = vrot.lane.b32.xlu0 %v1500, 6
      %v1592 = vpop.permute.xlu0 %1591
      %1593 = vrot.lane.b32.xlu0 %v1503, 6
      %v1594 = vpop.permute.xlu0 %1593
      %1595 = vrot.lane.b32.xlu0 %v1507, 6
      %v1596 = vpop.permute.xlu0 %1595
      %1597 = vrot.lane.b32.xlu0 %v1510, 6
      %v1598 = vpop.permute.xlu0 %1597
      %1599 = vrot.lane.b32.xlu0 %v1514, 6
      %v1600 = vpop.permute.xlu0 %1599
      %1601 = vrot.lane.b32.xlu0 %v1517, 6
      %v1602 = vpop.permute.xlu0 %1601
      %1603 = vrot.lane.b32.xlu0 %v1521, 6
      %v1604 = vpop.permute.xlu0 %1603
      %1605 = vrot.lane.b32.xlu0 %v1524, 6
      %v1606 = vpop.permute.xlu0 %1605
      %1607 = vrot.lane.b32.xlu0 %v1528, 6
      %v1608 = vpop.permute.xlu0 %1607
      %1609 = vrot.lane.b32.xlu0 %v1531, 6
      %v1610 = vpop.permute.xlu0 %1609
      %1611 = vrot.lane.b32.xlu0 %v1535, 6
      %v1612 = vpop.permute.xlu0 %1611
      %1613 = vrot.lane.b32.xlu0 %v1538, 6
      %v1614 = vpop.permute.xlu0 %1613
      %1615 = vrot.lane.b32.xlu0 %v1542, 6
      %v1616 = vpop.permute.xlu0 %1615
      %1617 = vrot.lane.b32.xlu0 %v1545, 6
      %v1618 = vpop.permute.xlu0 %1617
      %1619 = vrot.lane.b32.xlu0 %v1549, 6
      %v1620 = vpop.permute.xlu0 %1619
      %1621 = vrot.lane.b32.xlu0 %v1552, 6
      %v1622 = vpop.permute.xlu0 %1621
      %1623 = vrot.lane.b32.xlu0 %v1556, 6
      %v1624 = vpop.permute.xlu0 %1623
      %1625 = vrot.lane.b32.xlu0 %v1559, 6
      %v1626 = vpop.permute.xlu0 %1625
      %1627 = vrot.lane.b32.xlu0 %v1563, 6
      %v1628 = vpop.permute.xlu0 %1627
      %1629 = vrot.lane.b32.xlu0 %v1566, 6
      %v1630 = vpop.permute.xlu0 %1629
      %vm1663 = vcmask 68656
      %1664 = vst.msk [vmem:[#allocation3] sm:$0xf] %vm1663, %v1568
      %1665 = vst.msk [vmem:[#allocation3 + $0x4] sm:$0xf] %vm1663, %v1570
      %1666 = vst.msk [vmem:[#allocation3 + $0x8] sm:$0xf] %vm1663, %v1572
      %1667 = vst.msk [vmem:[#allocation3 + $0xc] sm:$0xf] %vm1663, %v1574
      %1668 = vst.msk [vmem:[#allocation3 + $0x10] sm:$0xf] %vm1663, %v1576
      %1669 = vst.msk [vmem:[#allocation3 + $0x14] sm:$0xf] %vm1663, %v1578
      %1670 = vst.msk [vmem:[#allocation3 + $0x18] sm:$0xf] %vm1663, %v1580
      %1671 = vst.msk [vmem:[#allocation3 + $0x1c] sm:$0xf] %vm1663, %v1582
      %1672 = vst.msk [vmem:[#allocation3 + $0x20] sm:$0xf] %vm1663, %v1584
      %1673 = vst.msk [vmem:[#allocation3 + $0x24] sm:$0xf] %vm1663, %v1586
      %1674 = vst.msk [vmem:[#allocation3 + $0x28] sm:$0xf] %vm1663, %v1588
      %1675 = vst.msk [vmem:[#allocation3 + $0x2c] sm:$0xf] %vm1663, %v1590
      %1676 = vst.msk [vmem:[#allocation3 + $0x30] sm:$0xf] %vm1663, %v1592
      %1677 = vst.msk [vmem:[#allocation3 + $0x34] sm:$0xf] %vm1663, %v1594
      %1678 = vst.msk [vmem:[#allocation3 + $0x38] sm:$0xf] %vm1663, %v1596
      %1679 = vst.msk [vmem:[#allocation3 + $0x3c] sm:$0xf] %vm1663, %v1598
      %1680 = vst.msk [vmem:[#allocation3 + $0x40] sm:$0xf] %vm1663, %v1600
      %1681 = vst.msk [vmem:[#allocation3 + $0x44] sm:$0xf] %vm1663, %v1602
      %1682 = vst.msk [vmem:[#allocation3 + $0x48] sm:$0xf] %vm1663, %v1604
      %1683 = vst.msk [vmem:[#allocation3 + $0x4c] sm:$0xf] %vm1663, %v1606
      %1684 = vst.msk [vmem:[#allocation3 + $0x50] sm:$0xf] %vm1663, %v1608
      %1685 = vst.msk [vmem:[#allocation3 + $0x54] sm:$0xf] %vm1663, %v1610
      %1686 = vst.msk [vmem:[#allocation3 + $0x58] sm:$0xf] %vm1663, %v1612
      %1687 = vst.msk [vmem:[#allocation3 + $0x5c] sm:$0xf] %vm1663, %v1614
      %1688 = vst.msk [vmem:[#allocation3 + $0x60] sm:$0xf] %vm1663, %v1616
      %1689 = vst.msk [vmem:[#allocation3 + $0x64] sm:$0xf] %vm1663, %v1618
      %1690 = vst.msk [vmem:[#allocation3 + $0x68] sm:$0xf] %vm1663, %v1620
      %1691 = vst.msk [vmem:[#allocation3 + $0x6c] sm:$0xf] %vm1663, %v1622
      %1692 = vst.msk [vmem:[#allocation3 + $0x70] sm:$0xf] %vm1663, %v1624
      %1693 = vst.msk [vmem:[#allocation3 + $0x74] sm:$0xf] %vm1663, %v1626
      %1694 = vst.msk [vmem:[#allocation3 + $0x78] sm:$0xf] %vm1663, %v1628
      %1695 = vst.msk [vmem:[#allocation3 + $0x7c] sm:$0xf] %vm1663, %v1630
      %v1696 = vld [vmem:[%s610] sm:$0xf]
      %v1697 = vld [vmem:[%s610 + $0x4] sm:$0xf]
      %v1698 = vld [vmem:[%s610 + $0xc] sm:$0xf]
      %v1699 = vld [vmem:[%s610 + $0x10] sm:$0xf]
      %v1700 = vld [vmem:[%s610 + $0x18] sm:$0xf]
      %v1701 = vld [vmem:[%s610 + $0x1c] sm:$0xf]
      %v1702 = vld [vmem:[%s610 + $0x24] sm:$0xf]
      %v1703 = vld [vmem:[%s610 + $0x28] sm:$0xf]
      %v1704 = vld [vmem:[%s610 + $0x30] sm:$0xf]
      %v1705 = vld [vmem:[%s610 + $0x34] sm:$0xf]
      %v1706 = vld [vmem:[%s610 + $0x3c] sm:$0xf]
      %v1707 = vld [vmem:[%s610 + $0x40] sm:$0xf]
      %v1708 = vld [vmem:[%s610 + $0x48] sm:$0xf]
      %v1709 = vld [vmem:[%s610 + $0x4c] sm:$0xf]
      %v1710 = vld [vmem:[%s610 + $0x54] sm:$0xf]
      %v1711 = vld [vmem:[%s610 + $0x58] sm:$0xf]
      %v1712 = vld [vmem:[%s610 + $0x60] sm:$0xf]
      %v1713 = vld [vmem:[%s610 + $0x64] sm:$0xf]
      %v1714 = vld [vmem:[%s610 + $0x6c] sm:$0xf]
      %v1715 = vld [vmem:[%s610 + $0x70] sm:$0xf]
      %v1716 = vld [vmem:[%s610 + $0x78] sm:$0xf]
      %v1717 = vld [vmem:[%s610 + $0x7c] sm:$0xf]
      %v1718 = vld [vmem:[%s610 + $0x84] sm:$0xf]
      %v1719 = vld [vmem:[%s610 + $0x88] sm:$0xf]
      %v1720 = vld [vmem:[%s610 + $0x90] sm:$0xf]
      %v1721 = vld [vmem:[%s610 + $0x94] sm:$0xf]
      %v1722 = vld [vmem:[%s610 + $0x9c] sm:$0xf]
      %v1723 = vld [vmem:[%s610 + $0xa0] sm:$0xf]
      %v1724 = vld [vmem:[%s610 + $0xa8] sm:$0xf]
      %v1725 = vld [vmem:[%s610 + $0xac] sm:$0xf]
      %v1726 = vld [vmem:[%s610 + $0xb4] sm:$0xf]
      %v1727 = vld [vmem:[%s610 + $0xb8] sm:$0xf]
      %1760 = vrot.lane.b32.xlu0 %v1696, 9
      %v1761 = vpop.permute.xlu0 %1760
      %1762 = vrot.lane.b32.xlu0 %v1697, 9
      %v1763 = vpop.permute.xlu0 %1762
      %1764 = vrot.lane.b32.xlu0 %v1698, 9
      %v1765 = vpop.permute.xlu0 %1764
      %1766 = vrot.lane.b32.xlu0 %v1699, 9
      %v1767 = vpop.permute.xlu0 %1766
      %1768 = vrot.lane.b32.xlu0 %v1700, 9
      %v1769 = vpop.permute.xlu0 %1768
      %1770 = vrot.lane.b32.xlu0 %v1701, 9
      %v1771 = vpop.permute.xlu0 %1770
      %1772 = vrot.lane.b32.xlu0 %v1702, 9
      %v1773 = vpop.permute.xlu0 %1772
      %1774 = vrot.lane.b32.xlu0 %v1703, 9
      %v1775 = vpop.permute.xlu0 %1774
      %1776 = vrot.lane.b32.xlu0 %v1704, 9
      %v1777 = vpop.permute.xlu0 %1776
      %1778 = vrot.lane.b32.xlu0 %v1705, 9
      %v1779 = vpop.permute.xlu0 %1778
      %1780 = vrot.lane.b32.xlu0 %v1706, 9
      %v1781 = vpop.permute.xlu0 %1780
      %1782 = vrot.lane.b32.xlu0 %v1707, 9
      %v1783 = vpop.permute.xlu0 %1782
      %1784 = vrot.lane.b32.xlu0 %v1708, 9
      %v1785 = vpop.permute.xlu0 %1784
      %1786 = vrot.lane.b32.xlu0 %v1709, 9
      %v1787 = vpop.permute.xlu0 %1786
      %1788 = vrot.lane.b32.xlu0 %v1710, 9
      %v1789 = vpop.permute.xlu0 %1788
      %1790 = vrot.lane.b32.xlu0 %v1711, 9
      %v1791 = vpop.permute.xlu0 %1790
      %1792 = vrot.lane.b32.xlu0 %v1712, 9
      %v1793 = vpop.permute.xlu0 %1792
      %1794 = vrot.lane.b32.xlu0 %v1713, 9
      %v1795 = vpop.permute.xlu0 %1794
      %1796 = vrot.lane.b32.xlu0 %v1714, 9
      %v1797 = vpop.permute.xlu0 %1796
      %1798 = vrot.lane.b32.xlu0 %v1715, 9
      %v1799 = vpop.permute.xlu0 %1798
      %1800 = vrot.lane.b32.xlu0 %v1716, 9
      %v1801 = vpop.permute.xlu0 %1800
      %1802 = vrot.lane.b32.xlu0 %v1717, 9
      %v1803 = vpop.permute.xlu0 %1802
      %1804 = vrot.lane.b32.xlu0 %v1718, 9
      %v1805 = vpop.permute.xlu0 %1804
      %1806 = vrot.lane.b32.xlu0 %v1719, 9
      %v1807 = vpop.permute.xlu0 %1806
      %1808 = vrot.lane.b32.xlu0 %v1720, 9
      %v1809 = vpop.permute.xlu0 %1808
      %1810 = vrot.lane.b32.xlu0 %v1721, 9
      %v1811 = vpop.permute.xlu0 %1810
      %1812 = vrot.lane.b32.xlu0 %v1722, 9
      %v1813 = vpop.permute.xlu0 %1812
      %1814 = vrot.lane.b32.xlu0 %v1723, 9
      %v1815 = vpop.permute.xlu0 %1814
      %1816 = vrot.lane.b32.xlu0 %v1724, 9
      %v1817 = vpop.permute.xlu0 %1816
      %1818 = vrot.lane.b32.xlu0 %v1725, 9
      %v1819 = vpop.permute.xlu0 %1818
      %1820 = vrot.lane.b32.xlu0 %v1726, 9
      %v1821 = vpop.permute.xlu0 %1820
      %1822 = vrot.lane.b32.xlu0 %v1727, 9
      %v1823 = vpop.permute.xlu0 %1822
      %vm1856 = vcmask 93256
      %1857 = vst.msk [vmem:[#allocation3] sm:$0xf] %vm1856, %v1761
      %1858 = vst.msk [vmem:[#allocation3 + $0x4] sm:$0xf] %vm1856, %v1763
      %1859 = vst.msk [vmem:[#allocation3 + $0x8] sm:$0xf] %vm1856, %v1765
      %1860 = vst.msk [vmem:[#allocation3 + $0xc] sm:$0xf] %vm1856, %v1767
      %1861 = vst.msk [vmem:[#allocation3 + $0x10] sm:$0xf] %vm1856, %v1769
      %1862 = vst.msk [vmem:[#allocation3 + $0x14] sm:$0xf] %vm1856, %v1771
      %1863 = vst.msk [vmem:[#allocation3 + $0x18] sm:$0xf] %vm1856, %v1773
      %1864 = vst.msk [vmem:[#allocation3 + $0x1c] sm:$0xf] %vm1856, %v1775
      %1865 = vst.msk [vmem:[#allocation3 + $0x20] sm:$0xf] %vm1856, %v1777
      %1866 = vst.msk [vmem:[#allocation3 + $0x24] sm:$0xf] %vm1856, %v1779
      %1867 = vst.msk [vmem:[#allocation3 + $0x28] sm:$0xf] %vm1856, %v1781
      %1868 = vst.msk [vmem:[#allocation3 + $0x2c] sm:$0xf] %vm1856, %v1783
      %1869 = vst.msk [vmem:[#allocation3 + $0x30] sm:$0xf] %vm1856, %v1785
      %1870 = vst.msk [vmem:[#allocation3 + $0x34] sm:$0xf] %vm1856, %v1787
      %1871 = vst.msk [vmem:[#allocation3 + $0x38] sm:$0xf] %vm1856, %v1789
      %1872 = vst.msk [vmem:[#allocation3 + $0x3c] sm:$0xf] %vm1856, %v1791
      %1873 = vst.msk [vmem:[#allocation3 + $0x40] sm:$0xf] %vm1856, %v1793
      %1874 = vst.msk [vmem:[#allocation3 + $0x44] sm:$0xf] %vm1856, %v1795
      %1875 = vst.msk [vmem:[#allocation3 + $0x48] sm:$0xf] %vm1856, %v1797
      %1876 = vst.msk [vmem:[#allocation3 + $0x4c] sm:$0xf] %vm1856, %v1799
      %1877 = vst.msk [vmem:[#allocation3 + $0x50] sm:$0xf] %vm1856, %v1801
      %1878 = vst.msk [vmem:[#allocation3 + $0x54] sm:$0xf] %vm1856, %v1803
      %1879 = vst.msk [vmem:[#allocation3 + $0x58] sm:$0xf] %vm1856, %v1805
      %1880 = vst.msk [vmem:[#allocation3 + $0x5c] sm:$0xf] %vm1856, %v1807
      %1881 = vst.msk [vmem:[#allocation3 + $0x60] sm:$0xf] %vm1856, %v1809
      %1882 = vst.msk [vmem:[#allocation3 + $0x64] sm:$0xf] %vm1856, %v1811
      %1883 = vst.msk [vmem:[#allocation3 + $0x68] sm:$0xf] %vm1856, %v1813
      %1884 = vst.msk [vmem:[#allocation3 + $0x6c] sm:$0xf] %vm1856, %v1815
      %1885 = vst.msk [vmem:[#allocation3 + $0x70] sm:$0xf] %vm1856, %v1817
      %1886 = vst.msk [vmem:[#allocation3 + $0x74] sm:$0xf] %vm1856, %v1819
      %1887 = vst.msk [vmem:[#allocation3 + $0x78] sm:$0xf] %vm1856, %v1821
      %1888 = vst.msk [vmem:[#allocation3 + $0x7c] sm:$0xf] %vm1856, %v1823
      %v1889 = vld [vmem:[%s610] sm:$0xf]
      %v1890 = vld [vmem:[%s610 + $0x4] sm:$0xf]
      %v1891 = vld [vmem:[%s610 + $0x8] sm:$0x1]
      %v1892 = vld [vmem:[%s610 + $0xc] sm:$0xf]
      %v1893 = vld [vmem:[%s610 + $0x10] sm:$0xf]
      %v1894 = vld [vmem:[%s610 + $0x14] sm:$0x1]
      %v1895 = vld [vmem:[%s610 + $0x18] sm:$0xf]
      %v1896 = vld [vmem:[%s610 + $0x1c] sm:$0xf]
      %v1897 = vld [vmem:[%s610 + $0x20] sm:$0x1]
      %v1898 = vld [vmem:[%s610 + $0x24] sm:$0xf]
      %v1899 = vld [vmem:[%s610 + $0x28] sm:$0xf]
      %v1900 = vld [vmem:[%s610 + $0x2c] sm:$0x1]
      %v1901 = vld [vmem:[%s610 + $0x30] sm:$0xf]
      %v1902 = vld [vmem:[%s610 + $0x34] sm:$0xf]
      %v1903 = vld [vmem:[%s610 + $0x38] sm:$0x1]
      %v1904 = vld [vmem:[%s610 + $0x3c] sm:$0xf]
      %v1905 = vld [vmem:[%s610 + $0x40] sm:$0xf]
      %v1906 = vld [vmem:[%s610 + $0x44] sm:$0x1]
      %v1907 = vld [vmem:[%s610 + $0x48] sm:$0xf]
      %v1908 = vld [vmem:[%s610 + $0x4c] sm:$0xf]
      %v1909 = vld [vmem:[%s610 + $0x50] sm:$0x1]
      %v1910 = vld [vmem:[%s610 + $0x54] sm:$0xf]
      %v1911 = vld [vmem:[%s610 + $0x58] sm:$0xf]
      %v1912 = vld [vmem:[%s610 + $0x5c] sm:$0x1]
      %v1913 = vld [vmem:[%s610 + $0x60] sm:$0xf]
      %v1914 = vld [vmem:[%s610 + $0x64] sm:$0xf]
      %v1915 = vld [vmem:[%s610 + $0x68] sm:$0x1]
      %v1916 = vld [vmem:[%s610 + $0x6c] sm:$0xf]
      %v1917 = vld [vmem:[%s610 + $0x70] sm:$0xf]
      %v1918 = vld [vmem:[%s610 + $0x74] sm:$0x1]
      %v1919 = vld [vmem:[%s610 + $0x78] sm:$0xf]
      %v1920 = vld [vmem:[%s610 + $0x7c] sm:$0xf]
      %v1921 = vld [vmem:[%s610 + $0x80] sm:$0x1]
      %v1922 = vld [vmem:[%s610 + $0x84] sm:$0xf]
      %v1923 = vld [vmem:[%s610 + $0x88] sm:$0xf]
      %v1924 = vld [vmem:[%s610 + $0x8c] sm:$0x1]
      %v1925 = vld [vmem:[%s610 + $0x90] sm:$0xf]
      %v1926 = vld [vmem:[%s610 + $0x94] sm:$0xf]
      %v1927 = vld [vmem:[%s610 + $0x98] sm:$0x1]
      %v1928 = vld [vmem:[%s610 + $0x9c] sm:$0xf]
      %v1929 = vld [vmem:[%s610 + $0xa0] sm:$0xf]
      %v1930 = vld [vmem:[%s610 + $0xa4] sm:$0x1]
      %v1931 = vld [vmem:[%s610 + $0xa8] sm:$0xf]
      %v1932 = vld [vmem:[%s610 + $0xac] sm:$0xf]
      %v1933 = vld [vmem:[%s610 + $0xb0] sm:$0x1]
      %v1934 = vld [vmem:[%s610 + $0xb4] sm:$0xf]
      %v1935 = vld [vmem:[%s610 + $0xb8] sm:$0xf]
      %v1936 = vld [vmem:[%s610 + $0xbc] sm:$0x1]
      %v1938 = vshrl.u32 %v1889, 16
      %v1940 = vrot.slane %v1938, 4
      %v1941 = vshll.u32 %v1889, 16
      %v1943 = vrot.slane %v1941, 5
      %v1944 = vor.u32 %v1940, %v1943
      %v1945 = vrot.slane %v1944, 4
      %v1947 = vshll.u32 %v1890, 16
      %v1949 = vrot.slane %v1947, 5
      %v1950 = vsel %vm842, %v1945, %v1949
      %v1951 = vshrl.u32 %v1890, 16
      %v1953 = vrot.slane %v1951, 4
      %v1954 = vor.u32 %v1953, %v1949
      %v1955 = vrot.slane %v1954, 4
      %v1957 = vshll.u32 %v1891, 16
      %v1959 = vrot.slane %v1957, 5
      %v1960 = vsel %vm842, %v1955, %v1959
      %v1962 = vshrl.u32 %v1892, 16
      %v1964 = vrot.slane %v1962, 4
      %v1965 = vshll.u32 %v1892, 16
      %v1967 = vrot.slane %v1965, 5
      %v1968 = vor.u32 %v1964, %v1967
      %v1969 = vrot.slane %v1968, 4
      %v1971 = vshll.u32 %v1893, 16
      %v1973 = vrot.slane %v1971, 5
      %v1974 = vsel %vm842, %v1969, %v1973
      %v1975 = vshrl.u32 %v1893, 16
      %v1977 = vrot.slane %v1975, 4
      %v1978 = vor.u32 %v1977, %v1973
      %v1979 = vrot.slane %v1978, 4
      %v1981 = vshll.u32 %v1894, 16
      %v1983 = vrot.slane %v1981, 5
      %v1984 = vsel %vm842, %v1979, %v1983
      %v1986 = vshrl.u32 %v1895, 16
      %v1988 = vrot.slane %v1986, 4
      %v1989 = vshll.u32 %v1895, 16
      %v1991 = vrot.slane %v1989, 5
      %v1992 = vor.u32 %v1988, %v1991
      %v1993 = vrot.slane %v1992, 4
      %v1995 = vshll.u32 %v1896, 16
      %v1997 = vrot.slane %v1995, 5
      %v1998 = vsel %vm842, %v1993, %v1997
      %v1999 = vshrl.u32 %v1896, 16
      %v2001 = vrot.slane %v1999, 4
      %v2002 = vor.u32 %v2001, %v1997
      %v2003 = vrot.slane %v2002, 4
      %v2005 = vshll.u32 %v1897, 16
      %v2007 = vrot.slane %v2005, 5
      %v2008 = vsel %vm842, %v2003, %v2007
      %v2010 = vshrl.u32 %v1898, 16
      %v2012 = vrot.slane %v2010, 4
      %v2013 = vshll.u32 %v1898, 16
      %v2015 = vrot.slane %v2013, 5
      %v2016 = vor.u32 %v2012, %v2015
      %v2017 = vrot.slane %v2016, 4
      %v2019 = vshll.u32 %v1899, 16
      %v2021 = vrot.slane %v2019, 5
      %v2022 = vsel %vm842, %v2017, %v2021
      %v2023 = vshrl.u32 %v1899, 16
      %v2025 = vrot.slane %v2023, 4
      %v2026 = vor.u32 %v2025, %v2021
      %v2027 = vrot.slane %v2026, 4
      %v2029 = vshll.u32 %v1900, 16
      %v2031 = vrot.slane %v2029, 5
      %v2032 = vsel %vm842, %v2027, %v2031
      %v2034 = vshrl.u32 %v1901, 16
      %v2036 = vrot.slane %v2034, 4
      %v2037 = vshll.u32 %v1901, 16
      %v2039 = vrot.slane %v2037, 5
      %v2040 = vor.u32 %v2036, %v2039
      %v2041 = vrot.slane %v2040, 4
      %v2043 = vshll.u32 %v1902, 16
      %v2045 = vrot.slane %v2043, 5
      %v2046 = vsel %vm842, %v2041, %v2045
      %v2047 = vshrl.u32 %v1902, 16
      %v2049 = vrot.slane %v2047, 4
      %v2050 = vor.u32 %v2049, %v2045
      %v2051 = vrot.slane %v2050, 4
      %v2053 = vshll.u32 %v1903, 16
      %v2055 = vrot.slane %v2053, 5
      %v2056 = vsel %vm842, %v2051, %v2055
      %v2058 = vshrl.u32 %v1904, 16
      %v2060 = vrot.slane %v2058, 4
      %v2061 = vshll.u32 %v1904, 16
      %v2063 = vrot.slane %v2061, 5
      %v2064 = vor.u32 %v2060, %v2063
      %v2065 = vrot.slane %v2064, 4
      %v2067 = vshll.u32 %v1905, 16
      %v2069 = vrot.slane %v2067, 5
      %v2070 = vsel %vm842, %v2065, %v2069
      %v2071 = vshrl.u32 %v1905, 16
      %v2073 = vrot.slane %v2071, 4
      %v2074 = vor.u32 %v2073, %v2069
      %v2075 = vrot.slane %v2074, 4
      %v2077 = vshll.u32 %v1906, 16
      %v2079 = vrot.slane %v2077, 5
      %v2080 = vsel %vm842, %v2075, %v2079
      %v2082 = vshrl.u32 %v1907, 16
      %v2084 = vrot.slane %v2082, 4
      %v2085 = vshll.u32 %v1907, 16
      %v2087 = vrot.slane %v2085, 5
      %v2088 = vor.u32 %v2084, %v2087
      %v2089 = vrot.slane %v2088, 4
      %v2091 = vshll.u32 %v1908, 16
      %v2093 = vrot.slane %v2091, 5
      %v2094 = vsel %vm842, %v2089, %v2093
      %v2095 = vshrl.u32 %v1908, 16
      %v2097 = vrot.slane %v2095, 4
      %v2098 = vor.u32 %v2097, %v2093
      %v2099 = vrot.slane %v2098, 4
      %v2101 = vshll.u32 %v1909, 16
      %v2103 = vrot.slane %v2101, 5
      %v2104 = vsel %vm842, %v2099, %v2103
      %v2106 = vshrl.u32 %v1910, 16
      %v2108 = vrot.slane %v2106, 4
      %v2109 = vshll.u32 %v1910, 16
      %v2111 = vrot.slane %v2109, 5
      %v2112 = vor.u32 %v2108, %v2111
      %v2113 = vrot.slane %v2112, 4
      %v2115 = vshll.u32 %v1911, 16
      %v2117 = vrot.slane %v2115, 5
      %v2118 = vsel %vm842, %v2113, %v2117
      %v2119 = vshrl.u32 %v1911, 16
      %v2121 = vrot.slane %v2119, 4
      %v2122 = vor.u32 %v2121, %v2117
      %v2123 = vrot.slane %v2122, 4
      %v2125 = vshll.u32 %v1912, 16
      %v2127 = vrot.slane %v2125, 5
      %v2128 = vsel %vm842, %v2123, %v2127
      %v2130 = vshrl.u32 %v1913, 16
      %v2132 = vrot.slane %v2130, 4
      %v2133 = vshll.u32 %v1913, 16
      %v2135 = vrot.slane %v2133, 5
      %v2136 = vor.u32 %v2132, %v2135
      %v2137 = vrot.slane %v2136, 4
      %v2139 = vshll.u32 %v1914, 16
      %v2141 = vrot.slane %v2139, 5
      %v2142 = vsel %vm842, %v2137, %v2141
      %v2143 = vshrl.u32 %v1914, 16
      %v2145 = vrot.slane %v2143, 4
      %v2146 = vor.u32 %v2145, %v2141
      %v2147 = vrot.slane %v2146, 4
      %v2149 = vshll.u32 %v1915, 16
      %v2151 = vrot.slane %v2149, 5
      %v2152 = vsel %vm842, %v2147, %v2151
      %v2154 = vshrl.u32 %v1916, 16
      %v2156 = vrot.slane %v2154, 4
      %v2157 = vshll.u32 %v1916, 16
      %v2159 = vrot.slane %v2157, 5
      %v2160 = vor.u32 %v2156, %v2159
      %v2161 = vrot.slane %v2160, 4
      %v2163 = vshll.u32 %v1917, 16
      %v2165 = vrot.slane %v2163, 5
      %v2166 = vsel %vm842, %v2161, %v2165
      %v2167 = vshrl.u32 %v1917, 16
      %v2169 = vrot.slane %v2167, 4
      %v2170 = vor.u32 %v2169, %v2165
      %v2171 = vrot.slane %v2170, 4
      %v2173 = vshll.u32 %v1918, 16
      %v2175 = vrot.slane %v2173, 5
      %v2176 = vsel %vm842, %v2171, %v2175
      %v2178 = vshrl.u32 %v1919, 16
      %v2180 = vrot.slane %v2178, 4
      %v2181 = vshll.u32 %v1919, 16
      %v2183 = vrot.slane %v2181, 5
      %v2184 = vor.u32 %v2180, %v2183
      %v2185 = vrot.slane %v2184, 4
      %v2187 = vshll.u32 %v1920, 16
      %v2189 = vrot.slane %v2187, 5
      %v2190 = vsel %vm842, %v2185, %v2189
      %v2191 = vshrl.u32 %v1920, 16
      %v2193 = vrot.slane %v2191, 4
      %v2194 = vor.u32 %v2193, %v2189
      %v2195 = vrot.slane %v2194, 4
      %v2197 = vshll.u32 %v1921, 16
      %v2199 = vrot.slane %v2197, 5
      %v2200 = vsel %vm842, %v2195, %v2199
      %v2202 = vshrl.u32 %v1922, 16
      %v2204 = vrot.slane %v2202, 4
      %v2205 = vshll.u32 %v1922, 16
      %v2207 = vrot.slane %v2205, 5
      %v2208 = vor.u32 %v2204, %v2207
      %v2209 = vrot.slane %v2208, 4
      %v2211 = vshll.u32 %v1923, 16
      %v2213 = vrot.slane %v2211, 5
      %v2214 = vsel %vm842, %v2209, %v2213
      %v2215 = vshrl.u32 %v1923, 16
      %v2217 = vrot.slane %v2215, 4
      %v2218 = vor.u32 %v2217, %v2213
      %v2219 = vrot.slane %v2218, 4
      %v2221 = vshll.u32 %v1924, 16
      %v2223 = vrot.slane %v2221, 5
      %v2224 = vsel %vm842, %v2219, %v2223
      %v2226 = vshrl.u32 %v1925, 16
      %v2228 = vrot.slane %v2226, 4
      %v2229 = vshll.u32 %v1925, 16
      %v2231 = vrot.slane %v2229, 5
      %v2232 = vor.u32 %v2228, %v2231
      %v2233 = vrot.slane %v2232, 4
      %v2235 = vshll.u32 %v1926, 16
      %v2237 = vrot.slane %v2235, 5
      %v2238 = vsel %vm842, %v2233, %v2237
      %v2239 = vshrl.u32 %v1926, 16
      %v2241 = vrot.slane %v2239, 4
      %v2242 = vor.u32 %v2241, %v2237
      %v2243 = vrot.slane %v2242, 4
      %v2245 = vshll.u32 %v1927, 16
      %v2247 = vrot.slane %v2245, 5
      %v2248 = vsel %vm842, %v2243, %v2247
      %v2250 = vshrl.u32 %v1928, 16
      %v2252 = vrot.slane %v2250, 4
      %v2253 = vshll.u32 %v1928, 16
      %v2255 = vrot.slane %v2253, 5
      %v2256 = vor.u32 %v2252, %v2255
      %v2257 = vrot.slane %v2256, 4
      %v2259 = vshll.u32 %v1929, 16
      %v2261 = vrot.slane %v2259, 5
      %v2262 = vsel %vm842, %v2257, %v2261
      %v2263 = vshrl.u32 %v1929, 16
      %v2265 = vrot.slane %v2263, 4
      %v2266 = vor.u32 %v2265, %v2261
      %v2267 = vrot.slane %v2266, 4
      %v2269 = vshll.u32 %v1930, 16
      %v2271 = vrot.slane %v2269, 5
      %v2272 = vsel %vm842, %v2267, %v2271
      %v2274 = vshrl.u32 %v1931, 16
      %v2276 = vrot.slane %v2274, 4
      %v2277 = vshll.u32 %v1931, 16
      %v2279 = vrot.slane %v2277, 5
      %v2280 = vor.u32 %v2276, %v2279
      %v2281 = vrot.slane %v2280, 4
      %v2283 = vshll.u32 %v1932, 16
      %v2285 = vrot.slane %v2283, 5
      %v2286 = vsel %vm842, %v2281, %v2285
      %v2287 = vshrl.u32 %v1932, 16
      %v2289 = vrot.slane %v2287, 4
      %v2290 = vor.u32 %v2289, %v2285
      %v2291 = vrot.slane %v2290, 4
      %v2293 = vshll.u32 %v1933, 16
      %v2295 = vrot.slane %v2293, 5
      %v2296 = vsel %vm842, %v2291, %v2295
      %v2298 = vshrl.u32 %v1934, 16
      %v2300 = vrot.slane %v2298, 4
      %v2301 = vshll.u32 %v1934, 16
      %v2303 = vrot.slane %v2301, 5
      %v2304 = vor.u32 %v2300, %v2303
      %v2305 = vrot.slane %v2304, 4
      %v2307 = vshll.u32 %v1935, 16
      %v2309 = vrot.slane %v2307, 5
      %v2310 = vsel %vm842, %v2305, %v2309
      %v2311 = vshrl.u32 %v1935, 16
      %v2313 = vrot.slane %v2311, 4
      %v2314 = vor.u32 %v2313, %v2309
      %v2315 = vrot.slane %v2314, 4
      %v2317 = vshll.u32 %v1936, 16
      %v2319 = vrot.slane %v2317, 5
      %v2320 = vsel %vm842, %v2315, %v2319
      %2321 = vrot.lane.b32.xlu0 %v1950, 12
      %v2322 = vpop.permute.xlu0 %2321
      %2323 = vrot.lane.b32.xlu0 %v1960, 12
      %v2324 = vpop.permute.xlu0 %2323
      %2325 = vrot.lane.b32.xlu0 %v1974, 12
      %v2326 = vpop.permute.xlu0 %2325
      %2327 = vrot.lane.b32.xlu0 %v1984, 12
      %v2328 = vpop.permute.xlu0 %2327
      %2329 = vrot.lane.b32.xlu0 %v1998, 12
      %v2330 = vpop.permute.xlu0 %2329
      %2331 = vrot.lane.b32.xlu0 %v2008, 12
      %v2332 = vpop.permute.xlu0 %2331
      %2333 = vrot.lane.b32.xlu0 %v2022, 12
      %v2334 = vpop.permute.xlu0 %2333
      %2335 = vrot.lane.b32.xlu0 %v2032, 12
      %v2336 = vpop.permute.xlu0 %2335
      %2337 = vrot.lane.b32.xlu0 %v2046, 12
      %v2338 = vpop.permute.xlu0 %2337
      %2339 = vrot.lane.b32.xlu0 %v2056, 12
      %v2340 = vpop.permute.xlu0 %2339
      %2341 = vrot.lane.b32.xlu0 %v2070, 12
      %v2342 = vpop.permute.xlu0 %2341
      %2343 = vrot.lane.b32.xlu0 %v2080, 12
      %v2344 = vpop.permute.xlu0 %2343
      %2345 = vrot.lane.b32.xlu0 %v2094, 12
      %v2346 = vpop.permute.xlu0 %2345
      %2347 = vrot.lane.b32.xlu0 %v2104, 12
      %v2348 = vpop.permute.xlu0 %2347
      %2349 = vrot.lane.b32.xlu0 %v2118, 12
      %v2350 = vpop.permute.xlu0 %2349
      %2351 = vrot.lane.b32.xlu0 %v2128, 12
      %v2352 = vpop.permute.xlu0 %2351
      %2353 = vrot.lane.b32.xlu0 %v2142, 12
      %v2354 = vpop.permute.xlu0 %2353
      %2355 = vrot.lane.b32.xlu0 %v2152, 12
      %v2356 = vpop.permute.xlu0 %2355
      %2357 = vrot.lane.b32.xlu0 %v2166, 12
      %v2358 = vpop.permute.xlu0 %2357
      %2359 = vrot.lane.b32.xlu0 %v2176, 12
      %v2360 = vpop.permute.xlu0 %2359
      %2361 = vrot.lane.b32.xlu0 %v2190, 12
      %v2362 = vpop.permute.xlu0 %2361
      %2363 = vrot.lane.b32.xlu0 %v2200, 12
      %v2364 = vpop.permute.xlu0 %2363
      %2365 = vrot.lane.b32.xlu0 %v2214, 12
      %v2366 = vpop.permute.xlu0 %2365
      %2367 = vrot.lane.b32.xlu0 %v2224, 12
      %v2368 = vpop.permute.xlu0 %2367
      %2369 = vrot.lane.b32.xlu0 %v2238, 12
      %v2370 = vpop.permute.xlu0 %2369
      %2371 = vrot.lane.b32.xlu0 %v2248, 12
      %v2372 = vpop.permute.xlu0 %2371
      %2373 = vrot.lane.b32.xlu0 %v2262, 12
      %v2374 = vpop.permute.xlu0 %2373
      %2375 = vrot.lane.b32.xlu0 %v2272, 12
      %v2376 = vpop.permute.xlu0 %2375
      %2377 = vrot.lane.b32.xlu0 %v2286, 12
      %v2378 = vpop.permute.xlu0 %2377
      %2379 = vrot.lane.b32.xlu0 %v2296, 12
      %v2380 = vpop.permute.xlu0 %2379
      %2381 = vrot.lane.b32.xlu0 %v2310, 12
      %v2382 = vpop.permute.xlu0 %2381
      %2383 = vrot.lane.b32.xlu0 %v2320, 12
      %v2384 = vpop.permute.xlu0 %2383
      %vm2417 = vcmask 117856
      %2418 = vst.msk [vmem:[#allocation3] sm:$0xf] %vm2417, %v2322
      %2419 = vst.msk [vmem:[#allocation3 + $0x4] sm:$0xf] %vm2417, %v2324
      %2420 = vst.msk [vmem:[#allocation3 + $0x8] sm:$0xf] %vm2417, %v2326
      %2421 = vst.msk [vmem:[#allocation3 + $0xc] sm:$0xf] %vm2417, %v2328
      %2422 = vst.msk [vmem:[#allocation3 + $0x10] sm:$0xf] %vm2417, %v2330
      %2423 = vst.msk [vmem:[#allocation3 + $0x14] sm:$0xf] %vm2417, %v2332
      %2424 = vst.msk [vmem:[#allocation3 + $0x18] sm:$0xf] %vm2417, %v2334
      %2425 = vst.msk [vmem:[#allocation3 + $0x1c] sm:$0xf] %vm2417, %v2336
      %2426 = vst.msk [vmem:[#allocation3 + $0x20] sm:$0xf] %vm2417, %v2338
      %2427 = vst.msk [vmem:[#allocation3 + $0x24] sm:$0xf] %vm2417, %v2340
      %2428 = vst.msk [vmem:[#allocation3 + $0x28] sm:$0xf] %vm2417, %v2342
      %2429 = vst.msk [vmem:[#allocation3 + $0x2c] sm:$0xf] %vm2417, %v2344
      %2430 = vst.msk [vmem:[#allocation3 + $0x30] sm:$0xf] %vm2417, %v2346
      %2431 = vst.msk [vmem:[#allocation3 + $0x34] sm:$0xf] %vm2417, %v2348
      %2432 = vst.msk [vmem:[#allocation3 + $0x38] sm:$0xf] %vm2417, %v2350
      %2433 = vst.msk [vmem:[#allocation3 + $0x3c] sm:$0xf] %vm2417, %v2352
      %2434 = vst.msk [vmem:[#allocation3 + $0x40] sm:$0xf] %vm2417, %v2354
      %2435 = vst.msk [vmem:[#allocation3 + $0x44] sm:$0xf] %vm2417, %v2356
      %2436 = vst.msk [vmem:[#allocation3 + $0x48] sm:$0xf] %vm2417, %v2358
      %2437 = vst.msk [vmem:[#allocation3 + $0x4c] sm:$0xf] %vm2417, %v2360
      %2438 = vst.msk [vmem:[#allocation3 + $0x50] sm:$0xf] %vm2417, %v2362
      %2439 = vst.msk [vmem:[#allocation3 + $0x54] sm:$0xf] %vm2417, %v2364
      %2440 = vst.msk [vmem:[#allocation3 + $0x58] sm:$0xf] %vm2417, %v2366
      %2441 = vst.msk [vmem:[#allocation3 + $0x5c] sm:$0xf] %vm2417, %v2368
      %2442 = vst.msk [vmem:[#allocation3 + $0x60] sm:$0xf] %vm2417, %v2370
      %2443 = vst.msk [vmem:[#allocation3 + $0x64] sm:$0xf] %vm2417, %v2372
      %2444 = vst.msk [vmem:[#allocation3 + $0x68] sm:$0xf] %vm2417, %v2374
      %2445 = vst.msk [vmem:[#allocation3 + $0x6c] sm:$0xf] %vm2417, %v2376
      %2446 = vst.msk [vmem:[#allocation3 + $0x70] sm:$0xf] %vm2417, %v2378
      %2447 = vst.msk [vmem:[#allocation3 + $0x74] sm:$0xf] %vm2417, %v2380
      %2448 = vst.msk [vmem:[#allocation3 + $0x78] sm:$0xf] %vm2417, %v2382
      %2449 = vst.msk [vmem:[#allocation3 + $0x7c] sm:$0xf] %vm2417, %v2384
      %v2450 = vld [vmem:[%s610] sm:$0xe]
      %v2451 = vld [vmem:[%s610 + $0x4] sm:$0xf]
      %v2452 = vld [vmem:[%s610 + $0x8] sm:$0x1]
      %v2453 = vld [vmem:[%s610 + $0xc] sm:$0xe]
      %v2454 = vld [vmem:[%s610 + $0x10] sm:$0xf]
      %v2455 = vld [vmem:[%s610 + $0x14] sm:$0x1]
      %v2456 = vld [vmem:[%s610 + $0x18] sm:$0xe]
      %v2457 = vld [vmem:[%s610 + $0x1c] sm:$0xf]
      %v2458 = vld [vmem:[%s610 + $0x20] sm:$0x1]
      %v2459 = vld [vmem:[%s610 + $0x24] sm:$0xe]
      %v2460 = vld [vmem:[%s610 + $0x28] sm:$0xf]
      %v2461 = vld [vmem:[%s610 + $0x2c] sm:$0x1]
      %v2462 = vld [vmem:[%s610 + $0x30] sm:$0xe]
      %v2463 = vld [vmem:[%s610 + $0x34] sm:$0xf]
      %v2464 = vld [vmem:[%s610 + $0x38] sm:$0x1]
      %v2465 = vld [vmem:[%s610 + $0x3c] sm:$0xe]
      %v2466 = vld [vmem:[%s610 + $0x40] sm:$0xf]
      %v2467 = vld [vmem:[%s610 + $0x44] sm:$0x1]
      %v2468 = vld [vmem:[%s610 + $0x48] sm:$0xe]
      %v2469 = vld [vmem:[%s610 + $0x4c] sm:$0xf]
      %v2470 = vld [vmem:[%s610 + $0x50] sm:$0x1]
      %v2471 = vld [vmem:[%s610 + $0x54] sm:$0xe]
      %v2472 = vld [vmem:[%s610 + $0x58] sm:$0xf]
      %v2473 = vld [vmem:[%s610 + $0x5c] sm:$0x1]
      %v2474 = vld [vmem:[%s610 + $0x60] sm:$0xe]
      %v2475 = vld [vmem:[%s610 + $0x64] sm:$0xf]
      %v2476 = vld [vmem:[%s610 + $0x68] sm:$0x1]
      %v2477 = vld [vmem:[%s610 + $0x6c] sm:$0xe]
      %v2478 = vld [vmem:[%s610 + $0x70] sm:$0xf]
      %v2479 = vld [vmem:[%s610 + $0x74] sm:$0x1]
      %v2480 = vld [vmem:[%s610 + $0x78] sm:$0xe]
      %v2481 = vld [vmem:[%s610 + $0x7c] sm:$0xf]
      %v2482 = vld [vmem:[%s610 + $0x80] sm:$0x1]
      %v2483 = vld [vmem:[%s610 + $0x84] sm:$0xe]
      %v2484 = vld [vmem:[%s610 + $0x88] sm:$0xf]
      %v2485 = vld [vmem:[%s610 + $0x8c] sm:$0x1]
      %v2486 = vld [vmem:[%s610 + $0x90] sm:$0xe]
      %v2487 = vld [vmem:[%s610 + $0x94] sm:$0xf]
      %v2488 = vld [vmem:[%s610 + $0x98] sm:$0x1]
      %v2489 = vld [vmem:[%s610 + $0x9c] sm:$0xe]
      %v2490 = vld [vmem:[%s610 + $0xa0] sm:$0xf]
      %v2491 = vld [vmem:[%s610 + $0xa4] sm:$0x1]
      %v2492 = vld [vmem:[%s610 + $0xa8] sm:$0xe]
      %v2493 = vld [vmem:[%s610 + $0xac] sm:$0xf]
      %v2494 = vld [vmem:[%s610 + $0xb0] sm:$0x1]
      %v2495 = vld [vmem:[%s610 + $0xb4] sm:$0xe]
      %v2496 = vld [vmem:[%s610 + $0xb8] sm:$0xf]
      %v2497 = vld [vmem:[%s610 + $0xbc] sm:$0x1]
      %v2546 = vrot.slane %v2450, 5
      %v2547 = vrot.slane %v2546, 4
      %v2548 = vrot.slane %v2451, 5
      %v2549 = vsel %vm1454, %v2547, %v2548
      %v2550 = vrot.slane %v2548, 4
      %v2551 = vrot.slane %v2452, 5
      %v2552 = vsel %vm1454, %v2550, %v2551
      %v2553 = vrot.slane %v2453, 5
      %v2554 = vrot.slane %v2553, 4
      %v2555 = vrot.slane %v2454, 5
      %v2556 = vsel %vm1454, %v2554, %v2555
      %v2557 = vrot.slane %v2555, 4
      %v2558 = vrot.slane %v2455, 5
      %v2559 = vsel %vm1454, %v2557, %v2558
      %v2560 = vrot.slane %v2456, 5
      %v2561 = vrot.slane %v2560, 4
      %v2562 = vrot.slane %v2457, 5
      %v2563 = vsel %vm1454, %v2561, %v2562
      %v2564 = vrot.slane %v2562, 4
      %v2565 = vrot.slane %v2458, 5
      %v2566 = vsel %vm1454, %v2564, %v2565
      %v2567 = vrot.slane %v2459, 5
      %v2568 = vrot.slane %v2567, 4
      %v2569 = vrot.slane %v2460, 5
      %v2570 = vsel %vm1454, %v2568, %v2569
      %v2571 = vrot.slane %v2569, 4
      %v2572 = vrot.slane %v2461, 5
      %v2573 = vsel %vm1454, %v2571, %v2572
      %v2574 = vrot.slane %v2462, 5
      %v2575 = vrot.slane %v2574, 4
      %v2576 = vrot.slane %v2463, 5
      %v2577 = vsel %vm1454, %v2575, %v2576
      %v2578 = vrot.slane %v2576, 4
      %v2579 = vrot.slane %v2464, 5
      %v2580 = vsel %vm1454, %v2578, %v2579
      %v2581 = vrot.slane %v2465, 5
      %v2582 = vrot.slane %v2581, 4
      %v2583 = vrot.slane %v2466, 5
      %v2584 = vsel %vm1454, %v2582, %v2583
      %v2585 = vrot.slane %v2583, 4
      %v2586 = vrot.slane %v2467, 5
      %v2587 = vsel %vm1454, %v2585, %v2586
      %v2588 = vrot.slane %v2468, 5
      %v2589 = vrot.slane %v2588, 4
      %v2590 = vrot.slane %v2469, 5
      %v2591 = vsel %vm1454, %v2589, %v2590
      %v2592 = vrot.slane %v2590, 4
      %v2593 = vrot.slane %v2470, 5
      %v2594 = vsel %vm1454, %v2592, %v2593
      %v2595 = vrot.slane %v2471, 5
      %v2596 = vrot.slane %v2595, 4
      %v2597 = vrot.slane %v2472, 5
      %v2598 = vsel %vm1454, %v2596, %v2597
      %v2599 = vrot.slane %v2597, 4
      %v2600 = vrot.slane %v2473, 5
      %v2601 = vsel %vm1454, %v2599, %v2600
      %v2602 = vrot.slane %v2474, 5
      %v2603 = vrot.slane %v2602, 4
      %v2604 = vrot.slane %v2475, 5
      %v2605 = vsel %vm1454, %v2603, %v2604
      %v2606 = vrot.slane %v2604, 4
      %v2607 = vrot.slane %v2476, 5
      %v2608 = vsel %vm1454, %v2606, %v2607
      %v2609 = vrot.slane %v2477, 5
      %v2610 = vrot.slane %v2609, 4
      %v2611 = vrot.slane %v2478, 5
      %v2612 = vsel %vm1454, %v2610, %v2611
      %v2613 = vrot.slane %v2611, 4
      %v2614 = vrot.slane %v2479, 5
      %v2615 = vsel %vm1454, %v2613, %v2614
      %v2616 = vrot.slane %v2480, 5
      %v2617 = vrot.slane %v2616, 4
      %v2618 = vrot.slane %v2481, 5
      %v2619 = vsel %vm1454, %v2617, %v2618
      %v2620 = vrot.slane %v2618, 4
      %v2621 = vrot.slane %v2482, 5
      %v2622 = vsel %vm1454, %v2620, %v2621
      %v2623 = vrot.slane %v2483, 5
      %v2624 = vrot.slane %v2623, 4
      %v2625 = vrot.slane %v2484, 5
      %v2626 = vsel %vm1454, %v2624, %v2625
      %v2627 = vrot.slane %v2625, 4
      %v2628 = vrot.slane %v2485, 5
      %v2629 = vsel %vm1454, %v2627, %v2628
      %v2630 = vrot.slane %v2486, 5
      %v2631 = vrot.slane %v2630, 4
      %v2632 = vrot.slane %v2487, 5
      %v2633 = vsel %vm1454, %v2631, %v2632
      %v2634 = vrot.slane %v2632, 4
      %v2635 = vrot.slane %v2488, 5
      %v2636 = vsel %vm1454, %v2634, %v2635
      %v2637 = vrot.slane %v2489, 5
      %v2638 = vrot.slane %v2637, 4
      %v2639 = vrot.slane %v2490, 5
      %v2640 = vsel %vm1454, %v2638, %v2639
      %v2641 = vrot.slane %v2639, 4
      %v2642 = vrot.slane %v2491, 5
      %v2643 = vsel %vm1454, %v2641, %v2642
      %v2644 = vrot.slane %v2492, 5
      %v2645 = vrot.slane %v2644, 4
      %v2646 = vrot.slane %v2493, 5
      %v2647 = vsel %vm1454, %v2645, %v2646
      %v2648 = vrot.slane %v2646, 4
      %v2649 = vrot.slane %v2494, 5
      %v2650 = vsel %vm1454, %v2648, %v2649
      %v2651 = vrot.slane %v2495, 5
      %v2652 = vrot.slane %v2651, 4
      %v2653 = vrot.slane %v2496, 5
      %v2654 = vsel %vm1454, %v2652, %v2653
      %v2655 = vrot.slane %v2653, 4
      %v2656 = vrot.slane %v2497, 5
      %v2657 = vsel %vm1454, %v2655, %v2656
      %2658 = vrot.lane.b32.xlu0 %v2549, 15
      %v2659 = vpop.permute.xlu0 %2658
      %2660 = vrot.lane.b32.xlu0 %v2552, 15
      %v2661 = vpop.permute.xlu0 %2660
      %2662 = vrot.lane.b32.xlu0 %v2556, 15
      %v2663 = vpop.permute.xlu0 %2662
      %2664 = vrot.lane.b32.xlu0 %v2559, 15
      %v2665 = vpop.permute.xlu0 %2664
      %2666 = vrot.lane.b32.xlu0 %v2563, 15
      %v2667 = vpop.permute.xlu0 %2666
      %2668 = vrot.lane.b32.xlu0 %v2566, 15
      %v2669 = vpop.permute.xlu0 %2668
      %2670 = vrot.lane.b32.xlu0 %v2570, 15
      %v2671 = vpop.permute.xlu0 %2670
      %2672 = vrot.lane.b32.xlu0 %v2573, 15
      %v2673 = vpop.permute.xlu0 %2672
      %2674 = vrot.lane.b32.xlu0 %v2577, 15
      %v2675 = vpop.permute.xlu0 %2674
      %2676 = vrot.lane.b32.xlu0 %v2580, 15
      %v2677 = vpop.permute.xlu0 %2676
      %2678 = vrot.lane.b32.xlu0 %v2584, 15
      %v2679 = vpop.permute.xlu0 %2678
      %2680 = vrot.lane.b32.xlu0 %v2587, 15
      %v2681 = vpop.permute.xlu0 %2680
      %2682 = vrot.lane.b32.xlu0 %v2591, 15
      %v2683 = vpop.permute.xlu0 %2682
      %2684 = vrot.lane.b32.xlu0 %v2594, 15
      %v2685 = vpop.permute.xlu0 %2684
      %2686 = vrot.lane.b32.xlu0 %v2598, 15
      %v2687 = vpop.permute.xlu0 %2686
      %2688 = vrot.lane.b32.xlu0 %v2601, 15
      %v2689 = vpop.permute.xlu0 %2688
      %2690 = vrot.lane.b32.xlu0 %v2605, 15
      %v2691 = vpop.permute.xlu0 %2690
      %2692 = vrot.lane.b32.xlu0 %v2608, 15
      %v2693 = vpop.permute.xlu0 %2692
      %2694 = vrot.lane.b32.xlu0 %v2612, 15
      %v2695 = vpop.permute.xlu0 %2694
      %2696 = vrot.lane.b32.xlu0 %v2615, 15
      %v2697 = vpop.permute.xlu0 %2696
      %2698 = vrot.lane.b32.xlu0 %v2619, 15
      %v2699 = vpop.permute.xlu0 %2698
      %2700 = vrot.lane.b32.xlu0 %v2622, 15
      %v2701 = vpop.permute.xlu0 %2700
      %2702 = vrot.lane.b32.xlu0 %v2626, 15
      %v2703 = vpop.permute.xlu0 %2702
      %2704 = vrot.lane.b32.xlu0 %v2629, 15
      %v2705 = vpop.permute.xlu0 %2704
      %2706 = vrot.lane.b32.xlu0 %v2633, 15
      %v2707 = vpop.permute.xlu0 %2706
      %2708 = vrot.lane.b32.xlu0 %v2636, 15
      %v2709 = vpop.permute.xlu0 %2708
      %2710 = vrot.lane.b32.xlu0 %v2640, 15
      %v2711 = vpop.permute.xlu0 %2710
      %2712 = vrot.lane.b32.xlu0 %v2643, 15
      %v2713 = vpop.permute.xlu0 %2712
      %2714 = vrot.lane.b32.xlu0 %v2647, 15
      %v2715 = vpop.permute.xlu0 %2714
      %2716 = vrot.lane.b32.xlu0 %v2650, 15
      %v2717 = vpop.permute.xlu0 %2716
      %2718 = vrot.lane.b32.xlu0 %v2654, 15
      %v2719 = vpop.permute.xlu0 %2718
      %2720 = vrot.lane.b32.xlu0 %v2657, 15
      %v2721 = vpop.permute.xlu0 %2720
      %vm2754 = vcmask 142456
      %2755 = vst.msk [vmem:[#allocation3] sm:$0xf] %vm2754, %v2659
      %2756 = vst.msk [vmem:[#allocation3 + $0x4] sm:$0xf] %vm2754, %v2661
      %2757 = vst.msk [vmem:[#allocation3 + $0x8] sm:$0xf] %vm2754, %v2663
      %2758 = vst.msk [vmem:[#allocation3 + $0xc] sm:$0xf] %vm2754, %v2665
      %2759 = vst.msk [vmem:[#allocation3 + $0x10] sm:$0xf] %vm2754, %v2667
      %2760 = vst.msk [vmem:[#allocation3 + $0x14] sm:$0xf] %vm2754, %v2669
      %2761 = vst.msk [vmem:[#allocation3 + $0x18] sm:$0xf] %vm2754, %v2671
      %2762 = vst.msk [vmem:[#allocation3 + $0x1c] sm:$0xf] %vm2754, %v2673
      %2763 = vst.msk [vmem:[#allocation3 + $0x20] sm:$0xf] %vm2754, %v2675
      %2764 = vst.msk [vmem:[#allocation3 + $0x24] sm:$0xf] %vm2754, %v2677
      %2765 = vst.msk [vmem:[#allocation3 + $0x28] sm:$0xf] %vm2754, %v2679
      %2766 = vst.msk [vmem:[#allocation3 + $0x2c] sm:$0xf] %vm2754, %v2681
      %2767 = vst.msk [vmem:[#allocation3 + $0x30] sm:$0xf] %vm2754, %v2683
      %2768 = vst.msk [vmem:[#allocation3 + $0x34] sm:$0xf] %vm2754, %v2685
      %2769 = vst.msk [vmem:[#allocation3 + $0x38] sm:$0xf] %vm2754, %v2687
      %2770 = vst.msk [vmem:[#allocation3 + $0x3c] sm:$0xf] %vm2754, %v2689
      %2771 = vst.msk [vmem:[#allocation3 + $0x40] sm:$0xf] %vm2754, %v2691
      %2772 = vst.msk [vmem:[#allocation3 + $0x44] sm:$0xf] %vm2754, %v2693
      %2773 = vst.msk [vmem:[#allocation3 + $0x48] sm:$0xf] %vm2754, %v2695
      %2774 = vst.msk [vmem:[#allocation3 + $0x4c] sm:$0xf] %vm2754, %v2697
      %2775 = vst.msk [vmem:[#allocation3 + $0x50] sm:$0xf] %vm2754, %v2699
      %2776 = vst.msk [vmem:[#allocation3 + $0x54] sm:$0xf] %vm2754, %v2701
      %2777 = vst.msk [vmem:[#allocation3 + $0x58] sm:$0xf] %vm2754, %v2703
      %2778 = vst.msk [vmem:[#allocation3 + $0x5c] sm:$0xf] %vm2754, %v2705
      %2779 = vst.msk [vmem:[#allocation3 + $0x60] sm:$0xf] %vm2754, %v2707
      %2780 = vst.msk [vmem:[#allocation3 + $0x64] sm:$0xf] %vm2754, %v2709
      %2781 = vst.msk [vmem:[#allocation3 + $0x68] sm:$0xf] %vm2754, %v2711
      %2782 = vst.msk [vmem:[#allocation3 + $0x6c] sm:$0xf] %vm2754, %v2713
      %2783 = vst.msk [vmem:[#allocation3 + $0x70] sm:$0xf] %vm2754, %v2715
      %2784 = vst.msk [vmem:[#allocation3 + $0x74] sm:$0xf] %vm2754, %v2717
      %2785 = vst.msk [vmem:[#allocation3 + $0x78] sm:$0xf] %vm2754, %v2719
      %2786 = vst.msk [vmem:[#allocation3 + $0x7c] sm:$0xf] %vm2754, %v2721
      %s2787 = scalar_lea.vmem [#allocation2], 24
      %v2788 = vld [vmem:[%s2787] sm:$0xf]
      %v2789 = vld [vmem:[%s2787 + $0x4] sm:$0xf]
      %v2790 = vld [vmem:[%s2787 + $0xc] sm:$0xf]
      %v2791 = vld [vmem:[%s2787 + $0x10] sm:$0xf]
      %v2792 = vld [vmem:[%s2787 + $0x18] sm:$0xf]
      %v2793 = vld [vmem:[%s2787 + $0x1c] sm:$0xf]
      %v2794 = vld [vmem:[%s2787 + $0x24] sm:$0xf]
      %v2795 = vld [vmem:[%s2787 + $0x28] sm:$0xf]
      %v2796 = vld [vmem:[%s2787 + $0x30] sm:$0xf]
      %v2797 = vld [vmem:[%s2787 + $0x34] sm:$0xf]
      %v2798 = vld [vmem:[%s2787 + $0x3c] sm:$0xf]
      %v2799 = vld [vmem:[%s2787 + $0x40] sm:$0xf]
      %v2800 = vld [vmem:[%s2787 + $0x48] sm:$0xf]
      %v2801 = vld [vmem:[%s2787 + $0x4c] sm:$0xf]
      %v2802 = vld [vmem:[%s2787 + $0x54] sm:$0xf]
      %v2803 = vld [vmem:[%s2787 + $0x58] sm:$0xf]
      %v2804 = vld [vmem:[%s2787 + $0x60] sm:$0xf]
      %v2805 = vld [vmem:[%s2787 + $0x64] sm:$0xf]
      %v2806 = vld [vmem:[%s2787 + $0x6c] sm:$0xf]
      %v2807 = vld [vmem:[%s2787 + $0x70] sm:$0xf]
      %v2808 = vld [vmem:[%s2787 + $0x78] sm:$0xf]
      %v2809 = vld [vmem:[%s2787 + $0x7c] sm:$0xf]
      %v2810 = vld [vmem:[%s2787 + $0x84] sm:$0xf]
      %v2811 = vld [vmem:[%s2787 + $0x88] sm:$0xf]
      %v2812 = vld [vmem:[%s2787 + $0x90] sm:$0xf]
      %v2813 = vld [vmem:[%s2787 + $0x94] sm:$0xf]
      %v2814 = vld [vmem:[%s2787 + $0x9c] sm:$0xf]
      %v2815 = vld [vmem:[%s2787 + $0xa0] sm:$0xf]
      %v2816 = vld [vmem:[%s2787 + $0xa8] sm:$0xf]
      %v2817 = vld [vmem:[%s2787 + $0xac] sm:$0xf]
      %v2818 = vld [vmem:[%s2787 + $0xb4] sm:$0xf]
      %v2819 = vld [vmem:[%s2787 + $0xb8] sm:$0xf]
      %2852 = vrot.lane.b32.xlu0 %v2788, 18
      %v2853 = vpop.permute.xlu0 %2852
      %2854 = vrot.lane.b32.xlu0 %v2789, 18
      %v2855 = vpop.permute.xlu0 %2854
      %2856 = vrot.lane.b32.xlu0 %v2790, 18
      %v2857 = vpop.permute.xlu0 %2856
      %2858 = vrot.lane.b32.xlu0 %v2791, 18
      %v2859 = vpop.permute.xlu0 %2858
      %2860 = vrot.lane.b32.xlu0 %v2792, 18
      %v2861 = vpop.permute.xlu0 %2860
      %2862 = vrot.lane.b32.xlu0 %v2793, 18
      %v2863 = vpop.permute.xlu0 %2862
      %2864 = vrot.lane.b32.xlu0 %v2794, 18
      %v2865 = vpop.permute.xlu0 %2864
      %2866 = vrot.lane.b32.xlu0 %v2795, 18
      %v2867 = vpop.permute.xlu0 %2866
      %2868 = vrot.lane.b32.xlu0 %v2796, 18
      %v2869 = vpop.permute.xlu0 %2868
      %2870 = vrot.lane.b32.xlu0 %v2797, 18
      %v2871 = vpop.permute.xlu0 %2870
      %2872 = vrot.lane.b32.xlu0 %v2798, 18
      %v2873 = vpop.permute.xlu0 %2872
      %2874 = vrot.lane.b32.xlu0 %v2799, 18
      %v2875 = vpop.permute.xlu0 %2874
      %2876 = vrot.lane.b32.xlu0 %v2800, 18
      %v2877 = vpop.permute.xlu0 %2876
      %2878 = vrot.lane.b32.xlu0 %v2801, 18
      %v2879 = vpop.permute.xlu0 %2878
      %2880 = vrot.lane.b32.xlu0 %v2802, 18
      %v2881 = vpop.permute.xlu0 %2880
      %2882 = vrot.lane.b32.xlu0 %v2803, 18
      %v2883 = vpop.permute.xlu0 %2882
      %2884 = vrot.lane.b32.xlu0 %v2804, 18
      %v2885 = vpop.permute.xlu0 %2884
      %2886 = vrot.lane.b32.xlu0 %v2805, 18
      %v2887 = vpop.permute.xlu0 %2886
      %2888 = vrot.lane.b32.xlu0 %v2806, 18
      %v2889 = vpop.permute.xlu0 %2888
      %2890 = vrot.lane.b32.xlu0 %v2807, 18
      %v2891 = vpop.permute.xlu0 %2890
      %2892 = vrot.lane.b32.xlu0 %v2808, 18
      %v2893 = vpop.permute.xlu0 %2892
      %2894 = vrot.lane.b32.xlu0 %v2809, 18
      %v2895 = vpop.permute.xlu0 %2894
      %2896 = vrot.lane.b32.xlu0 %v2810, 18
      %v2897 = vpop.permute.xlu0 %2896
      %2898 = vrot.lane.b32.xlu0 %v2811, 18
      %v2899 = vpop.permute.xlu0 %2898
      %2900 = vrot.lane.b32.xlu0 %v2812, 18
      %v2901 = vpop.permute.xlu0 %2900
      %2902 = vrot.lane.b32.xlu0 %v2813, 18
      %v2903 = vpop.permute.xlu0 %2902
      %2904 = vrot.lane.b32.xlu0 %v2814, 18
      %v2905 = vpop.permute.xlu0 %2904
      %2906 = vrot.lane.b32.xlu0 %v2815, 18
      %v2907 = vpop.permute.xlu0 %2906
      %2908 = vrot.lane.b32.xlu0 %v2816, 18
      %v2909 = vpop.permute.xlu0 %2908
      %2910 = vrot.lane.b32.xlu0 %v2817, 18
      %v2911 = vpop.permute.xlu0 %2910
      %2912 = vrot.lane.b32.xlu0 %v2818, 18
      %v2913 = vpop.permute.xlu0 %2912
      %2914 = vrot.lane.b32.xlu0 %v2819, 18
      %v2915 = vpop.permute.xlu0 %2914
      %vm2948 = vcmask 167056
      %2949 = vst.msk [vmem:[#allocation3] sm:$0xf] %vm2948, %v2853
      %2950 = vst.msk [vmem:[#allocation3 + $0x4] sm:$0xf] %vm2948, %v2855
      %2951 = vst.msk [vmem:[#allocation3 + $0x8] sm:$0xf] %vm2948, %v2857
      %2952 = vst.msk [vmem:[#allocation3 + $0xc] sm:$0xf] %vm2948, %v2859
      %2953 = vst.msk [vmem:[#allocation3 + $0x10] sm:$0xf] %vm2948, %v2861
      %2954 = vst.msk [vmem:[#allocation3 + $0x14] sm:$0xf] %vm2948, %v2863
      %2955 = vst.msk [vmem:[#allocation3 + $0x18] sm:$0xf] %vm2948, %v2865
      %2956 = vst.msk [vmem:[#allocation3 + $0x1c] sm:$0xf] %vm2948, %v2867
      %2957 = vst.msk [vmem:[#allocation3 + $0x20] sm:$0xf] %vm2948, %v2869
      %2958 = vst.msk [vmem:[#allocation3 + $0x24] sm:$0xf] %vm2948, %v2871
      %2959 = vst.msk [vmem:[#allocation3 + $0x28] sm:$0xf] %vm2948, %v2873
      %2960 = vst.msk [vmem:[#allocation3 + $0x2c] sm:$0xf] %vm2948, %v2875
      %2961 = vst.msk [vmem:[#allocation3 + $0x30] sm:$0xf] %vm2948, %v2877
      %2962 = vst.msk [vmem:[#allocation3 + $0x34] sm:$0xf] %vm2948, %v2879
      %2963 = vst.msk [vmem:[#allocation3 + $0x38] sm:$0xf] %vm2948, %v2881
      %2964 = vst.msk [vmem:[#allocation3 + $0x3c] sm:$0xf] %vm2948, %v2883
      %2965 = vst.msk [vmem:[#allocation3 + $0x40] sm:$0xf] %vm2948, %v2885
      %2966 = vst.msk [vmem:[#allocation3 + $0x44] sm:$0xf] %vm2948, %v2887
      %2967 = vst.msk [vmem:[#allocation3 + $0x48] sm:$0xf] %vm2948, %v2889
      %2968 = vst.msk [vmem:[#allocation3 + $0x4c] sm:$0xf] %vm2948, %v2891
      %2969 = vst.msk [vmem:[#allocation3 + $0x50] sm:$0xf] %vm2948, %v2893
      %2970 = vst.msk [vmem:[#allocation3 + $0x54] sm:$0xf] %vm2948, %v2895
      %2971 = vst.msk [vmem:[#allocation3 + $0x58] sm:$0xf] %vm2948, %v2897
      %2972 = vst.msk [vmem:[#allocation3 + $0x5c] sm:$0xf] %vm2948, %v2899
      %2973 = vst.msk [vmem:[#allocation3 + $0x60] sm:$0xf] %vm2948, %v2901
      %2974 = vst.msk [vmem:[#allocation3 + $0x64] sm:$0xf] %vm2948, %v2903
      %2975 = vst.msk [vmem:[#allocation3 + $0x68] sm:$0xf] %vm2948, %v2905
      %2976 = vst.msk [vmem:[#allocation3 + $0x6c] sm:$0xf] %vm2948, %v2907
      %2977 = vst.msk [vmem:[#allocation3 + $0x70] sm:$0xf] %vm2948, %v2909
      %2978 = vst.msk [vmem:[#allocation3 + $0x74] sm:$0xf] %vm2948, %v2911
      %2979 = vst.msk [vmem:[#allocation3 + $0x78] sm:$0xf] %vm2948, %v2913
      %2980 = vst.msk [vmem:[#allocation3 + $0x7c] sm:$0xf] %vm2948, %v2915
      %v2981 = vld [vmem:[%s2787] sm:$0xf]
      %v2982 = vld [vmem:[%s2787 + $0x4] sm:$0xf]
      %v2983 = vld [vmem:[%s2787 + $0x8] sm:$0x1]
      %v2984 = vld [vmem:[%s2787 + $0xc] sm:$0xf]
      %v2985 = vld [vmem:[%s2787 + $0x10] sm:$0xf]
      %v2986 = vld [vmem:[%s2787 + $0x14] sm:$0x1]
      %v2987 = vld [vmem:[%s2787 + $0x18] sm:$0xf]
      %v2988 = vld [vmem:[%s2787 + $0x1c] sm:$0xf]
      %v2989 = vld [vmem:[%s2787 + $0x20] sm:$0x1]
      %v2990 = vld [vmem:[%s2787 + $0x24] sm:$0xf]
      %v2991 = vld [vmem:[%s2787 + $0x28] sm:$0xf]
      %v2992 = vld [vmem:[%s2787 + $0x2c] sm:$0x1]
      %v2993 = vld [vmem:[%s2787 + $0x30] sm:$0xf]
      %v2994 = vld [vmem:[%s2787 + $0x34] sm:$0xf]
      %v2995 = vld [vmem:[%s2787 + $0x38] sm:$0x1]
      %v2996 = vld [vmem:[%s2787 + $0x3c] sm:$0xf]
      %v2997 = vld [vmem:[%s2787 + $0x40] sm:$0xf]
      %v2998 = vld [vmem:[%s2787 + $0x44] sm:$0x1]
      %v2999 = vld [vmem:[%s2787 + $0x48] sm:$0xf]
      %v3000 = vld [vmem:[%s2787 + $0x4c] sm:$0xf]
      %v3001 = vld [vmem:[%s2787 + $0x50] sm:$0x1]
      %v3002 = vld [vmem:[%s2787 + $0x54] sm:$0xf]
      %v3003 = vld [vmem:[%s2787 + $0x58] sm:$0xf]
      %v3004 = vld [vmem:[%s2787 + $0x5c] sm:$0x1]
      %v3005 = vld [vmem:[%s2787 + $0x60] sm:$0xf]
      %v3006 = vld [vmem:[%s2787 + $0x64] sm:$0xf]
      %v3007 = vld [vmem:[%s2787 + $0x68] sm:$0x1]
      %v3008 = vld [vmem:[%s2787 + $0x6c] sm:$0xf]
      %v3009 = vld [vmem:[%s2787 + $0x70] sm:$0xf]
      %v3010 = vld [vmem:[%s2787 + $0x74] sm:$0x1]
      %v3011 = vld [vmem:[%s2787 + $0x78] sm:$0xf]
      %v3012 = vld [vmem:[%s2787 + $0x7c] sm:$0xf]
      %v3013 = vld [vmem:[%s2787 + $0x80] sm:$0x1]
      %v3014 = vld [vmem:[%s2787 + $0x84] sm:$0xf]
      %v3015 = vld [vmem:[%s2787 + $0x88] sm:$0xf]
      %v3016 = vld [vmem:[%s2787 + $0x8c] sm:$0x1]
      %v3017 = vld [vmem:[%s2787 + $0x90] sm:$0xf]
      %v3018 = vld [vmem:[%s2787 + $0x94] sm:$0xf]
      %v3019 = vld [vmem:[%s2787 + $0x98] sm:$0x1]
      %v3020 = vld [vmem:[%s2787 + $0x9c] sm:$0xf]
      %v3021 = vld [vmem:[%s2787 + $0xa0] sm:$0xf]
      %v3022 = vld [vmem:[%s2787 + $0xa4] sm:$0x1]
      %v3023 = vld [vmem:[%s2787 + $0xa8] sm:$0xf]
      %v3024 = vld [vmem:[%s2787 + $0xac] sm:$0xf]
      %v3025 = vld [vmem:[%s2787 + $0xb0] sm:$0x1]
      %v3026 = vld [vmem:[%s2787 + $0xb4] sm:$0xf]
      %v3027 = vld [vmem:[%s2787 + $0xb8] sm:$0xf]
      %v3028 = vld [vmem:[%s2787 + $0xbc] sm:$0x1]
      %v3030 = vshrl.u32 %v2981, 16
      %v3032 = vrot.slane %v3030, 4
      %v3033 = vshll.u32 %v2981, 16
      %v3035 = vrot.slane %v3033, 5
      %v3036 = vor.u32 %v3032, %v3035
      %v3037 = vrot.slane %v3036, 4
      %v3039 = vshll.u32 %v2982, 16
      %v3041 = vrot.slane %v3039, 5
      %v3042 = vsel %vm842, %v3037, %v3041
      %v3043 = vshrl.u32 %v2982, 16
      %v3045 = vrot.slane %v3043, 4
      %v3046 = vor.u32 %v3045, %v3041
      %v3047 = vrot.slane %v3046, 4
      %v3049 = vshll.u32 %v2983, 16
      %v3051 = vrot.slane %v3049, 5
      %v3052 = vsel %vm842, %v3047, %v3051
      %v3054 = vshrl.u32 %v2984, 16
      %v3056 = vrot.slane %v3054, 4
      %v3057 = vshll.u32 %v2984, 16
      %v3059 = vrot.slane %v3057, 5
      %v3060 = vor.u32 %v3056, %v3059
      %v3061 = vrot.slane %v3060, 4
      %v3063 = vshll.u32 %v2985, 16
      %v3065 = vrot.slane %v3063, 5
      %v3066 = vsel %vm842, %v3061, %v3065
      %v3067 = vshrl.u32 %v2985, 16
      %v3069 = vrot.slane %v3067, 4
      %v3070 = vor.u32 %v3069, %v3065
      %v3071 = vrot.slane %v3070, 4
      %v3073 = vshll.u32 %v2986, 16
      %v3075 = vrot.slane %v3073, 5
      %v3076 = vsel %vm842, %v3071, %v3075
      %v3078 = vshrl.u32 %v2987, 16
      %v3080 = vrot.slane %v3078, 4
      %v3081 = vshll.u32 %v2987, 16
      %v3083 = vrot.slane %v3081, 5
      %v3084 = vor.u32 %v3080, %v3083
      %v3085 = vrot.slane %v3084, 4
      %v3087 = vshll.u32 %v2988, 16
      %v3089 = vrot.slane %v3087, 5
      %v3090 = vsel %vm842, %v3085, %v3089
      %v3091 = vshrl.u32 %v2988, 16
      %v3093 = vrot.slane %v3091, 4
      %v3094 = vor.u32 %v3093, %v3089
      %v3095 = vrot.slane %v3094, 4
      %v3097 = vshll.u32 %v2989, 16
      %v3099 = vrot.slane %v3097, 5
      %v3100 = vsel %vm842, %v3095, %v3099
      %v3102 = vshrl.u32 %v2990, 16
      %v3104 = vrot.slane %v3102, 4
      %v3105 = vshll.u32 %v2990, 16
      %v3107 = vrot.slane %v3105, 5
      %v3108 = vor.u32 %v3104, %v3107
      %v3109 = vrot.slane %v3108, 4
      %v3111 = vshll.u32 %v2991, 16
      %v3113 = vrot.slane %v3111, 5
      %v3114 = vsel %vm842, %v3109, %v3113
      %v3115 = vshrl.u32 %v2991, 16
      %v3117 = vrot.slane %v3115, 4
      %v3118 = vor.u32 %v3117, %v3113
      %v3119 = vrot.slane %v3118, 4
      %v3121 = vshll.u32 %v2992, 16
      %v3123 = vrot.slane %v3121, 5
      %v3124 = vsel %vm842, %v3119, %v3123
      %v3126 = vshrl.u32 %v2993, 16
      %v3128 = vrot.slane %v3126, 4
      %v3129 = vshll.u32 %v2993, 16
      %v3131 = vrot.slane %v3129, 5
      %v3132 = vor.u32 %v3128, %v3131
      %v3133 = vrot.slane %v3132, 4
      %v3135 = vshll.u32 %v2994, 16
      %v3137 = vrot.slane %v3135, 5
      %v3138 = vsel %vm842, %v3133, %v3137
      %v3139 = vshrl.u32 %v2994, 16
      %v3141 = vrot.slane %v3139, 4
      %v3142 = vor.u32 %v3141, %v3137
      %v3143 = vrot.slane %v3142, 4
      %v3145 = vshll.u32 %v2995, 16
      %v3147 = vrot.slane %v3145, 5
      %v3148 = vsel %vm842, %v3143, %v3147
      %v3150 = vshrl.u32 %v2996, 16
      %v3152 = vrot.slane %v3150, 4
      %v3153 = vshll.u32 %v2996, 16
      %v3155 = vrot.slane %v3153, 5
      %v3156 = vor.u32 %v3152, %v3155
      %v3157 = vrot.slane %v3156, 4
      %v3159 = vshll.u32 %v2997, 16
      %v3161 = vrot.slane %v3159, 5
      %v3162 = vsel %vm842, %v3157, %v3161
      %v3163 = vshrl.u32 %v2997, 16
      %v3165 = vrot.slane %v3163, 4
      %v3166 = vor.u32 %v3165, %v3161
      %v3167 = vrot.slane %v3166, 4
      %v3169 = vshll.u32 %v2998, 16
      %v3171 = vrot.slane %v3169, 5
      %v3172 = vsel %vm842, %v3167, %v3171
      %v3174 = vshrl.u32 %v2999, 16
      %v3176 = vrot.slane %v3174, 4
      %v3177 = vshll.u32 %v2999, 16
      %v3179 = vrot.slane %v3177, 5
      %v3180 = vor.u32 %v3176, %v3179
      %v3181 = vrot.slane %v3180, 4
      %v3183 = vshll.u32 %v3000, 16
      %v3185 = vrot.slane %v3183, 5
      %v3186 = vsel %vm842, %v3181, %v3185
      %v3187 = vshrl.u32 %v3000, 16
      %v3189 = vrot.slane %v3187, 4
      %v3190 = vor.u32 %v3189, %v3185
      %v3191 = vrot.slane %v3190, 4
      %v3193 = vshll.u32 %v3001, 16
      %v3195 = vrot.slane %v3193, 5
      %v3196 = vsel %vm842, %v3191, %v3195
      %v3198 = vshrl.u32 %v3002, 16
      %v3200 = vrot.slane %v3198, 4
      %v3201 = vshll.u32 %v3002, 16
      %v3203 = vrot.slane %v3201, 5
      %v3204 = vor.u32 %v3200, %v3203
      %v3205 = vrot.slane %v3204, 4
      %v3207 = vshll.u32 %v3003, 16
      %v3209 = vrot.slane %v3207, 5
      %v3210 = vsel %vm842, %v3205, %v3209
      %v3211 = vshrl.u32 %v3003, 16
      %v3213 = vrot.slane %v3211, 4
      %v3214 = vor.u32 %v3213, %v3209
      %v3215 = vrot.slane %v3214, 4
      %v3217 = vshll.u32 %v3004, 16
      %v3219 = vrot.slane %v3217, 5
      %v3220 = vsel %vm842, %v3215, %v3219
      %v3222 = vshrl.u32 %v3005, 16
      %v3224 = vrot.slane %v3222, 4
      %v3225 = vshll.u32 %v3005, 16
      %v3227 = vrot.slane %v3225, 5
      %v3228 = vor.u32 %v3224, %v3227
      %v3229 = vrot.slane %v3228, 4
      %v3231 = vshll.u32 %v3006, 16
      %v3233 = vrot.slane %v3231, 5
      %v3234 = vsel %vm842, %v3229, %v3233
      %v3235 = vshrl.u32 %v3006, 16
      %v3237 = vrot.slane %v3235, 4
      %v3238 = vor.u32 %v3237, %v3233
      %v3239 = vrot.slane %v3238, 4
      %v3241 = vshll.u32 %v3007, 16
      %v3243 = vrot.slane %v3241, 5
      %v3244 = vsel %vm842, %v3239, %v3243
      %v3246 = vshrl.u32 %v3008, 16
      %v3248 = vrot.slane %v3246, 4
      %v3249 = vshll.u32 %v3008, 16
      %v3251 = vrot.slane %v3249, 5
      %v3252 = vor.u32 %v3248, %v3251
      %v3253 = vrot.slane %v3252, 4
      %v3255 = vshll.u32 %v3009, 16
      %v3257 = vrot.slane %v3255, 5
      %v3258 = vsel %vm842, %v3253, %v3257
      %v3259 = vshrl.u32 %v3009, 16
      %v3261 = vrot.slane %v3259, 4
      %v3262 = vor.u32 %v3261, %v3257
      %v3263 = vrot.slane %v3262, 4
      %v3265 = vshll.u32 %v3010, 16
      %v3267 = vrot.slane %v3265, 5
      %v3268 = vsel %vm842, %v3263, %v3267
      %v3270 = vshrl.u32 %v3011, 16
      %v3272 = vrot.slane %v3270, 4
      %v3273 = vshll.u32 %v3011, 16
      %v3275 = vrot.slane %v3273, 5
      %v3276 = vor.u32 %v3272, %v3275
      %v3277 = vrot.slane %v3276, 4
      %v3279 = vshll.u32 %v3012, 16
      %v3281 = vrot.slane %v3279, 5
      %v3282 = vsel %vm842, %v3277, %v3281
      %v3283 = vshrl.u32 %v3012, 16
      %v3285 = vrot.slane %v3283, 4
      %v3286 = vor.u32 %v3285, %v3281
      %v3287 = vrot.slane %v3286, 4
      %v3289 = vshll.u32 %v3013, 16
      %v3291 = vrot.slane %v3289, 5
      %v3292 = vsel %vm842, %v3287, %v3291
      %v3294 = vshrl.u32 %v3014, 16
      %v3296 = vrot.slane %v3294, 4
      %v3297 = vshll.u32 %v3014, 16
      %v3299 = vrot.slane %v3297, 5
      %v3300 = vor.u32 %v3296, %v3299
      %v3301 = vrot.slane %v3300, 4
      %v3303 = vshll.u32 %v3015, 16
      %v3305 = vrot.slane %v3303, 5
      %v3306 = vsel %vm842, %v3301, %v3305
      %v3307 = vshrl.u32 %v3015, 16
      %v3309 = vrot.slane %v3307, 4
      %v3310 = vor.u32 %v3309, %v3305
      %v3311 = vrot.slane %v3310, 4
      %v3313 = vshll.u32 %v3016, 16
      %v3315 = vrot.slane %v3313, 5
      %v3316 = vsel %vm842, %v3311, %v3315
      %v3318 = vshrl.u32 %v3017, 16
      %v3320 = vrot.slane %v3318, 4
      %v3321 = vshll.u32 %v3017, 16
      %v3323 = vrot.slane %v3321, 5
      %v3324 = vor.u32 %v3320, %v3323
      %v3325 = vrot.slane %v3324, 4
      %v3327 = vshll.u32 %v3018, 16
      %v3329 = vrot.slane %v3327, 5
      %v3330 = vsel %vm842, %v3325, %v3329
      %v3331 = vshrl.u32 %v3018, 16
      %v3333 = vrot.slane %v3331, 4
      %v3334 = vor.u32 %v3333, %v3329
      %v3335 = vrot.slane %v3334, 4
      %v3337 = vshll.u32 %v3019, 16
      %v3339 = vrot.slane %v3337, 5
      %v3340 = vsel %vm842, %v3335, %v3339
      %v3342 = vshrl.u32 %v3020, 16
      %v3344 = vrot.slane %v3342, 4
      %v3345 = vshll.u32 %v3020, 16
      %v3347 = vrot.slane %v3345, 5
      %v3348 = vor.u32 %v3344, %v3347
      %v3349 = vrot.slane %v3348, 4
      %v3351 = vshll.u32 %v3021, 16
      %v3353 = vrot.slane %v3351, 5
      %v3354 = vsel %vm842, %v3349, %v3353
      %v3355 = vshrl.u32 %v3021, 16
      %v3357 = vrot.slane %v3355, 4
      %v3358 = vor.u32 %v3357, %v3353
      %v3359 = vrot.slane %v3358, 4
      %v3361 = vshll.u32 %v3022, 16
      %v3363 = vrot.slane %v3361, 5
      %v3364 = vsel %vm842, %v3359, %v3363
      %v3366 = vshrl.u32 %v3023, 16
      %v3368 = vrot.slane %v3366, 4
      %v3369 = vshll.u32 %v3023, 16
      %v3371 = vrot.slane %v3369, 5
      %v3372 = vor.u32 %v3368, %v3371
      %v3373 = vrot.slane %v3372, 4
      %v3375 = vshll.u32 %v3024, 16
      %v3377 = vrot.slane %v3375, 5
      %v3378 = vsel %vm842, %v3373, %v3377
      %v3379 = vshrl.u32 %v3024, 16
      %v3381 = vrot.slane %v3379, 4
      %v3382 = vor.u32 %v3381, %v3377
      %v3383 = vrot.slane %v3382, 4
      %v3385 = vshll.u32 %v3025, 16
      %v3387 = vrot.slane %v3385, 5
      %v3388 = vsel %vm842, %v3383, %v3387
      %v3390 = vshrl.u32 %v3026, 16
      %v3392 = vrot.slane %v3390, 4
      %v3393 = vshll.u32 %v3026, 16
      %v3395 = vrot.slane %v3393, 5
      %v3396 = vor.u32 %v3392, %v3395
      %v3397 = vrot.slane %v3396, 4
      %v3399 = vshll.u32 %v3027, 16
      %v3401 = vrot.slane %v3399, 5
      %v3402 = vsel %vm842, %v3397, %v3401
      %v3403 = vshrl.u32 %v3027, 16
      %v3405 = vrot.slane %v3403, 4
      %v3406 = vor.u32 %v3405, %v3401
      %v3407 = vrot.slane %v3406, 4
      %v3409 = vshll.u32 %v3028, 16
      %v3411 = vrot.slane %v3409, 5
      %v3412 = vsel %vm842, %v3407, %v3411
      %3413 = vrot.lane.b32.xlu0 %v3042, 21
      %v3414 = vpop.permute.xlu0 %3413
      %3415 = vrot.lane.b32.xlu0 %v3052, 21
      %v3416 = vpop.permute.xlu0 %3415
      %3417 = vrot.lane.b32.xlu0 %v3066, 21
      %v3418 = vpop.permute.xlu0 %3417
      %3419 = vrot.lane.b32.xlu0 %v3076, 21
      %v3420 = vpop.permute.xlu0 %3419
      %3421 = vrot.lane.b32.xlu0 %v3090, 21
      %v3422 = vpop.permute.xlu0 %3421
      %3423 = vrot.lane.b32.xlu0 %v3100, 21
      %v3424 = vpop.permute.xlu0 %3423
      %3425 = vrot.lane.b32.xlu0 %v3114, 21
      %v3426 = vpop.permute.xlu0 %3425
      %3427 = vrot.lane.b32.xlu0 %v3124, 21
      %v3428 = vpop.permute.xlu0 %3427
      %3429 = vrot.lane.b32.xlu0 %v3138, 21
      %v3430 = vpop.permute.xlu0 %3429
      %3431 = vrot.lane.b32.xlu0 %v3148, 21
      %v3432 = vpop.permute.xlu0 %3431
      %3433 = vrot.lane.b32.xlu0 %v3162, 21
      %v3434 = vpop.permute.xlu0 %3433
      %3435 = vrot.lane.b32.xlu0 %v3172, 21
      %v3436 = vpop.permute.xlu0 %3435
      %3437 = vrot.lane.b32.xlu0 %v3186, 21
      %v3438 = vpop.permute.xlu0 %3437
      %3439 = vrot.lane.b32.xlu0 %v3196, 21
      %v3440 = vpop.permute.xlu0 %3439
      %3441 = vrot.lane.b32.xlu0 %v3210, 21
      %v3442 = vpop.permute.xlu0 %3441
      %3443 = vrot.lane.b32.xlu0 %v3220, 21
      %v3444 = vpop.permute.xlu0 %3443
      %3445 = vrot.lane.b32.xlu0 %v3234, 21
      %v3446 = vpop.permute.xlu0 %3445
      %3447 = vrot.lane.b32.xlu0 %v3244, 21
      %v3448 = vpop.permute.xlu0 %3447
      %3449 = vrot.lane.b32.xlu0 %v3258, 21
      %v3450 = vpop.permute.xlu0 %3449
      %3451 = vrot.lane.b32.xlu0 %v3268, 21
      %v3452 = vpop.permute.xlu0 %3451
      %3453 = vrot.lane.b32.xlu0 %v3282, 21
      %v3454 = vpop.permute.xlu0 %3453
      %3455 = vrot.lane.b32.xlu0 %v3292, 21
      %v3456 = vpop.permute.xlu0 %3455
      %3457 = vrot.lane.b32.xlu0 %v3306, 21
      %v3458 = vpop.permute.xlu0 %3457
      %3459 = vrot.lane.b32.xlu0 %v3316, 21
      %v3460 = vpop.permute.xlu0 %3459
      %3461 = vrot.lane.b32.xlu0 %v3330, 21
      %v3462 = vpop.permute.xlu0 %3461
      %3463 = vrot.lane.b32.xlu0 %v3340, 21
      %v3464 = vpop.permute.xlu0 %3463
      %3465 = vrot.lane.b32.xlu0 %v3354, 21
      %v3466 = vpop.permute.xlu0 %3465
      %3467 = vrot.lane.b32.xlu0 %v3364, 21
      %v3468 = vpop.permute.xlu0 %3467
      %3469 = vrot.lane.b32.xlu0 %v3378, 21
      %v3470 = vpop.permute.xlu0 %3469
      %3471 = vrot.lane.b32.xlu0 %v3388, 21
      %v3472 = vpop.permute.xlu0 %3471
      %3473 = vrot.lane.b32.xlu0 %v3402, 21
      %v3474 = vpop.permute.xlu0 %3473
      %3475 = vrot.lane.b32.xlu0 %v3412, 21
      %v3476 = vpop.permute.xlu0 %3475
      %vm3509 = vcmask 191656
      %3510 = vst.msk [vmem:[#allocation3] sm:$0xf] %vm3509, %v3414
      %3511 = vst.msk [vmem:[#allocation3 + $0x4] sm:$0xf] %vm3509, %v3416
      %3512 = vst.msk [vmem:[#allocation3 + $0x8] sm:$0xf] %vm3509, %v3418
      %3513 = vst.msk [vmem:[#allocation3 + $0xc] sm:$0xf] %vm3509, %v3420
      %3514 = vst.msk [vmem:[#allocation3 + $0x10] sm:$0xf] %vm3509, %v3422
      %3515 = vst.msk [vmem:[#allocation3 + $0x14] sm:$0xf] %vm3509, %v3424
      %3516 = vst.msk [vmem:[#allocation3 + $0x18] sm:$0xf] %vm3509, %v3426
      %3517 = vst.msk [vmem:[#allocation3 + $0x1c] sm:$0xf] %vm3509, %v3428
      %3518 = vst.msk [vmem:[#allocation3 + $0x20] sm:$0xf] %vm3509, %v3430
      %3519 = vst.msk [vmem:[#allocation3 + $0x24] sm:$0xf] %vm3509, %v3432
      %3520 = vst.msk [vmem:[#allocation3 + $0x28] sm:$0xf] %vm3509, %v3434
      %3521 = vst.msk [vmem:[#allocation3 + $0x2c] sm:$0xf] %vm3509, %v3436
      %3522 = vst.msk [vmem:[#allocation3 + $0x30] sm:$0xf] %vm3509, %v3438
      %3523 = vst.msk [vmem:[#allocation3 + $0x34] sm:$0xf] %vm3509, %v3440
      %3524 = vst.msk [vmem:[#allocation3 + $0x38] sm:$0xf] %vm3509, %v3442
      %3525 = vst.msk [vmem:[#allocation3 + $0x3c] sm:$0xf] %vm3509, %v3444
      %3526 = vst.msk [vmem:[#allocation3 + $0x40] sm:$0xf] %vm3509, %v3446
      %3527 = vst.msk [vmem:[#allocation3 + $0x44] sm:$0xf] %vm3509, %v3448
      %3528 = vst.msk [vmem:[#allocation3 + $0x48] sm:$0xf] %vm3509, %v3450
      %3529 = vst.msk [vmem:[#allocation3 + $0x4c] sm:$0xf] %vm3509, %v3452
      %3530 = vst.msk [vmem:[#allocation3 + $0x50] sm:$0xf] %vm3509, %v3454
      %3531 = vst.msk [vmem:[#allocation3 + $0x54] sm:$0xf] %vm3509, %v3456
      %3532 = vst.msk [vmem:[#allocation3 + $0x58] sm:$0xf] %vm3509, %v3458
      %3533 = vst.msk [vmem:[#allocation3 + $0x5c] sm:$0xf] %vm3509, %v3460
      %3534 = vst.msk [vmem:[#allocation3 + $0x60] sm:$0xf] %vm3509, %v3462
      %3535 = vst.msk [vmem:[#allocation3 + $0x64] sm:$0xf] %vm3509, %v3464
      %3536 = vst.msk [vmem:[#allocation3 + $0x68] sm:$0xf] %vm3509, %v3466
      %3537 = vst.msk [vmem:[#allocation3 + $0x6c] sm:$0xf] %vm3509, %v3468
      %3538 = vst.msk [vmem:[#allocation3 + $0x70] sm:$0xf] %vm3509, %v3470
      %3539 = vst.msk [vmem:[#allocation3 + $0x74] sm:$0xf] %vm3509, %v3472
      %3540 = vst.msk [vmem:[#allocation3 + $0x78] sm:$0xf] %vm3509, %v3474
      %3541 = vst.msk [vmem:[#allocation3 + $0x7c] sm:$0xf] %vm3509, %v3476
      %v3542 = vld [vmem:[%s2787] sm:$0xe]
      %v3543 = vld [vmem:[%s2787 + $0x4] sm:$0xf]
      %v3544 = vld [vmem:[%s2787 + $0x8] sm:$0x1]
      %v3545 = vld [vmem:[%s2787 + $0xc] sm:$0xe]
      %v3546 = vld [vmem:[%s2787 + $0x10] sm:$0xf]
      %v3547 = vld [vmem:[%s2787 + $0x14] sm:$0x1]
      %v3548 = vld [vmem:[%s2787 + $0x18] sm:$0xe]
      %v3549 = vld [vmem:[%s2787 + $0x1c] sm:$0xf]
      %v3550 = vld [vmem:[%s2787 + $0x20] sm:$0x1]
      %v3551 = vld [vmem:[%s2787 + $0x24] sm:$0xe]
      %v3552 = vld [vmem:[%s2787 + $0x28] sm:$0xf]
      %v3553 = vld [vmem:[%s2787 + $0x2c] sm:$0x1]
      %v3554 = vld [vmem:[%s2787 + $0x30] sm:$0xe]
      %v3555 = vld [vmem:[%s2787 + $0x34] sm:$0xf]
      %v3556 = vld [vmem:[%s2787 + $0x38] sm:$0x1]
      %v3557 = vld [vmem:[%s2787 + $0x3c] sm:$0xe]
      %v3558 = vld [vmem:[%s2787 + $0x40] sm:$0xf]
      %v3559 = vld [vmem:[%s2787 + $0x44] sm:$0x1]
      %v3560 = vld [vmem:[%s2787 + $0x48] sm:$0xe]
      %v3561 = vld [vmem:[%s2787 + $0x4c] sm:$0xf]
      %v3562 = vld [vmem:[%s2787 + $0x50] sm:$0x1]
      %v3563 = vld [vmem:[%s2787 + $0x54] sm:$0xe]
      %v3564 = vld [vmem:[%s2787 + $0x58] sm:$0xf]
      %v3565 = vld [vmem:[%s2787 + $0x5c] sm:$0x1]
      %v3566 = vld [vmem:[%s2787 + $0x60] sm:$0xe]
      %v3567 = vld [vmem:[%s2787 + $0x64] sm:$0xf]
      %v3568 = vld [vmem:[%s2787 + $0x68] sm:$0x1]
      %v3569 = vld [vmem:[%s2787 + $0x6c] sm:$0xe]
      %v3570 = vld [vmem:[%s2787 + $0x70] sm:$0xf]
      %v3571 = vld [vmem:[%s2787 + $0x74] sm:$0x1]
      %v3572 = vld [vmem:[%s2787 + $0x78] sm:$0xe]
      %v3573 = vld [vmem:[%s2787 + $0x7c] sm:$0xf]
      %v3574 = vld [vmem:[%s2787 + $0x80] sm:$0x1]
      %v3575 = vld [vmem:[%s2787 + $0x84] sm:$0xe]
      %v3576 = vld [vmem:[%s2787 + $0x88] sm:$0xf]
      %v3577 = vld [vmem:[%s2787 + $0x8c] sm:$0x1]
      %v3578 = vld [vmem:[%s2787 + $0x90] sm:$0xe]
      %v3579 = vld [vmem:[%s2787 + $0x94] sm:$0xf]
      %v3580 = vld [vmem:[%s2787 + $0x98] sm:$0x1]
      %v3581 = vld [vmem:[%s2787 + $0x9c] sm:$0xe]
      %v3582 = vld [vmem:[%s2787 + $0xa0] sm:$0xf]
      %v3583 = vld [vmem:[%s2787 + $0xa4] sm:$0x1]
      %v3584 = vld [vmem:[%s2787 + $0xa8] sm:$0xe]
      %v3585 = vld [vmem:[%s2787 + $0xac] sm:$0xf]
      %v3586 = vld [vmem:[%s2787 + $0xb0] sm:$0x1]
      %v3587 = vld [vmem:[%s2787 + $0xb4] sm:$0xe]
      %v3588 = vld [vmem:[%s2787 + $0xb8] sm:$0xf]
      %v3589 = vld [vmem:[%s2787 + $0xbc] sm:$0x1]
      %v3638 = vrot.slane %v3542, 5
      %v3639 = vrot.slane %v3638, 4
      %v3640 = vrot.slane %v3543, 5
      %v3641 = vsel %vm1454, %v3639, %v3640
      %v3642 = vrot.slane %v3640, 4
      %v3643 = vrot.slane %v3544, 5
      %v3644 = vsel %vm1454, %v3642, %v3643
      %v3645 = vrot.slane %v3545, 5
      %v3646 = vrot.slane %v3645, 4
      %v3647 = vrot.slane %v3546, 5
      %v3648 = vsel %vm1454, %v3646, %v3647
      %v3649 = vrot.slane %v3647, 4
      %v3650 = vrot.slane %v3547, 5
      %v3651 = vsel %vm1454, %v3649, %v3650
      %v3652 = vrot.slane %v3548, 5
      %v3653 = vrot.slane %v3652, 4
      %v3654 = vrot.slane %v3549, 5
      %v3655 = vsel %vm1454, %v3653, %v3654
      %v3656 = vrot.slane %v3654, 4
      %v3657 = vrot.slane %v3550, 5
      %v3658 = vsel %vm1454, %v3656, %v3657
      %v3659 = vrot.slane %v3551, 5
      %v3660 = vrot.slane %v3659, 4
      %v3661 = vrot.slane %v3552, 5
      %v3662 = vsel %vm1454, %v3660, %v3661
      %v3663 = vrot.slane %v3661, 4
      %v3664 = vrot.slane %v3553, 5
      %v3665 = vsel %vm1454, %v3663, %v3664
      %v3666 = vrot.slane %v3554, 5
      %v3667 = vrot.slane %v3666, 4
      %v3668 = vrot.slane %v3555, 5
      %v3669 = vsel %vm1454, %v3667, %v3668
      %v3670 = vrot.slane %v3668, 4
      %v3671 = vrot.slane %v3556, 5
      %v3672 = vsel %vm1454, %v3670, %v3671
      %v3673 = vrot.slane %v3557, 5
      %v3674 = vrot.slane %v3673, 4
      %v3675 = vrot.slane %v3558, 5
      %v3676 = vsel %vm1454, %v3674, %v3675
      %v3677 = vrot.slane %v3675, 4
      %v3678 = vrot.slane %v3559, 5
      %v3679 = vsel %vm1454, %v3677, %v3678
      %v3680 = vrot.slane %v3560, 5
      %v3681 = vrot.slane %v3680, 4
      %v3682 = vrot.slane %v3561, 5
      %v3683 = vsel %vm1454, %v3681, %v3682
      %v3684 = vrot.slane %v3682, 4
      %v3685 = vrot.slane %v3562, 5
      %v3686 = vsel %vm1454, %v3684, %v3685
      %v3687 = vrot.slane %v3563, 5
      %v3688 = vrot.slane %v3687, 4
      %v3689 = vrot.slane %v3564, 5
      %v3690 = vsel %vm1454, %v3688, %v3689
      %v3691 = vrot.slane %v3689, 4
      %v3692 = vrot.slane %v3565, 5
      %v3693 = vsel %vm1454, %v3691, %v3692
      %v3694 = vrot.slane %v3566, 5
      %v3695 = vrot.slane %v3694, 4
      %v3696 = vrot.slane %v3567, 5
      %v3697 = vsel %vm1454, %v3695, %v3696
      %v3698 = vrot.slane %v3696, 4
      %v3699 = vrot.slane %v3568, 5
      %v3700 = vsel %vm1454, %v3698, %v3699
      %v3701 = vrot.slane %v3569, 5
      %v3702 = vrot.slane %v3701, 4
      %v3703 = vrot.slane %v3570, 5
      %v3704 = vsel %vm1454, %v3702, %v3703
      %v3705 = vrot.slane %v3703, 4
      %v3706 = vrot.slane %v3571, 5
      %v3707 = vsel %vm1454, %v3705, %v3706
      %v3708 = vrot.slane %v3572, 5
      %v3709 = vrot.slane %v3708, 4
      %v3710 = vrot.slane %v3573, 5
      %v3711 = vsel %vm1454, %v3709, %v3710
      %v3712 = vrot.slane %v3710, 4
      %v3713 = vrot.slane %v3574, 5
      %v3714 = vsel %vm1454, %v3712, %v3713
      %v3715 = vrot.slane %v3575, 5
      %v3716 = vrot.slane %v3715, 4
      %v3717 = vrot.slane %v3576, 5
      %v3718 = vsel %vm1454, %v3716, %v3717
      %v3719 = vrot.slane %v3717, 4
      %v3720 = vrot.slane %v3577, 5
      %v3721 = vsel %vm1454, %v3719, %v3720
      %v3722 = vrot.slane %v3578, 5
      %v3723 = vrot.slane %v3722, 4
      %v3724 = vrot.slane %v3579, 5
      %v3725 = vsel %vm1454, %v3723, %v3724
      %v3726 = vrot.slane %v3724, 4
      %v3727 = vrot.slane %v3580, 5
      %v3728 = vsel %vm1454, %v3726, %v3727
      %v3729 = vrot.slane %v3581, 5
      %v3730 = vrot.slane %v3729, 4
      %v3731 = vrot.slane %v3582, 5
      %v3732 = vsel %vm1454, %v3730, %v3731
      %v3733 = vrot.slane %v3731, 4
      %v3734 = vrot.slane %v3583, 5
      %v3735 = vsel %vm1454, %v3733, %v3734
      %v3736 = vrot.slane %v3584, 5
      %v3737 = vrot.slane %v3736, 4
      %v3738 = vrot.slane %v3585, 5
      %v3739 = vsel %vm1454, %v3737, %v3738
      %v3740 = vrot.slane %v3738, 4
      %v3741 = vrot.slane %v3586, 5
      %v3742 = vsel %vm1454, %v3740, %v3741
      %v3743 = vrot.slane %v3587, 5
      %v3744 = vrot.slane %v3743, 4
      %v3745 = vrot.slane %v3588, 5
      %v3746 = vsel %vm1454, %v3744, %v3745
      %v3747 = vrot.slane %v3745, 4
      %v3748 = vrot.slane %v3589, 5
      %v3749 = vsel %vm1454, %v3747, %v3748
      %3750 = vrot.lane.b32.xlu0 %v3641, 24
      %v3751 = vpop.permute.xlu0 %3750
      %3752 = vrot.lane.b32.xlu0 %v3644, 24
      %v3753 = vpop.permute.xlu0 %3752
      %3754 = vrot.lane.b32.xlu0 %v3648, 24
      %v3755 = vpop.permute.xlu0 %3754
      %3756 = vrot.lane.b32.xlu0 %v3651, 24
      %v3757 = vpop.permute.xlu0 %3756
      %3758 = vrot.lane.b32.xlu0 %v3655, 24
      %v3759 = vpop.permute.xlu0 %3758
      %3760 = vrot.lane.b32.xlu0 %v3658, 24
      %v3761 = vpop.permute.xlu0 %3760
      %3762 = vrot.lane.b32.xlu0 %v3662, 24
      %v3763 = vpop.permute.xlu0 %3762
      %3764 = vrot.lane.b32.xlu0 %v3665, 24
      %v3765 = vpop.permute.xlu0 %3764
      %3766 = vrot.lane.b32.xlu0 %v3669, 24
      %v3767 = vpop.permute.xlu0 %3766
      %3768 = vrot.lane.b32.xlu0 %v3672, 24
      %v3769 = vpop.permute.xlu0 %3768
      %3770 = vrot.lane.b32.xlu0 %v3676, 24
      %v3771 = vpop.permute.xlu0 %3770
      %3772 = vrot.lane.b32.xlu0 %v3679, 24
      %v3773 = vpop.permute.xlu0 %3772
      %3774 = vrot.lane.b32.xlu0 %v3683, 24
      %v3775 = vpop.permute.xlu0 %3774
      %3776 = vrot.lane.b32.xlu0 %v3686, 24
      %v3777 = vpop.permute.xlu0 %3776
      %3778 = vrot.lane.b32.xlu0 %v3690, 24
      %v3779 = vpop.permute.xlu0 %3778
      %3780 = vrot.lane.b32.xlu0 %v3693, 24
      %v3781 = vpop.permute.xlu0 %3780
      %3782 = vrot.lane.b32.xlu0 %v3697, 24
      %v3783 = vpop.permute.xlu0 %3782
      %3784 = vrot.lane.b32.xlu0 %v3700, 24
      %v3785 = vpop.permute.xlu0 %3784
      %3786 = vrot.lane.b32.xlu0 %v3704, 24
      %v3787 = vpop.permute.xlu0 %3786
      %3788 = vrot.lane.b32.xlu0 %v3707, 24
      %v3789 = vpop.permute.xlu0 %3788
      %3790 = vrot.lane.b32.xlu0 %v3711, 24
      %v3791 = vpop.permute.xlu0 %3790
      %3792 = vrot.lane.b32.xlu0 %v3714, 24
      %v3793 = vpop.permute.xlu0 %3792
      %3794 = vrot.lane.b32.xlu0 %v3718, 24
      %v3795 = vpop.permute.xlu0 %3794
      %3796 = vrot.lane.b32.xlu0 %v3721, 24
      %v3797 = vpop.permute.xlu0 %3796
      %3798 = vrot.lane.b32.xlu0 %v3725, 24
      %v3799 = vpop.permute.xlu0 %3798
      %3800 = vrot.lane.b32.xlu0 %v3728, 24
      %v3801 = vpop.permute.xlu0 %3800
      %3802 = vrot.lane.b32.xlu0 %v3732, 24
      %v3803 = vpop.permute.xlu0 %3802
      %3804 = vrot.lane.b32.xlu0 %v3735, 24
      %v3805 = vpop.permute.xlu0 %3804
      %3806 = vrot.lane.b32.xlu0 %v3739, 24
      %v3807 = vpop.permute.xlu0 %3806
      %3808 = vrot.lane.b32.xlu0 %v3742, 24
      %v3809 = vpop.permute.xlu0 %3808
      %3810 = vrot.lane.b32.xlu0 %v3746, 24
      %v3811 = vpop.permute.xlu0 %3810
      %3812 = vrot.lane.b32.xlu0 %v3749, 24
      %v3813 = vpop.permute.xlu0 %3812
      %vm3846 = vcmask 216256
      %3847 = vst.msk [vmem:[#allocation3] sm:$0xf] %vm3846, %v3751
      %3848 = vst.msk [vmem:[#allocation3 + $0x4] sm:$0xf] %vm3846, %v3753
      %3849 = vst.msk [vmem:[#allocation3 + $0x8] sm:$0xf] %vm3846, %v3755
      %3850 = vst.msk [vmem:[#allocation3 + $0xc] sm:$0xf] %vm3846, %v3757
      %3851 = vst.msk [vmem:[#allocation3 + $0x10] sm:$0xf] %vm3846, %v3759
      %3852 = vst.msk [vmem:[#allocation3 + $0x14] sm:$0xf] %vm3846, %v3761
      %3853 = vst.msk [vmem:[#allocation3 + $0x18] sm:$0xf] %vm3846, %v3763
      %3854 = vst.msk [vmem:[#allocation3 + $0x1c] sm:$0xf] %vm3846, %v3765
      %3855 = vst.msk [vmem:[#allocation3 + $0x20] sm:$0xf] %vm3846, %v3767
      %3856 = vst.msk [vmem:[#allocation3 + $0x24] sm:$0xf] %vm3846, %v3769
      %3857 = vst.msk [vmem:[#allocation3 + $0x28] sm:$0xf] %vm3846, %v3771
      %3858 = vst.msk [vmem:[#allocation3 + $0x2c] sm:$0xf] %vm3846, %v3773
      %3859 = vst.msk [vmem:[#allocation3 + $0x30] sm:$0xf] %vm3846, %v3775
      %3860 = vst.msk [vmem:[#allocation3 + $0x34] sm:$0xf] %vm3846, %v3777
      %3861 = vst.msk [vmem:[#allocation3 + $0x38] sm:$0xf] %vm3846, %v3779
      %3862 = vst.msk [vmem:[#allocation3 + $0x3c] sm:$0xf] %vm3846, %v3781
      %3863 = vst.msk [vmem:[#allocation3 + $0x40] sm:$0xf] %vm3846, %v3783
      %3864 = vst.msk [vmem:[#allocation3 + $0x44] sm:$0xf] %vm3846, %v3785
      %3865 = vst.msk [vmem:[#allocation3 + $0x48] sm:$0xf] %vm3846, %v3787
      %3866 = vst.msk [vmem:[#allocation3 + $0x4c] sm:$0xf] %vm3846, %v3789
      %3867 = vst.msk [vmem:[#allocation3 + $0x50] sm:$0xf] %vm3846, %v3791
      %3868 = vst.msk [vmem:[#allocation3 + $0x54] sm:$0xf] %vm3846, %v3793
      %3869 = vst.msk [vmem:[#allocation3 + $0x58] sm:$0xf] %vm3846, %v3795
      %3870 = vst.msk [vmem:[#allocation3 + $0x5c] sm:$0xf] %vm3846, %v3797
      %3871 = vst.msk [vmem:[#allocation3 + $0x60] sm:$0xf] %vm3846, %v3799
      %3872 = vst.msk [vmem:[#allocation3 + $0x64] sm:$0xf] %vm3846, %v3801
      %3873 = vst.msk [vmem:[#allocation3 + $0x68] sm:$0xf] %vm3846, %v3803
      %3874 = vst.msk [vmem:[#allocation3 + $0x6c] sm:$0xf] %vm3846, %v3805
      %3875 = vst.msk [vmem:[#allocation3 + $0x70] sm:$0xf] %vm3846, %v3807
      %3876 = vst.msk [vmem:[#allocation3 + $0x74] sm:$0xf] %vm3846, %v3809
      %3877 = vst.msk [vmem:[#allocation3 + $0x78] sm:$0xf] %vm3846, %v3811
      %3878 = vst.msk [vmem:[#allocation3 + $0x7c] sm:$0xf] %vm3846, %v3813
      %v3879 = vld [vmem:[#allocation3] sm:$0xf]
      %v3880 = vld [vmem:[#allocation3 + $0x4] sm:$0xf]
      %v3881 = vld [vmem:[#allocation3 + $0x8] sm:$0xf]
      %v3882 = vld [vmem:[#allocation3 + $0xc] sm:$0xf]
      %v3883 = vld [vmem:[#allocation3 + $0x10] sm:$0xf]
      %v3884 = vld [vmem:[#allocation3 + $0x14] sm:$0xf]
      %v3885 = vld [vmem:[#allocation3 + $0x18] sm:$0xf]
      %v3886 = vld [vmem:[#allocation3 + $0x1c] sm:$0xf]
      %v3887 = vld [vmem:[#allocation3 + $0x20] sm:$0xf]
      %v3888 = vld [vmem:[#allocation3 + $0x24] sm:$0xf]
      %v3889 = vld [vmem:[#allocation3 + $0x28] sm:$0xf]
      %v3890 = vld [vmem:[#allocation3 + $0x2c] sm:$0xf]
      %v3891 = vld [vmem:[#allocation3 + $0x30] sm:$0xf]
      %v3892 = vld [vmem:[#allocation3 + $0x34] sm:$0xf]
      %v3893 = vld [vmem:[#allocation3 + $0x38] sm:$0xf]
      %v3894 = vld [vmem:[#allocation3 + $0x3c] sm:$0xf]
      %v3895 = vld [vmem:[#allocation3 + $0x40] sm:$0xf]
      %v3896 = vld [vmem:[#allocation3 + $0x44] sm:$0xf]
      %v3897 = vld [vmem:[#allocation3 + $0x48] sm:$0xf]
      %v3898 = vld [vmem:[#allocation3 + $0x4c] sm:$0xf]
      %v3899 = vld [vmem:[#allocation3 + $0x50] sm:$0xf]
      %v3900 = vld [vmem:[#allocation3 + $0x54] sm:$0xf]
      %v3901 = vld [vmem:[#allocation3 + $0x58] sm:$0xf]
      %v3902 = vld [vmem:[#allocation3 + $0x5c] sm:$0xf]
      %v3903 = vld [vmem:[#allocation3 + $0x60] sm:$0xf]
      %v3904 = vld [vmem:[#allocation3 + $0x64] sm:$0xf]
      %v3905 = vld [vmem:[#allocation3 + $0x68] sm:$0xf]
      %v3906 = vld [vmem:[#allocation3 + $0x6c] sm:$0xf]
      %v3907 = vld [vmem:[#allocation3 + $0x70] sm:$0xf]
      %v3908 = vld [vmem:[#allocation3 + $0x74] sm:$0xf]
      %v3909 = vld [vmem:[#allocation3 + $0x78] sm:$0xf]
      %v3910 = vld [vmem:[#allocation3 + $0x7c] sm:$0xf]
      %v3911 = vld [vmem:[%s1] sm:$0xf]
      %v3912 = vld [vmem:[%s1 + $0x4] sm:$0xf]
      %v3913 = vld [vmem:[%s1 + $0x8] sm:$0xf]
      %v3914 = vld [vmem:[%s1 + $0xc] sm:$0x3]
      %v3947 = vunpack.c.l.b16 %v3879
      %v3948 = vunpack.c.l.b16 %v3880
      %v3949 = vunpack.c.l.b16 %v3881
      %v3950 = vunpack.c.l.b16 %v3882
      %v3951 = vunpack.c.l.b16 %v3883
      %v3952 = vunpack.c.l.b16 %v3884
      %v3953 = vunpack.c.l.b16 %v3885
      %v3954 = vunpack.c.l.b16 %v3886
      %v3955 = vunpack.c.l.b16 %v3887
      %v3956 = vunpack.c.l.b16 %v3888
      %v3957 = vunpack.c.l.b16 %v3889
      %v3958 = vunpack.c.l.b16 %v3890
      %v3959 = vunpack.c.l.b16 %v3891
      %v3960 = vunpack.c.l.b16 %v3892
      %v3961 = vunpack.c.l.b16 %v3893
      %v3962 = vunpack.c.l.b16 %v3894
      %v3963 = vunpack.c.l.b16 %v3895
      %v3964 = vunpack.c.l.b16 %v3896
      %v3965 = vunpack.c.l.b16 %v3897
      %v3966 = vunpack.c.l.b16 %v3898
      %v3967 = vunpack.c.l.b16 %v3899
      %v3968 = vunpack.c.l.b16 %v3900
      %v3969 = vunpack.c.l.b16 %v3901
      %v3970 = vunpack.c.l.b16 %v3902
      %v3971 = vunpack.c.l.b16 %v3903
      %v3972 = vunpack.c.l.b16 %v3904
      %v3973 = vunpack.c.l.b16 %v3905
      %v3974 = vunpack.c.l.b16 %v3906
      %v3975 = vunpack.c.l.b16 %v3907
      %v3976 = vunpack.c.l.b16 %v3908
      %v3977 = vunpack.c.l.b16 %v3909
      %v3978 = vunpack.c.l.b16 %v3910
      %v3979 = vpack.c.b16 %v3948, %v3947
      %v3980 = vpack.c.b16 %v3950, %v3949
      %v3981 = vpack.c.b16 %v3952, %v3951
      %v3982 = vpack.c.b16 %v3954, %v3953
      %v3983 = vpack.c.b16 %v3956, %v3955
      %v3984 = vpack.c.b16 %v3958, %v3957
      %v3985 = vpack.c.b16 %v3960, %v3959
      %v3986 = vpack.c.b16 %v3962, %v3961
      %v3987 = vpack.c.b16 %v3964, %v3963
      %v3988 = vpack.c.b16 %v3966, %v3965
      %v3989 = vpack.c.b16 %v3968, %v3967
      %v3990 = vpack.c.b16 %v3970, %v3969
      %v3991 = vpack.c.b16 %v3972, %v3971
      %v3992 = vpack.c.b16 %v3974, %v3973
      %v3993 = vpack.c.b16 %v3976, %v3975
      %v3994 = vpack.c.b16 %v3978, %v3977
      %v3999 = vunpack.c.l.b16 %v3911
      %v4000 = vunpack.c.l.b16 %v3912
      %v4001 = vunpack.c.l.b16 %v3913
      %v4002 = vunpack.c.l.b16 %v3914
      %v4003 = vpack.c.b16 %v4000, %v3999
      %v4004 = vpack.c.b16 %v4002, %v4001
      %vm4006 = vcmask 220160
      %v4008 = vsel %vm4006, %v3979, 0
      %v4011 = vsel %vm4006, %v3980, 0
      %v4014 = vsel %vm4006, %v3981, 0
      %v4017 = vsel %vm4006, %v3982, 0
      %v4020 = vsel %vm4006, %v3983, 0
      %v4023 = vsel %vm4006, %v3984, 0
      %v4026 = vsel %vm4006, %v3985, 0
      %v4029 = vsel %vm4006, %v3986, 0
      %v4032 = vsel %vm4006, %v3987, 0
      %v4035 = vsel %vm4006, %v3988, 0
      %v4038 = vsel %vm4006, %v3989, 0
      %v4041 = vsel %vm4006, %v3990, 0
      %v4044 = vsel %vm4006, %v3991, 0
      %v4047 = vsel %vm4006, %v3992, 0
      %v4050 = vsel %vm4006, %v3993, 0
      %v4053 = vsel %vm4006, %v3994, 0
      %vm4055 = vcmask 1044480
      %vm4056 = vcmask 1045504
      %v4057 = vsel %vm4055, 4294967295, 65535
      %v4058 = vsel %vm4056, %v4057, 0
      %v4060 = vand.u32 %v4004, %v4058
      %4062 = vmatprep.subr.bf16.mxu0 0
      %4063 = vmatpush1.bf16.msra.mxu0 0
      %4064 = vmatprep.subr.bf16.mxu0 0
      %4065 = vmatpush1.bf16.msra.mxu0 0
      %4066 = vmatprep.subr.bf16.mxu0 0
      %4067 = vmatpush1.bf16.msra.mxu0 0
      %4068 = vmatprep.subr.bf16.mxu0 0
      %4069 = vmatpush1.bf16.msra.mxu0 0
      %4070 = vmatprep.subr.bf16.mxu0 0
      %4071 = vmatpush1.bf16.msra.mxu0 0
      %4072 = vmatprep.subr.bf16.mxu0 0
      %4073 = vmatpush1.bf16.msra.mxu0 0
      %4074 = vmatprep.subr.bf16.mxu0 0
      %4075 = vmatpush1.bf16.msra.mxu0 %v4060
      %4076 = vmatprep.subr.bf16.mxu0 0
      %4077 = vmatpush1.bf16.msra.mxu0 %v4003
      %4078 = vmatprep.subr.bf16.mxu0 0
      %4079 = vmatpush2.bf16.msra.mxu0 0
      %4080 = vmatprep.subr.bf16.mxu0 0
      %4081 = vmatpush2.bf16.msra.mxu0 0
      %4082 = vmatprep.subr.bf16.mxu0 0
      %4083 = vmatpush2.bf16.msra.mxu0 0
      %4084 = vmatprep.subr.bf16.mxu0 0
      %4085 = vmatpush2.bf16.msra.mxu0 0
      %4086 = vmatprep.subr.bf16.mxu0 0
      %4087 = vmatpush2.bf16.msra.mxu0 0
      %4088 = vmatprep.subr.bf16.mxu0 0
      %4089 = vmatpush2.bf16.msra.mxu0 0
      %4090 = vmatprep.subr.bf16.mxu0 0
      %4091 = vmatpush2.bf16.msra.mxu0 0
      %4092 = vmatprep.subr.bf16.mxu0 0
      %4093 = vmatpush2.bf16.msra.mxu0 0
      %4094 = vmatprep.mubr.bf16.mxu0 0
      %4095 = vmatmul.mubr.bf16.gmra.mxu0 %v4008
      %v4096 = vpop.f32.mrf.mxu0
      %v4097 = vadd.f32 0.0, %v4096
      %v4098 = vpop.f32.mrf.mxu0
      %v4099 = vpop.f32.mrf.mxu0
      %v4100 = vadd.f32 0.0, %v4099
      %v4101 = vpop.f32.mrf.mxu0
      %4102 = vmatprep.mubr.bf16.mxu0 0
      %4103 = vmatmul.mubr.bf16.gmra.mxu0 %v4011
      %v4104 = vpop.f32.mrf.mxu0
      %v4105 = vadd.f32 0.0, %v4104
      %v4106 = vpop.f32.mrf.mxu0
      %v4107 = vpop.f32.mrf.mxu0
      %v4108 = vadd.f32 0.0, %v4107
      %v4109 = vpop.f32.mrf.mxu0
      %4110 = vmatprep.mubr.bf16.mxu0 0
      %4111 = vmatmul.mubr.bf16.gmra.mxu0 %v4014
      %v4112 = vpop.f32.mrf.mxu0
      %v4113 = vadd.f32 0.0, %v4112
      %v4114 = vpop.f32.mrf.mxu0
      %v4115 = vpop.f32.mrf.mxu0
      %v4116 = vadd.f32 0.0, %v4115
      %v4117 = vpop.f32.mrf.mxu0
      %4118 = vmatprep.mubr.bf16.mxu0 0
      %4119 = vmatmul.mubr.bf16.gmra.mxu0 %v4017
      %v4120 = vpop.f32.mrf.mxu0
      %v4121 = vadd.f32 0.0, %v4120
      %v4122 = vpop.f32.mrf.mxu0
      %v4123 = vpop.f32.mrf.mxu0
      %v4124 = vadd.f32 0.0, %v4123
      %v4125 = vpop.f32.mrf.mxu0
      %4126 = vmatprep.mubr.bf16.mxu0 0
      %4127 = vmatmul.mubr.bf16.gmra.mxu0 %v4020
      %v4128 = vpop.f32.mrf.mxu0
      %v4129 = vadd.f32 0.0, %v4128
      %v4130 = vpop.f32.mrf.mxu0
      %v4131 = vpop.f32.mrf.mxu0
      %v4132 = vadd.f32 0.0, %v4131
      %v4133 = vpop.f32.mrf.mxu0
      %4134 = vmatprep.mubr.bf16.mxu0 0
      %4135 = vmatmul.mubr.bf16.gmra.mxu0 %v4023
      %v4136 = vpop.f32.mrf.mxu0
      %v4137 = vadd.f32 0.0, %v4136
      %v4138 = vpop.f32.mrf.mxu0
      %v4139 = vpop.f32.mrf.mxu0
      %v4140 = vadd.f32 0.0, %v4139
      %v4141 = vpop.f32.mrf.mxu0
      %4142 = vmatprep.mubr.bf16.mxu0 0
      %4143 = vmatmul.mubr.bf16.gmra.mxu0 %v4026
      %v4144 = vpop.f32.mrf.mxu0
      %v4145 = vadd.f32 0.0, %v4144
      %v4146 = vpop.f32.mrf.mxu0
      %v4147 = vpop.f32.mrf.mxu0
      %v4148 = vadd.f32 0.0, %v4147
      %v4149 = vpop.f32.mrf.mxu0
      %4150 = vmatprep.mubr.bf16.mxu0 0
      %4151 = vmatmul.mubr.bf16.gmra.mxu0 %v4029
      %v4152 = vpop.f32.mrf.mxu0
      %v4153 = vadd.f32 0.0, %v4152
      %v4154 = vpop.f32.mrf.mxu0
      %v4155 = vpop.f32.mrf.mxu0
      %v4156 = vadd.f32 0.0, %v4155
      %v4157 = vpop.f32.mrf.mxu0
      %4158 = vmatprep.mubr.bf16.mxu0 0
      %4159 = vmatmul.mubr.bf16.gmra.mxu0 %v4032
      %v4160 = vpop.f32.mrf.mxu0
      %v4161 = vadd.f32 0.0, %v4160
      %v4162 = vpop.f32.mrf.mxu0
      %v4163 = vpop.f32.mrf.mxu0
      %v4164 = vadd.f32 0.0, %v4163
      %v4165 = vpop.f32.mrf.mxu0
      %4166 = vmatprep.mubr.bf16.mxu0 0
      %4167 = vmatmul.mubr.bf16.gmra.mxu0 %v4035
      %v4168 = vpop.f32.mrf.mxu0
      %v4169 = vadd.f32 0.0, %v4168
      %v4170 = vpop.f32.mrf.mxu0
      %v4171 = vpop.f32.mrf.mxu0
      %v4172 = vadd.f32 0.0, %v4171
      %v4173 = vpop.f32.mrf.mxu0
      %4174 = vmatprep.mubr.bf16.mxu0 0
      %4175 = vmatmul.mubr.bf16.gmra.mxu0 %v4038
      %v4176 = vpop.f32.mrf.mxu0
      %v4177 = vadd.f32 0.0, %v4176
      %v4178 = vpop.f32.mrf.mxu0
      %v4179 = vpop.f32.mrf.mxu0
      %v4180 = vadd.f32 0.0, %v4179
      %v4181 = vpop.f32.mrf.mxu0
      %4182 = vmatprep.mubr.bf16.mxu0 0
      %4183 = vmatmul.mubr.bf16.gmra.mxu0 %v4041
      %v4184 = vpop.f32.mrf.mxu0
      %v4185 = vadd.f32 0.0, %v4184
      %v4186 = vpop.f32.mrf.mxu0
      %v4187 = vpop.f32.mrf.mxu0
      %v4188 = vadd.f32 0.0, %v4187
      %v4189 = vpop.f32.mrf.mxu0
      %4190 = vmatprep.mubr.bf16.mxu0 0
      %4191 = vmatmul.mubr.bf16.gmra.mxu0 %v4044
      %v4192 = vpop.f32.mrf.mxu0
      %v4193 = vadd.f32 0.0, %v4192
      %v4194 = vpop.f32.mrf.mxu0
      %v4195 = vpop.f32.mrf.mxu0
      %v4196 = vadd.f32 0.0, %v4195
      %v4197 = vpop.f32.mrf.mxu0
      %4198 = vmatprep.mubr.bf16.mxu0 0
      %4199 = vmatmul.mubr.bf16.gmra.mxu0 %v4047
      %v4200 = vpop.f32.mrf.mxu0
      %v4201 = vadd.f32 0.0, %v4200
      %v4202 = vpop.f32.mrf.mxu0
      %v4203 = vpop.f32.mrf.mxu0
      %v4204 = vadd.f32 0.0, %v4203
      %v4205 = vpop.f32.mrf.mxu0
      %4206 = vmatprep.mubr.bf16.mxu0 0
      %4207 = vmatmul.mubr.bf16.gmra.mxu0 %v4050
      %v4208 = vpop.f32.mrf.mxu0
      %v4209 = vadd.f32 0.0, %v4208
      %v4210 = vpop.f32.mrf.mxu0
      %v4211 = vpop.f32.mrf.mxu0
      %v4212 = vadd.f32 0.0, %v4211
      %v4213 = vpop.f32.mrf.mxu0
      %4214 = vmatprep.mubr.bf16.mxu0 0
      %4215 = vmatmul.mubr.bf16.gmra.mxu0 %v4053
      %v4216 = vpop.f32.mrf.mxu0
      %v4217 = vadd.f32 0.0, %v4216
      %v4218 = vpop.f32.mrf.mxu0
      %v4219 = vpop.f32.mrf.mxu0
      %v4220 = vadd.f32 0.0, %v4219
      %v4221 = vpop.f32.mrf.mxu0
      %4222 = vdwg.mxu0
      %v4223 = vld [vmem:[%s2] sm:$0x1]
      %v4225 = vlaneseq
      %v4226 = vshrl.u32 %v4225, 7
      %v4227 = vsub.s32 0, %v4226
      %v4228 = vrot.slane %v4223, %v4227
      %v4230 = vmul.f32 %v4097, %v4228
      %v4231 = vmul.f32 %v4100, %v4228
      %v4232 = vmul.f32 %v4105, %v4228
      %v4233 = vmul.f32 %v4108, %v4228
      %v4234 = vmul.f32 %v4113, %v4228
      %v4235 = vmul.f32 %v4116, %v4228
      %v4236 = vmul.f32 %v4121, %v4228
      %v4237 = vmul.f32 %v4124, %v4228
      %v4238 = vmul.f32 %v4129, %v4228
      %v4239 = vmul.f32 %v4132, %v4228
      %v4240 = vmul.f32 %v4137, %v4228
      %v4241 = vmul.f32 %v4140, %v4228
      %v4242 = vmul.f32 %v4145, %v4228
      %v4243 = vmul.f32 %v4148, %v4228
      %v4244 = vmul.f32 %v4153, %v4228
      %v4245 = vmul.f32 %v4156, %v4228
      %v4246 = vmul.f32 %v4161, %v4228
      %v4247 = vmul.f32 %v4164, %v4228
      %v4248 = vmul.f32 %v4169, %v4228
      %v4249 = vmul.f32 %v4172, %v4228
      %v4250 = vmul.f32 %v4177, %v4228
      %v4251 = vmul.f32 %v4180, %v4228
      %v4252 = vmul.f32 %v4185, %v4228
      %v4253 = vmul.f32 %v4188, %v4228
      %v4254 = vmul.f32 %v4193, %v4228
      %v4255 = vmul.f32 %v4196, %v4228
      %v4256 = vmul.f32 %v4201, %v4228
      %v4257 = vmul.f32 %v4204, %v4228
      %v4258 = vmul.f32 %v4209, %v4228
      %v4259 = vmul.f32 %v4212, %v4228
      %v4260 = vmul.f32 %v4217, %v4228
      %v4261 = vmul.f32 %v4220, %v4228
      %v4262 = vld [vmem:[%s3] sm:$0x1]
      %v4264 = vlaneseq
      %v4265 = vshrl.u32 %v4264, 7
      %v4266 = vsub.s32 0, %v4265
      %v4267 = vrot.slane %v4262, %v4266
      %v4269 = vadd.f32 %v4230, %v4267
      %v4270 = vadd.f32 %v4231, %v4267
      %v4271 = vadd.f32 %v4232, %v4267
      %v4272 = vadd.f32 %v4233, %v4267
      %v4273 = vadd.f32 %v4234, %v4267
      %v4274 = vadd.f32 %v4235, %v4267
      %v4275 = vadd.f32 %v4236, %v4267
      %v4276 = vadd.f32 %v4237, %v4267
      %v4277 = vadd.f32 %v4238, %v4267
      %v4278 = vadd.f32 %v4239, %v4267
      %v4279 = vadd.f32 %v4240, %v4267
      %v4280 = vadd.f32 %v4241, %v4267
      %v4281 = vadd.f32 %v4242, %v4267
      %v4282 = vadd.f32 %v4243, %v4267
      %v4283 = vadd.f32 %v4244, %v4267
      %v4284 = vadd.f32 %v4245, %v4267
      %v4285 = vadd.f32 %v4246, %v4267
      %v4286 = vadd.f32 %v4247, %v4267
      %v4287 = vadd.f32 %v4248, %v4267
      %v4288 = vadd.f32 %v4249, %v4267
      %v4289 = vadd.f32 %v4250, %v4267
      %v4290 = vadd.f32 %v4251, %v4267
      %v4291 = vadd.f32 %v4252, %v4267
      %v4292 = vadd.f32 %v4253, %v4267
      %v4293 = vadd.f32 %v4254, %v4267
      %v4294 = vadd.f32 %v4255, %v4267
      %v4295 = vadd.f32 %v4256, %v4267
      %v4296 = vadd.f32 %v4257, %v4267
      %v4297 = vadd.f32 %v4258, %v4267
      %v4298 = vadd.f32 %v4259, %v4267
      %v4299 = vadd.f32 %v4260, %v4267
      %v4300 = vadd.f32 %v4261, %v4267
      %v4301 = vmax.f32 %v4269, 0.0
      %v4302 = vmax.f32 %v4270, 0.0
      %v4303 = vmax.f32 %v4271, 0.0
      %v4304 = vmax.f32 %v4272, 0.0
      %v4305 = vmax.f32 %v4273, 0.0
      %v4306 = vmax.f32 %v4274, 0.0
      %v4307 = vmax.f32 %v4275, 0.0
      %v4308 = vmax.f32 %v4276, 0.0
      %v4309 = vmax.f32 %v4277, 0.0
      %v4310 = vmax.f32 %v4278, 0.0
      %v4311 = vmax.f32 %v4279, 0.0
      %v4312 = vmax.f32 %v4280, 0.0
      %v4313 = vmax.f32 %v4281, 0.0
      %v4314 = vmax.f32 %v4282, 0.0
      %v4315 = vmax.f32 %v4283, 0.0
      %v4316 = vmax.f32 %v4284, 0.0
      %v4317 = vmax.f32 %v4285, 0.0
      %v4318 = vmax.f32 %v4286, 0.0
      %v4319 = vmax.f32 %v4287, 0.0
      %v4320 = vmax.f32 %v4288, 0.0
      %v4321 = vmax.f32 %v4289, 0.0
      %v4322 = vmax.f32 %v4290, 0.0
      %v4323 = vmax.f32 %v4291, 0.0
      %v4324 = vmax.f32 %v4292, 0.0
      %v4325 = vmax.f32 %v4293, 0.0
      %v4326 = vmax.f32 %v4294, 0.0
      %v4327 = vmax.f32 %v4295, 0.0
      %v4328 = vmax.f32 %v4296, 0.0
      %v4329 = vmax.f32 %v4297, 0.0
      %v4330 = vmax.f32 %v4298, 0.0
      %v4331 = vmax.f32 %v4299, 0.0
      %v4332 = vmax.f32 %v4300, 0.0
      %v4333 = vpack.c.bf16 %v4302, %v4301
      %v4334 = vpack.c.bf16 %v4304, %v4303
      %v4335 = vpack.c.bf16 %v4306, %v4305
      %v4336 = vpack.c.bf16 %v4308, %v4307
      %v4337 = vpack.c.bf16 %v4310, %v4309
      %v4338 = vpack.c.bf16 %v4312, %v4311
      %v4339 = vpack.c.bf16 %v4314, %v4313
      %v4340 = vpack.c.bf16 %v4316, %v4315
      %v4341 = vpack.c.bf16 %v4318, %v4317
      %v4342 = vpack.c.bf16 %v4320, %v4319
      %v4343 = vpack.c.bf16 %v4322, %v4321
      %v4344 = vpack.c.bf16 %v4324, %v4323
      %v4345 = vpack.c.bf16 %v4326, %v4325
      %v4346 = vpack.c.bf16 %v4328, %v4327
      %v4347 = vpack.c.bf16 %v4330, %v4329
      %v4348 = vpack.c.bf16 %v4332, %v4331
      %v4365 = vunpack.c.l.b16 %v4333
      %v4366 = vunpack.c.h.b16 %v4333
      %v4367 = vunpack.c.l.b16 %v4334
      %v4368 = vunpack.c.h.b16 %v4334
      %v4369 = vunpack.c.l.b16 %v4335
      %v4370 = vunpack.c.h.b16 %v4335
      %v4371 = vunpack.c.l.b16 %v4336
      %v4372 = vunpack.c.h.b16 %v4336
      %v4373 = vunpack.c.l.b16 %v4337
      %v4374 = vunpack.c.h.b16 %v4337
      %v4375 = vunpack.c.l.b16 %v4338
      %v4376 = vunpack.c.h.b16 %v4338
      %v4377 = vunpack.c.l.b16 %v4339
      %v4378 = vunpack.c.h.b16 %v4339
      %v4379 = vunpack.c.l.b16 %v4340
      %v4380 = vunpack.c.h.b16 %v4340
      %v4381 = vunpack.c.l.b16 %v4341
      %v4382 = vunpack.c.h.b16 %v4341
      %v4383 = vunpack.c.l.b16 %v4342
      %v4384 = vunpack.c.h.b16 %v4342
      %v4385 = vunpack.c.l.b16 %v4343
      %v4386 = vunpack.c.h.b16 %v4343
      %v4387 = vunpack.c.l.b16 %v4344
      %v4388 = vunpack.c.h.b16 %v4344
      %v4389 = vunpack.c.l.b16 %v4345
      %v4390 = vunpack.c.h.b16 %v4345
      %v4391 = vunpack.c.l.b16 %v4346
      %v4392 = vunpack.c.h.b16 %v4346
      %v4393 = vunpack.c.l.b16 %v4347
      %v4394 = vunpack.c.h.b16 %v4347
      %v4395 = vunpack.c.l.b16 %v4348
      %v4396 = vunpack.c.h.b16 %v4348
      %v4397 = vpack.c.b16 %v4365, %v4365
      %v4398 = vpack.c.b16 %v4366, %v4366
      %v4399 = vpack.c.b16 %v4367, %v4367
      %v4400 = vpack.c.b16 %v4368, %v4368
      %v4401 = vpack.c.b16 %v4369, %v4369
      %v4402 = vpack.c.b16 %v4370, %v4370
      %v4403 = vpack.c.b16 %v4371, %v4371
      %v4404 = vpack.c.b16 %v4372, %v4372
      %v4405 = vpack.c.b16 %v4373, %v4373
      %v4406 = vpack.c.b16 %v4374, %v4374
      %v4407 = vpack.c.b16 %v4375, %v4375
      %v4408 = vpack.c.b16 %v4376, %v4376
      %v4409 = vpack.c.b16 %v4377, %v4377
      %v4410 = vpack.c.b16 %v4378, %v4378
      %v4411 = vpack.c.b16 %v4379, %v4379
      %v4412 = vpack.c.b16 %v4380, %v4380
      %v4413 = vpack.c.b16 %v4381, %v4381
      %v4414 = vpack.c.b16 %v4382, %v4382
      %v4415 = vpack.c.b16 %v4383, %v4383
      %v4416 = vpack.c.b16 %v4384, %v4384
      %v4417 = vpack.c.b16 %v4385, %v4385
      %v4418 = vpack.c.b16 %v4386, %v4386
      %v4419 = vpack.c.b16 %v4387, %v4387
      %v4420 = vpack.c.b16 %v4388, %v4388
      %v4421 = vpack.c.b16 %v4389, %v4389
      %v4422 = vpack.c.b16 %v4390, %v4390
      %v4423 = vpack.c.b16 %v4391, %v4391
      %v4424 = vpack.c.b16 %v4392, %v4392
      %v4425 = vpack.c.b16 %v4393, %v4393
      %v4426 = vpack.c.b16 %v4394, %v4394
      %v4427 = vpack.c.b16 %v4395, %v4395
      %v4428 = vpack.c.b16 %v4396, %v4396
      %vm4461 = vcmask 125952
      %4462 = vst.msk [vmem:[%s197] sm:$0xf] %vm4461, %v4397
      %4463 = vst.msk [vmem:[%s197 + $0x4] sm:$0xf] %vm4461, %v4398
      %4464 = vst.msk [vmem:[%s197 + $0x8] sm:$0xf] %vm4461, %v4399
      %4465 = vst.msk [vmem:[%s197 + $0xc] sm:$0xf] %vm4461, %v4400
      %4466 = vst.msk [vmem:[%s197 + $0x10] sm:$0xf] %vm4461, %v4401
      %4467 = vst.msk [vmem:[%s197 + $0x14] sm:$0xf] %vm4461, %v4402
      %4468 = vst.msk [vmem:[%s197 + $0x18] sm:$0xf] %vm4461, %v4403
      %4469 = vst.msk [vmem:[%s197 + $0x1c] sm:$0xf] %vm4461, %v4404
      %4470 = vst.msk [vmem:[%s197 + $0x20] sm:$0xf] %vm4461, %v4405
      %4471 = vst.msk [vmem:[%s197 + $0x24] sm:$0xf] %vm4461, %v4406
      %4472 = vst.msk [vmem:[%s197 + $0x28] sm:$0xf] %vm4461, %v4407
      %4473 = vst.msk [vmem:[%s197 + $0x2c] sm:$0xf] %vm4461, %v4408
      %4474 = vst.msk [vmem:[%s197 + $0x30] sm:$0xf] %vm4461, %v4409
      %4475 = vst.msk [vmem:[%s197 + $0x34] sm:$0xf] %vm4461, %v4410
      %4476 = vst.msk [vmem:[%s197 + $0x38] sm:$0xf] %vm4461, %v4411
      %4477 = vst.msk [vmem:[%s197 + $0x3c] sm:$0xf] %vm4461, %v4412
      %4478 = vst.msk [vmem:[%s197 + $0x40] sm:$0xf] %vm4461, %v4413
      %4479 = vst.msk [vmem:[%s197 + $0x44] sm:$0xf] %vm4461, %v4414
      %4480 = vst.msk [vmem:[%s197 + $0x48] sm:$0xf] %vm4461, %v4415
      %4481 = vst.msk [vmem:[%s197 + $0x4c] sm:$0xf] %vm4461, %v4416
      %4482 = vst.msk [vmem:[%s197 + $0x50] sm:$0xf] %vm4461, %v4417
      %4483 = vst.msk [vmem:[%s197 + $0x54] sm:$0xf] %vm4461, %v4418
      %4484 = vst.msk [vmem:[%s197 + $0x58] sm:$0xf] %vm4461, %v4419
      %4485 = vst.msk [vmem:[%s197 + $0x5c] sm:$0xf] %vm4461, %v4420
      %4486 = vst.msk [vmem:[%s197 + $0x60] sm:$0xf] %vm4461, %v4421
      %4487 = vst.msk [vmem:[%s197 + $0x64] sm:$0xf] %vm4461, %v4422
      %4488 = vst.msk [vmem:[%s197 + $0x68] sm:$0xf] %vm4461, %v4423
      %4489 = vst.msk [vmem:[%s197 + $0x6c] sm:$0xf] %vm4461, %v4424
      %4490 = vst.msk [vmem:[%s197 + $0x70] sm:$0xf] %vm4461, %v4425
      %4491 = vst.msk [vmem:[%s197 + $0x74] sm:$0xf] %vm4461, %v4426
      %4492 = vst.msk [vmem:[%s197 + $0x78] sm:$0xf] %vm4461, %v4427
      %4493 = vst.msk [vmem:[%s197 + $0x7c] sm:$0xf] %vm4461, %v4428
      %p4494 = scmp.lt.s32.totalorder %s15, 1
      %s4495 = scalar_select %p4494, %s15, 1
      %s4496 = smul.addr %s4495, 32
      %s4497 = smul.addr %s4496, 4
      %s4498 = scalar_lea.vmem %s4, %s4497
      // Predicated region
      $region37: #{tpu_custom_call.1} parent=35 // pred_check
        %p4499 = pneg %p122
      $region38: #{tpu_custom_call.1} parent=35 // pred_check_branch
        %4501 = sbr.rel (%p4499) target = $region40
      $region39: #{tpu_custom_call.1} parent=35 // pred_region
        _
      $region40: #{tpu_custom_call.1} parent=35 // pred_fallthru
        _
    $region36: #{tpu_custom_call.1} parent=5 // pred_fallthru
      _
    %p4502 = scmp.le.s32.totalorder 2, %s10
    // Predicated region
    $region41: #{tpu_custom_call.1} parent=5 // pred_check
      %p4503 = pneg %p4502
    $region42: #{tpu_custom_call.1} parent=5 // pred_check_branch
      %4505 = sbr.rel (%p4503) target = $region44
    $region43: #{tpu_custom_call.1} parent=5 // pred_region
      %s4506 = ssub.s32 %s10, 2
      // Predicated region
      $region45: #{tpu_custom_call.1} parent=43 // pred_check
        %p4507 = pneg %p128
      $region46: #{tpu_custom_call.1} parent=43 // pred_check_branch
        %4509 = sbr.rel (%p4507) target = $region48
      $region47: #{tpu_custom_call.1} parent=43 // pred_region
        %p4510 = scmp.lt.s32.totalorder %s16, 1
        %s4511 = scalar_select %p4510, %s16, 1
        %s4512 = smul.addr %s4511, 32
        %s4513 = smul.addr %s4512, 4
        %s4514 = scalar_lea.vmem %s4, %s4513
      $region48: #{tpu_custom_call.1} parent=43 // pred_fallthru
        _
    $region44: #{tpu_custom_call.1} parent=5 // pred_fallthru
      _
  $region6: #{tpu_custom_call.1} parent=0 // loop_footer
    %s14 = sadd.s32 1, %s10
  $region7: #{tpu_custom_call.1} parent=0 // loop_footer_branch
    %9 = sbr.rel target = $region3
  $region8: #{tpu_custom_call.1} parent=0 // loop_exit
    _

</llo_original>
